<compile_context>
chip_gen: v7x
topology: tpu7x:2x2x1
jax: 0.10.0
libtpu: 0.0.40
codegen_flags: <defaults>
</compile_context>

<pallas_src>
import functools
import math

import jax
import jax.numpy as jnp
from jax.experimental import pallas as pl
from jax.experimental.pallas import tpu as pltpu


_VMEM_LIMIT = 32 * 1024 * 1024  # safe scoped-VMEM limit on v5e / v6e / v7x


def _round_up(x, m):
    return (x + m - 1) // m * m


# ----------------------------- in-kernel math ------------------------------

def _erf(x):
    # Abramowitz & Stegun 7.1.26 (|err| < 1.5e-7); elementwise only, and the
    # divide goes to the EUP via pl.reciprocal(approx=True).
    a1, a2, a3, a4, a5 = 0.254829592, -0.284496736, 1.421413741, -1.453152027, 1.061405429
    p = 0.3275911
    s = jnp.where(x >= 0.0, 1.0, -1.0)
    ax = jnp.abs(x)
    t = pl.reciprocal(1.0 + p * ax, approx=True)
    poly = ((((a5 * t + a4) * t + a3) * t + a2) * t + a1) * t
    return s * (1.0 - poly * jnp.exp(-ax * ax))


def _gelu(x):
    # exact (erf-based) GELU, matching torch.nn.GELU() default
    return 0.5 * x * (1.0 + _erf(x * (1.0 / math.sqrt(2.0))))


# ------------------------------ Pallas kernels ------------------------------

def _matmul_bias_kernel(x_ref, w_ref, b_ref, o_ref, acc_ref, *, act):
    """Grid = (M tiles, K tiles).  Accumulate over K, finalize with bias/GELU."""
    @pl.when(pl.program_id(1) == 0)
    def _():
        acc_ref[...] = jnp.zeros_like(acc_ref)

    acc_ref[...] += jnp.dot(x_ref[...], w_ref[...],
                            preferred_element_type=jnp.float32)

    @pl.when(pl.program_id(1) == pl.num_programs(1) - 1)
    def _():
        y = acc_ref[...] + b_ref[...]
        if act:
            y = _gelu(y)
        o_ref[...] = y


def matmul_bias(x, w, b, act, *, tm=256, tk=512):
    """(M,K) @ (K,N) + b, optional fused GELU.  bf16 MXU feeds, f32 accum."""
    M, K = x.shape
    _, N = w.shape

    # Row tiling (parallel axis).  TM multiple of 256 when tiled; full block
    # (any M) when the whole thing is small.
    if M > tm:
        TM, Mp = tm, _round_up(M, tm)
    else:
        TM, Mp = M, M
    # Contraction tiling only when K is large (e.g. the final Linear).
    if K > tk:
        TK, Kp = tk, _round_up(K, tk)
    else:
        TK, Kp = K, K
    nm, nk = Mp // TM, Kp // TK

    x = x.astype(jnp.bfloat16)
    w = w.astype(jnp.bfloat16)
    if Mp != M or Kp != K:
        x = jnp.pad(x, ((0, Mp - M), (0, Kp - K)))
    if Kp != K:
        w = jnp.pad(w, ((0, Kp - K), (0, 0)))
    b2 = b.reshape(1, N).astype(jnp.float32)

    out = pl.pallas_call(
        functools.partial(_matmul_bias_kernel, act=act),
        grid=(nm, nk),
        in_specs=[pl.BlockSpec((TM, TK), lambda i, k: (i, k)),
                  pl.BlockSpec((TK, N), lambda i, k: (k, 0)),
                  pl.BlockSpec((1, N), lambda i, k: (0, 0))],
        out_specs=pl.BlockSpec((TM, N), lambda i, k: (i, 0)),
        out_shape=jax.ShapeDtypeStruct((Mp, N), jnp.float32),
        scratch_shapes=[pltpu.VMEM((TM, N), jnp.float32)],
        compiler_params=pltpu.CompilerParams(
            dimension_semantics=("parallel", "arbitrary"),
            vmem_limit_bytes=_VMEM_LIMIT),
    )(x, w, b2)
    return out[:M] if Mp != M else out


def _bn_stats_kernel(x_ref, sum_ref, ssq_ref):
    """Per-channel sum / sum-of-squares reduction over M tiles."""
    @pl.when(pl.program_id(0) == 0)
    def _():
        sum_ref[...] = jnp.zeros_like(sum_ref)
        ssq_ref[...] = jnp.zeros_like(ssq_ref)

    x = x_ref[...]
    sum_ref[...] += jnp.sum(x, axis=0, keepdims=True)
    ssq_ref[...] += jnp.sum(x * x, axis=0, keepdims=True)


def _bn_apply_kernel(x_ref, scale_ref, shift_ref, o_ref):
    o_ref[...] = x_ref[...] * scale_ref[...] + shift_ref[...]


def batchnorm(x, gamma, beta, eps=1e-5, *, tm=256):
    """x: (N*H*W, C).  Training-mode BatchNorm2d: batch stats, biased var."""
    M, C = x.shape
    if M > tm:
        TM, Mp = tm, _round_up(M, tm)
        xp = jnp.pad(x, ((0, Mp - M), (0, 0)))   # zero rows: harmless for sum/sumsq
    else:
        TM, Mp, xp = M, M, x
    nm = Mp // TM

    # Pass 1: tiled reduction into (1, C) sum / sumsq (output-resident accum).
    s, ss = pl.pallas_call(
        _bn_stats_kernel,
        grid=(nm,),
        in_specs=[pl.BlockSpec((TM, C), lambda i: (i, 0))],
        out_specs=(pl.BlockSpec((1, C), lambda i: (0, 0)),
                   pl.BlockSpec((1, C), lambda i: (0, 0))),
        out_shape=(jax.ShapeDtypeStruct((1, C), jnp.float32),
                   jax.ShapeDtypeStruct((1, C), jnp.float32)),
        compiler_params=pltpu.CompilerParams(
            dimension_semantics=("arbitrary",),
            vmem_limit_bytes=_VMEM_LIMIT),
    )(xp)

    inv_m = 1.0 / M                      # true row count (padded rows add 0)
    mean = s * inv_m
    var = ss * inv_m - mean * mean       # biased variance (training mode)
    scale = gamma.reshape(1, C) * jax.lax.rsqrt(var + eps)
    shift = beta.reshape(1, C) - mean * scale

    # Pass 2: tiled per-channel affine normalize (parallel over M tiles).
    y = pl.pallas_call(
        _bn_apply_kernel,
        grid=(nm,),
        in_specs=[pl.BlockSpec((TM, C), lambda i: (i, 0)),
                  pl.BlockSpec((1, C), lambda i: (0, 0)),
                  pl.BlockSpec((1, C), lambda i: (0, 0))],
        out_specs=pl.BlockSpec((TM, C), lambda i: (i, 0)),
        out_shape=jax.ShapeDtypeStruct((Mp, C), jnp.float32),
        compiler_params=pltpu.CompilerParams(
            dimension_semantics=("parallel",),
            vmem_limit_bytes=_VMEM_LIMIT),
    )(xp, scale, shift)
    return y[:M] if Mp != M else y


# ------------------------------- conv glue ----------------------------------

def _im2col(x_nhwc, stride):
    """3x3, padding=1.  Returns ((N*Ho*Wo, 9*C), (N, Ho, Wo)); order [dh,dw,cin]."""
    xp = jnp.pad(x_nhwc, ((0, 0), (1, 1), (1, 1), (0, 0)))
    N, Hp, Wp, C = xp.shape
    Ho = (Hp - 3) // stride + 1
    Wo = (Wp - 3) // stride + 1
    cols = []
    for dh in range(3):
        for dw in range(3):
            cols.append(xp[:, dh:dh + stride * (Ho - 1) + 1:stride,
                            dw:dw + stride * (Wo - 1) + 1:stride, :])
    cols = jnp.concatenate(cols, axis=-1)            # (N, Ho, Wo, 9*C)
    return cols.reshape(N * Ho * Wo, 9 * C), (N, Ho, Wo)


def conv3x3(x_nhwc, w, b, stride, act):
    """w: (3, 3, Cin, Cout) — row-major reshape matches im2col's [dh,dw,cin]."""
    # Cast before im2col so the 9x-expanded cols array is bf16 (half the HBM).
    cols, (N, Ho, Wo) = _im2col(x_nhwc.astype(jnp.bfloat16), stride)
    wmat = w.reshape(9 * w.shape[2], w.shape[3])
    y = matmul_bias(cols, wmat, b, act)
    return y.reshape(N, Ho, Wo, w.shape[3])


# ----------------------------- model definition -----------------------------

def init_encoder_params(key, num_input_channels, c_hid, latent_dim, flat_dim):
    def conv_init(k, cin, cout):
        k1, k2 = jax.random.split(k)
        bound = 1.0 / math.sqrt(cin * 9)
        w = jax.random.uniform(k1, (3, 3, cin, cout), jnp.float32, -bound, bound)
        b = jax.random.uniform(k2, (cout,), jnp.float32, -bound, bound)
        return w, b

    keys = jax.random.split(key, 6)
    params = {
        "c1": conv_init(keys[0], num_input_channels, c_hid),
        "c2": conv_init(keys[1], c_hid, c_hid),
        "bn1": (jnp.ones((c_hid,), jnp.float32), jnp.zeros((c_hid,), jnp.float32)),
        "c3": conv_init(keys[2], c_hid, 2 * c_hid),
        "c4": conv_init(keys[3], 2 * c_hid, 4 * c_hid),
        "bn2": (jnp.ones((4 * c_hid,), jnp.float32), jnp.zeros((4 * c_hid,), jnp.float32)),
        "c5": conv_init(keys[4], 4 * c_hid, 6 * c_hid),
    }
    k1, k2 = jax.random.split(keys[5])
    lb = 1.0 / math.sqrt(flat_dim)
    # FC weight rows are kept in NHWC-flatten order so the final feature map
    # can be fed without the NCHW transpose.  (To port torch weights, permute
    # rows from c*H*W+h*W+w to (h*W+w)*C+c.)
    params["fc"] = (jax.random.uniform(k1, (flat_dim, latent_dim), jnp.float32, -lb, lb),
                    jax.random.uniform(k2, (latent_dim,), jnp.float32, -lb, lb))
    return params


def encoder_forward(params, x_nchw):
    x = jnp.transpose(x_nchw, (0, 2, 3, 1))                       # NCHW -> NHWC
    x = conv3x3(x, *params["c1"], stride=2, act=True)             # conv s2 + GELU
    x = conv3x3(x, *params["c2"], stride=1, act=True)             # conv s1 + GELU
    N, H, W, C = x.shape
    x = batchnorm(x.reshape(N * H * W, C), *params["bn1"]).reshape(N, H, W, C)
    x = conv3x3(x, *params["c3"], stride=2, act=True)             # conv s2 + GELU
    x = conv3x3(x, *params["c4"], stride=1, act=True)             # conv s1 + GELU
    N, H, W, C = x.shape
    x = batchnorm(x.reshape(N * H * W, C), *params["bn2"]).reshape(N, H, W, C)
    x = conv3x3(x, *params["c5"], stride=2, act=True)             # conv s2 + GELU
    # nn.Flatten(): flatten directly in NHWC order (FC weights match this order).
    x = x.reshape(x.shape[0], -1)
    w, b = params["fc"]
    return matmul_bias(x, w, b, act=False)                        # Linear(flat, latent)


# ---------------------------------- main -------------------------------------

if __name__ == "__main__":
    key = jax.random.PRNGKey(0)
    kx, kp = jax.random.split(key)

    # Small shapes: batch=2, 3 input channels, 16x16 images, c_hid=8, latent=32.
    N, C_in, H, W = 2, 3, 16, 16
    c_hid, latent_dim = 8, 32
    # TODO(synk): the PyTorch module hardcodes nn.Linear(49152, latent_dim)
    # (implies 128x128 input with c_hid=32); here the Linear in_features is
    # sized to the actual flattened extent for the small test shape.
    flat_dim = 6 * c_hid * (H // 8) * (W // 8)                    # = 192

    x = jax.random.normal(kx, (N, C_in, H, W), jnp.float32)
    params = init_encoder_params(kp, C_in, c_hid, latent_dim, flat_dim)

    z = jax.jit(encoder_forward)(params, x)
    jax.block_until_ready(z)
    assert z.shape == (N, latent_dim), z.shape
    print("KERNEL_OK")
</pallas_src>

<mosaic_0001>
module attributes {stable_mosaic.version = 11 : i64} {
  func.func @_matmul_bias_kernel(%arg0: i32, %arg1: i32, %arg2: memref<128x27xbf16, #tpu.memory_space<vmem>>, %arg3: memref<27x8xbf16, #tpu.memory_space<vmem>>, %arg4: memref<1x8xf32, #tpu.memory_space<vmem>>, %arg5: memref<128x8xf32, #tpu.memory_space<vmem>>, %arg6: memref<128x8xf32, #tpu.memory_space<vmem>>) attributes {dimension_semantics = [#tpu.dimension_semantics<parallel>, #tpu.dimension_semantics<arbitrary>], iteration_bounds = array<i64: 1, 1>, scalar_prefetch = 0 : i64, scratch_operands = 1 : i64, tpu.core_type = #tpu.core_type<tc>, window_params = [{transform_indices = @transform_0, window_bounds = array<i64: 128, 27>}, {transform_indices = @transform_1, window_bounds = array<i64: 27, 8>}, {pipeline_mode = #tpu.pipeline_mode<synchronous>, transform_indices = @transform_2, window_bounds = array<i64: 1, 8>}, {transform_indices = @transform_3, window_bounds = array<i64: 128, 8>}]} {
    %c0_i32 = arith.constant 0 : i32
    %0 = arith.cmpi eq, %arg1, %c0_i32 : i32
    %1 = arith.extui %0 : i1 to i32
    %c0_i32_0 = arith.constant 0 : i32
    %2 = arith.cmpi ne, %1, %c0_i32_0 : i32
    scf.if %2 {
      %cst_10 = arith.constant 0.000000e+00 : f32
      %12 = vector.broadcast %cst_10 : f32 to vector<128x8xf32>
      %c0_11 = arith.constant 0 : index
      %c0_12 = arith.constant 0 : index
      %13 = vector.load %arg6[%c0_11, %c0_12] : memref<128x8xf32, #tpu.memory_space<vmem>>, vector<128x8xf32>
      tpu.vector_store %arg6[%c0_11, %c0_12], %12 {strides = array<i32>} : memref<128x8xf32, #tpu.memory_space<vmem>>, vector<128x8xf32>,
    } else {
    }
    %c0 = arith.constant 0 : index
    %c0_1 = arith.constant 0 : index
    %3 = vector.load %arg6[%c0, %c0_1] : memref<128x8xf32, #tpu.memory_space<vmem>>, vector<128x8xf32>
    %c0_2 = arith.constant 0 : index
    %c0_3 = arith.constant 0 : index
    %4 = vector.load %arg2[%c0_2, %c0_3] : memref<128x27xbf16, #tpu.memory_space<vmem>>, vector<128x27xbf16>
    %c0_4 = arith.constant 0 : index
    %c0_5 = arith.constant 0 : index
    %5 = vector.load %arg3[%c0_4, %c0_5] : memref<27x8xbf16, #tpu.memory_space<vmem>>, vector<27x8xbf16>
    %cst = arith.constant dense<0.000000e+00> : vector<128x8xf32>
    %6 = tpu.matmul %4, %5, %cst {dimension_numbers = #tpu.dot_dimension_numbers<[1], [0], [0], [1], [0, 0, 1, 1], [], []>} : vector<128x27xbf16>, vector<27x8xbf16>, vector<128x8xf32> -> vector<128x8xf32>
    %7 = arith.addf %3, %6 : vector<128x8xf32>
    %c0_6 = arith.constant 0 : index
    %c0_7 = arith.constant 0 : index
    %8 = vector.load %arg6[%c0_6, %c0_7] : memref<128x8xf32, #tpu.memory_space<vmem>>, vector<128x8xf32>
    tpu.vector_store %arg6[%c0_6, %c0_7], %7 {strides = array<i32>} : memref<128x8xf32, #tpu.memory_space<vmem>>, vector<128x8xf32>,
    %c0_i32_8 = arith.constant 0 : i32
    %9 = arith.cmpi eq, %arg1, %c0_i32_8 : i32
    %10 = arith.extui %9 : i1 to i32
    %c0_i32_9 = arith.constant 0 : i32
    %11 = arith.cmpi ne, %10, %c0_i32_9 : i32
    scf.if %11 {
      %c0_10 = arith.constant 0 : index
      %c0_11 = arith.constant 0 : index
      %12 = vector.load %arg6[%c0_10, %c0_11] : memref<128x8xf32, #tpu.memory_space<vmem>>, vector<128x8xf32>
      %c0_12 = arith.constant 0 : index
      %c0_13 = arith.constant 0 : index
      %13 = vector.load %arg4[%c0_12, %c0_13] : memref<1x8xf32, #tpu.memory_space<vmem>>, vector<1x8xf32>
      %14 = vector.broadcast %13 : vector<1x8xf32> to vector<128x8xf32>
      %15 = arith.addf %12, %14 : vector<128x8xf32>
      %cst_14 = arith.constant 5.000000e-01 : f32
      %16 = vector.broadcast %cst_14 : f32 to vector<128x8xf32>
      %17 = arith.mulf %16, %15 : vector<128x8xf32>
      %cst_15 = arith.constant 0.707106769 : f32
      %18 = vector.broadcast %cst_15 : f32 to vector<128x8xf32>
      %19 = arith.mulf %15, %18 : vector<128x8xf32>
      %cst_16 = arith.constant 0.000000e+00 : f32
      %20 = vector.broadcast %cst_16 : f32 to vector<128x8xf32>
      %21 = arith.cmpf oge, %19, %20 : vector<128x8xf32>
      %cst_17 = arith.constant 1.000000e+00 : f32
      %cst_18 = arith.constant -1.000000e+00 : f32
      %22 = vector.broadcast %cst_17 : f32 to vector<128x8xf32>
      %23 = vector.broadcast %cst_18 : f32 to vector<128x8xf32>
      %24 = arith.select %21, %22, %23 : vector<128x8xi1>, vector<128x8xf32>
      %25 = math.absf %19 : vector<128x8xf32>
      %cst_19 = arith.constant 0.327591091 : f32
      %26 = vector.broadcast %cst_19 : f32 to vector<128x8xf32>
      %27 = arith.mulf %26, %25 : vector<128x8xf32>
      %cst_20 = arith.constant 1.000000e+00 : f32
      %28 = vector.broadcast %cst_20 : f32 to vector<128x8xf32>
      %29 = arith.addf %28, %27 : vector<128x8xf32>
      %30 = tpu.reciprocal %29 {approx = true} : vector<128x8xf32> -> vector<128x8xf32>
      %cst_21 = arith.constant 1.06140542 : f32
      %31 = vector.broadcast %cst_21 : f32 to vector<128x8xf32>
      %32 = arith.mulf %31, %30 : vector<128x8xf32>
      %cst_22 = arith.constant -1.45315206 : f32
      %33 = vector.broadcast %cst_22 : f32 to vector<128x8xf32>
      %34 = arith.addf %32, %33 : vector<128x8xf32>
      %35 = arith.mulf %34, %30 : vector<128x8xf32>
      %cst_23 = arith.constant 1.42141378 : f32
      %36 = vector.broadcast %cst_23 : f32 to vector<128x8xf32>
      %37 = arith.addf %35, %36 : vector<128x8xf32>
      %38 = arith.mulf %37, %30 : vector<128x8xf32>
      %cst_24 = arith.constant -0.284496725 : f32
      %39 = vector.broadcast %cst_24 : f32 to vector<128x8xf32>
      %40 = arith.addf %38, %39 : vector<128x8xf32>
      %41 = arith.mulf %40, %30 : vector<128x8xf32>
      %cst_25 = arith.constant 0.254829586 : f32
      %42 = vector.broadcast %cst_25 : f32 to vector<128x8xf32>
      %43 = arith.addf %41, %42 : vector<128x8xf32>
      %44 = arith.mulf %43, %30 : vector<128x8xf32>
      %cst_26 = arith.constant 0.000000e+00 : f32
      %45 = vector.broadcast %cst_26 : f32 to vector<128x8xf32>
      %46 = arith.subf %45, %25 : vector<128x8xf32>
      %47 = arith.mulf %46, %25 : vector<128x8xf32>
      %48 = math.exp %47 : vector<128x8xf32>
      %49 = arith.mulf %44, %48 : vector<128x8xf32>
      %cst_27 = arith.constant 1.000000e+00 : f32
      %50 = vector.broadcast %cst_27 : f32 to vector<128x8xf32>
      %51 = arith.subf %50, %49 : vector<128x8xf32>
      %52 = arith.mulf %24, %51 : vector<128x8xf32>
      %cst_28 = arith.constant 1.000000e+00 : f32
      %53 = vector.broadcast %cst_28 : f32 to vector<128x8xf32>
      %54 = arith.addf %53, %52 : vector<128x8xf32>
      %55 = arith.mulf %17, %54 : vector<128x8xf32>
      %c0_29 = arith.constant 0 : index
      %c0_30 = arith.constant 0 : index
      %56 = vector.load %arg5[%c0_29, %c0_30] : memref<128x8xf32, #tpu.memory_space<vmem>>, vector<128x8xf32>
      tpu.vector_store %arg5[%c0_29, %c0_30], %55 {strides = array<i32>} : memref<128x8xf32, #tpu.memory_space<vmem>>, vector<128x8xf32>,
    } else {
    }
    return
  }
  func.func @transform_0(%arg0: i32, %arg1: i32) -> (i32, i32) {
    %c0_i32 = arith.constant 0 : i32
    return %arg0, %arg1 : i32, i32
  }
  func.func @transform_1(%arg0: i32, %arg1: i32) -> (i32, i32) {
    %c0_i32 = arith.constant 0 : i32
    %c0_i32_0 = arith.constant 0 : i32
    return %arg1, %c0_i32 : i32, i32
  }
  func.func @transform_2(%arg0: i32, %arg1: i32) -> (i32, i32) {
    %c0_i32 = arith.constant 0 : i32
    %c0_i32_0 = arith.constant 0 : i32
    %c0_i32_1 = arith.constant 0 : i32
    return %c0_i32, %c0_i32_0 : i32, i32
  }
  func.func @transform_3(%arg0: i32, %arg1: i32) -> (i32, i32) {
    %c0_i32 = arith.constant 0 : i32
    %c0_i32_0 = arith.constant 0 : i32
    return %arg0, %c0_i32 : i32, i32
  }
}

module attributes {stable_mosaic.version = 11 : i64} {
  func.func @_matmul_bias_kernel(%arg0: i32, %arg1: i32, %arg2: memref<128x72xbf16, #tpu.memory_space<vmem>>, %arg3: memref<72x8xbf16, #tpu.memory_space<vmem>>, %arg4: memref<1x8xf32, #tpu.memory_space<vmem>>, %arg5: memref<128x8xf32, #tpu.memory_space<vmem>>, %arg6: memref<128x8xf32, #tpu.memory_space<vmem>>) attributes {dimension_semantics = [#tpu.dimension_semantics<parallel>, #tpu.dimension_semantics<arbitrary>], iteration_bounds = array<i64: 1, 1>, scalar_prefetch = 0 : i64, scratch_operands = 1 : i64, tpu.core_type = #tpu.core_type<tc>, window_params = [{transform_indices = @transform_0, window_bounds = array<i64: 128, 72>}, {transform_indices = @transform_1, window_bounds = array<i64: 72, 8>}, {pipeline_mode = #tpu.pipeline_mode<synchronous>, transform_indices = @transform_2, window_bounds = array<i64: 1, 8>}, {transform_indices = @transform_3, window_bounds = array<i64: 128, 8>}]} {
    %c0_i32 = arith.constant 0 : i32
    %0 = arith.cmpi eq, %arg1, %c0_i32 : i32
    %1 = arith.extui %0 : i1 to i32
    %c0_i32_0 = arith.constant 0 : i32
    %2 = arith.cmpi ne, %1, %c0_i32_0 : i32
    scf.if %2 {
      %cst_10 = arith.constant 0.000000e+00 : f32
      %12 = vector.broadcast %cst_10 : f32 to vector<128x8xf32>
      %c0_11 = arith.constant 0 : index
      %c0_12 = arith.constant 0 : index
      %13 = vector.load %arg6[%c0_11, %c0_12] : memref<128x8xf32, #tpu.memory_space<vmem>>, vector<128x8xf32>
      tpu.vector_store %arg6[%c0_11, %c0_12], %12 {strides = array<i32>} : memref<128x8xf32, #tpu.memory_space<vmem>>, vector<128x8xf32>,
    } else {
    }
    %c0 = arith.constant 0 : index
    %c0_1 = arith.constant 0 : index
    %3 = vector.load %arg6[%c0, %c0_1] : memref<128x8xf32, #tpu.memory_space<vmem>>, vector<128x8xf32>
    %c0_2 = arith.constant 0 : index
    %c0_3 = arith.constant 0 : index
    %4 = vector.load %arg2[%c0_2, %c0_3] : memref<128x72xbf16, #tpu.memory_space<vmem>>, vector<128x72xbf16>
    %c0_4 = arith.constant 0 : index
    %c0_5 = arith.constant 0 : index
    %5 = vector.load %arg3[%c0_4, %c0_5] : memref<72x8xbf16, #tpu.memory_space<vmem>>, vector<72x8xbf16>
    %cst = arith.constant dense<0.000000e+00> : vector<128x8xf32>
    %6 = tpu.matmul %4, %5, %cst {dimension_numbers = #tpu.dot_dimension_numbers<[1], [0], [0], [1], [0, 0, 1, 1], [], []>} : vector<128x72xbf16>, vector<72x8xbf16>, vector<128x8xf32> -> vector<128x8xf32>
    %7 = arith.addf %3, %6 : vector<128x8xf32>
    %c0_6 = arith.constant 0 : index
    %c0_7 = arith.constant 0 : index
    %8 = vector.load %arg6[%c0_6, %c0_7] : memref<128x8xf32, #tpu.memory_space<vmem>>, vector<128x8xf32>
    tpu.vector_store %arg6[%c0_6, %c0_7], %7 {strides = array<i32>} : memref<128x8xf32, #tpu.memory_space<vmem>>, vector<128x8xf32>,
    %c0_i32_8 = arith.constant 0 : i32
    %9 = arith.cmpi eq, %arg1, %c0_i32_8 : i32
    %10 = arith.extui %9 : i1 to i32
    %c0_i32_9 = arith.constant 0 : i32
    %11 = arith.cmpi ne, %10, %c0_i32_9 : i32
    scf.if %11 {
      %c0_10 = arith.constant 0 : index
      %c0_11 = arith.constant 0 : index
      %12 = vector.load %arg6[%c0_10, %c0_11] : memref<128x8xf32, #tpu.memory_space<vmem>>, vector<128x8xf32>
      %c0_12 = arith.constant 0 : index
      %c0_13 = arith.constant 0 : index
      %13 = vector.load %arg4[%c0_12, %c0_13] : memref<1x8xf32, #tpu.memory_space<vmem>>, vector<1x8xf32>
      %14 = vector.broadcast %13 : vector<1x8xf32> to vector<128x8xf32>
      %15 = arith.addf %12, %14 : vector<128x8xf32>
      %cst_14 = arith.constant 5.000000e-01 : f32
      %16 = vector.broadcast %cst_14 : f32 to vector<128x8xf32>
      %17 = arith.mulf %16, %15 : vector<128x8xf32>
      %cst_15 = arith.constant 0.707106769 : f32
      %18 = vector.broadcast %cst_15 : f32 to vector<128x8xf32>
      %19 = arith.mulf %15, %18 : vector<128x8xf32>
      %cst_16 = arith.constant 0.000000e+00 : f32
      %20 = vector.broadcast %cst_16 : f32 to vector<128x8xf32>
      %21 = arith.cmpf oge, %19, %20 : vector<128x8xf32>
      %cst_17 = arith.constant 1.000000e+00 : f32
      %cst_18 = arith.constant -1.000000e+00 : f32
      %22 = vector.broadcast %cst_17 : f32 to vector<128x8xf32>
      %23 = vector.broadcast %cst_18 : f32 to vector<128x8xf32>
      %24 = arith.select %21, %22, %23 : vector<128x8xi1>, vector<128x8xf32>
      %25 = math.absf %19 : vector<128x8xf32>
      %cst_19 = arith.constant 0.327591091 : f32
      %26 = vector.broadcast %cst_19 : f32 to vector<128x8xf32>
      %27 = arith.mulf %26, %25 : vector<128x8xf32>
      %cst_20 = arith.constant 1.000000e+00 : f32
      %28 = vector.broadcast %cst_20 : f32 to vector<128x8xf32>
      %29 = arith.addf %28, %27 : vector<128x8xf32>
      %30 = tpu.reciprocal %29 {approx = true} : vector<128x8xf32> -> vector<128x8xf32>
      %cst_21 = arith.constant 1.06140542 : f32
      %31 = vector.broadcast %cst_21 : f32 to vector<128x8xf32>
      %32 = arith.mulf %31, %30 : vector<128x8xf32>
      %cst_22 = arith.constant -1.45315206 : f32
      %33 = vector.broadcast %cst_22 : f32 to vector<128x8xf32>
      %34 = arith.addf %32, %33 : vector<128x8xf32>
      %35 = arith.mulf %34, %30 : vector<128x8xf32>
      %cst_23 = arith.constant 1.42141378 : f32
      %36 = vector.broadcast %cst_23 : f32 to vector<128x8xf32>
      %37 = arith.addf %35, %36 : vector<128x8xf32>
      %38 = arith.mulf %37, %30 : vector<128x8xf32>
      %cst_24 = arith.constant -0.284496725 : f32
      %39 = vector.broadcast %cst_24 : f32 to vector<128x8xf32>
      %40 = arith.addf %38, %39 : vector<128x8xf32>
      %41 = arith.mulf %40, %30 : vector<128x8xf32>
      %cst_25 = arith.constant 0.254829586 : f32
      %42 = vector.broadcast %cst_25 : f32 to vector<128x8xf32>
      %43 = arith.addf %41, %42 : vector<128x8xf32>
      %44 = arith.mulf %43, %30 : vector<128x8xf32>
      %cst_26 = arith.constant 0.000000e+00 : f32
      %45 = vector.broadcast %cst_26 : f32 to vector<128x8xf32>
      %46 = arith.subf %45, %25 : vector<128x8xf32>
      %47 = arith.mulf %46, %25 : vector<128x8xf32>
      %48 = math.exp %47 : vector<128x8xf32>
      %49 = arith.mulf %44, %48 : vector<128x8xf32>
      %cst_27 = arith.constant 1.000000e+00 : f32
      %50 = vector.broadcast %cst_27 : f32 to vector<128x8xf32>
      %51 = arith.subf %50, %49 : vector<128x8xf32>
      %52 = arith.mulf %24, %51 : vector<128x8xf32>
      %cst_28 = arith.constant 1.000000e+00 : f32
      %53 = vector.broadcast %cst_28 : f32 to vector<128x8xf32>
      %54 = arith.addf %53, %52 : vector<128x8xf32>
      %55 = arith.mulf %17, %54 : vector<128x8xf32>
      %c0_29 = arith.constant 0 : index
      %c0_30 = arith.constant 0 : index
      %56 = vector.load %arg5[%c0_29, %c0_30] : memref<128x8xf32, #tpu.memory_space<vmem>>, vector<128x8xf32>
      tpu.vector_store %arg5[%c0_29, %c0_30], %55 {strides = array<i32>} : memref<128x8xf32, #tpu.memory_space<vmem>>, vector<128x8xf32>,
    } else {
    }
    return
  }
  func.func @transform_0(%arg0: i32, %arg1: i32) -> (i32, i32) {
    %c0_i32 = arith.constant 0 : i32
    return %arg0, %arg1 : i32, i32
  }
  func.func @transform_1(%arg0: i32, %arg1: i32) -> (i32, i32) {
    %c0_i32 = arith.constant 0 : i32
    %c0_i32_0 = arith.constant 0 : i32
    return %arg1, %c0_i32 : i32, i32
  }
  func.func @transform_2(%arg0: i32, %arg1: i32) -> (i32, i32) {
    %c0_i32 = arith.constant 0 : i32
    %c0_i32_0 = arith.constant 0 : i32
    %c0_i32_1 = arith.constant 0 : i32
    return %c0_i32, %c0_i32_0 : i32, i32
  }
  func.func @transform_3(%arg0: i32, %arg1: i32) -> (i32, i32) {
    %c0_i32 = arith.constant 0 : i32
    %c0_i32_0 = arith.constant 0 : i32
    return %arg0, %c0_i32 : i32, i32
  }
}

module attributes {stable_mosaic.version = 11 : i64} {
  func.func @_bn_stats_kernel(%arg0: i32, %arg1: memref<128x8xf32, #tpu.memory_space<vmem>>, %arg2: memref<1x8xf32, #tpu.memory_space<vmem>>, %arg3: memref<1x8xf32, #tpu.memory_space<vmem>>) attributes {dimension_semantics = [#tpu.dimension_semantics<arbitrary>], iteration_bounds = array<i64: 1>, scalar_prefetch = 0 : i64, scratch_operands = 0 : i64, tpu.core_type = #tpu.core_type<tc>, window_params = [{transform_indices = @transform_0, window_bounds = array<i64: 128, 8>}, {pipeline_mode = #tpu.pipeline_mode<synchronous>, transform_indices = @transform_1, window_bounds = array<i64: 1, 8>}, {pipeline_mode = #tpu.pipeline_mode<synchronous>, transform_indices = @transform_2, window_bounds = array<i64: 1, 8>}]} {
    %c0_i32 = arith.constant 0 : i32
    %0 = arith.cmpi eq, %arg0, %c0_i32 : i32
    %1 = arith.extui %0 : i1 to i32
    %c0_i32_0 = arith.constant 0 : i32
    %2 = arith.cmpi ne, %1, %c0_i32_0 : i32
    scf.if %2 {
      %cst_11 = arith.constant 0.000000e+00 : f32
      %15 = vector.broadcast %cst_11 : f32 to vector<1x8xf32>
      %c0_12 = arith.constant 0 : index
      %c0_13 = arith.constant 0 : index
      %16 = vector.load %arg2[%c0_12, %c0_13] : memref<1x8xf32, #tpu.memory_space<vmem>>, vector<1x8xf32>
      tpu.vector_store %arg2[%c0_12, %c0_13], %15 {strides = array<i32>} : memref<1x8xf32, #tpu.memory_space<vmem>>, vector<1x8xf32>,
      %cst_14 = arith.constant 0.000000e+00 : f32
      %17 = vector.broadcast %cst_14 : f32 to vector<1x8xf32>
      %c0_15 = arith.constant 0 : index
      %c0_16 = arith.constant 0 : index
      %18 = vector.load %arg3[%c0_15, %c0_16] : memref<1x8xf32, #tpu.memory_space<vmem>>, vector<1x8xf32>
      tpu.vector_store %arg3[%c0_15, %c0_16], %17 {strides = array<i32>} : memref<1x8xf32, #tpu.memory_space<vmem>>, vector<1x8xf32>,
    } else {
    }
    %c0 = arith.constant 0 : index
    %c0_1 = arith.constant 0 : index
    %3 = vector.load %arg1[%c0, %c0_1] : memref<128x8xf32, #tpu.memory_space<vmem>>, vector<128x8xf32>
    %c0_2 = arith.constant 0 : index
    %c0_3 = arith.constant 0 : index
    %4 = vector.load %arg2[%c0_2, %c0_3] : memref<1x8xf32, #tpu.memory_space<vmem>>, vector<1x8xf32>
    %cst = arith.constant dense<0.000000e+00> : vector<8xf32>
    %5 = vector.multi_reduction <add>, %3, %cst [0] : vector<128x8xf32> to vector<8xf32>
    %6 = vector.shape_cast %5 : vector<8xf32> to vector<1x8xf32>
    %7 = arith.addf %4, %6 : vector<1x8xf32>
    %c0_4 = arith.constant 0 : index
    %c0_5 = arith.constant 0 : index
    %8 = vector.load %arg2[%c0_4, %c0_5] : memref<1x8xf32, #tpu.memory_space<vmem>>, vector<1x8xf32>
    tpu.vector_store %arg2[%c0_4, %c0_5], %7 {strides = array<i32>} : memref<1x8xf32, #tpu.memory_space<vmem>>, vector<1x8xf32>,
    %c0_6 = arith.constant 0 : index
    %c0_7 = arith.constant 0 : index
    %9 = vector.load %arg3[%c0_6, %c0_7] : memref<1x8xf32, #tpu.memory_space<vmem>>, vector<1x8xf32>
    %10 = arith.mulf %3, %3 : vector<128x8xf32>
    %cst_8 = arith.constant dense<0.000000e+00> : vector<8xf32>
    %11 = vector.multi_reduction <add>, %10, %cst_8 [0] : vector<128x8xf32> to vector<8xf32>
    %12 = vector.shape_cast %11 : vector<8xf32> to vector<1x8xf32>
    %13 = arith.addf %9, %12 : vector<1x8xf32>
    %c0_9 = arith.constant 0 : index
    %c0_10 = arith.constant 0 : index
    %14 = vector.load %arg3[%c0_9, %c0_10] : memref<1x8xf32, #tpu.memory_space<vmem>>, vector<1x8xf32>
    tpu.vector_store %arg3[%c0_9, %c0_10], %13 {strides = array<i32>} : memref<1x8xf32, #tpu.memory_space<vmem>>, vector<1x8xf32>,
    return
  }
  func.func @transform_0(%arg0: i32) -> (i32, i32) {
    %c0_i32 = arith.constant 0 : i32
    %c0_i32_0 = arith.constant 0 : i32
    return %arg0, %c0_i32 : i32, i32
  }
  func.func @transform_1(%arg0: i32) -> (i32, i32) {
    %c0_i32 = arith.constant 0 : i32
    %c0_i32_0 = arith.constant 0 : i32
    %c0_i32_1 = arith.constant 0 : i32
    return %c0_i32, %c0_i32_0 : i32, i32
  }
  func.func @transform_2(%arg0: i32) -> (i32, i32) {
    %c0_i32 = arith.constant 0 : i32
    %c0_i32_0 = arith.constant 0 : i32
    %c0_i32_1 = arith.constant 0 : i32
    return %c0_i32, %c0_i32_0 : i32, i32
  }
}

module attributes {stable_mosaic.version = 11 : i64} {
  func.func @_bn_apply_kernel(%arg0: i32, %arg1: memref<128x8xf32, #tpu.memory_space<vmem>>, %arg2: memref<1x8xf32, #tpu.memory_space<vmem>>, %arg3: memref<1x8xf32, #tpu.memory_space<vmem>>, %arg4: memref<128x8xf32, #tpu.memory_space<vmem>>) attributes {dimension_semantics = [#tpu.dimension_semantics<parallel>], iteration_bounds = array<i64: 1>, scalar_prefetch = 0 : i64, scratch_operands = 0 : i64, tpu.core_type = #tpu.core_type<tc>, window_params = [{transform_indices = @transform_0, window_bounds = array<i64: 128, 8>}, {pipeline_mode = #tpu.pipeline_mode<synchronous>, transform_indices = @transform_1, window_bounds = array<i64: 1, 8>}, {pipeline_mode = #tpu.pipeline_mode<synchronous>, transform_indices = @transform_2, window_bounds = array<i64: 1, 8>}, {transform_indices = @transform_3, window_bounds = array<i64: 128, 8>}]} {
    %c0 = arith.constant 0 : index
    %c0_0 = arith.constant 0 : index
    %0 = vector.load %arg1[%c0, %c0_0] : memref<128x8xf32, #tpu.memory_space<vmem>>, vector<128x8xf32>
    %c0_1 = arith.constant 0 : index
    %c0_2 = arith.constant 0 : index
    %1 = vector.load %arg2[%c0_1, %c0_2] : memref<1x8xf32, #tpu.memory_space<vmem>>, vector<1x8xf32>
    %2 = vector.broadcast %1 : vector<1x8xf32> to vector<128x8xf32>
    %3 = arith.mulf %0, %2 : vector<128x8xf32>
    %c0_3 = arith.constant 0 : index
    %c0_4 = arith.constant 0 : index
    %4 = vector.load %arg3[%c0_3, %c0_4] : memref<1x8xf32, #tpu.memory_space<vmem>>, vector<1x8xf32>
    %5 = vector.broadcast %4 : vector<1x8xf32> to vector<128x8xf32>
    %6 = arith.addf %3, %5 : vector<128x8xf32>
    %c0_5 = arith.constant 0 : index
    %c0_6 = arith.constant 0 : index
    %7 = vector.load %arg4[%c0_5, %c0_6] : memref<128x8xf32, #tpu.memory_space<vmem>>, vector<128x8xf32>
    tpu.vector_store %arg4[%c0_5, %c0_6], %6 {strides = array<i32>} : memref<128x8xf32, #tpu.memory_space<vmem>>, vector<128x8xf32>,
    return
  }
  func.func @transform_0(%arg0: i32) -> (i32, i32) {
    %c0_i32 = arith.constant 0 : i32
    %c0_i32_0 = arith.constant 0 : i32
    return %arg0, %c0_i32 : i32, i32
  }
  func.func @transform_1(%arg0: i32) -> (i32, i32) {
    %c0_i32 = arith.constant 0 : i32
    %c0_i32_0 = arith.constant 0 : i32
    %c0_i32_1 = arith.constant 0 : i32
    return %c0_i32, %c0_i32_0 : i32, i32
  }
  func.func @transform_2(%arg0: i32) -> (i32, i32) {
    %c0_i32 = arith.constant 0 : i32
    %c0_i32_0 = arith.constant 0 : i32
    %c0_i32_1 = arith.constant 0 : i32
    return %c0_i32, %c0_i32_0 : i32, i32
  }
  func.func @transform_3(%arg0: i32) -> (i32, i32) {
    %c0_i32 = arith.constant 0 : i32
    %c0_i32_0 = arith.constant 0 : i32
    return %arg0, %c0_i32 : i32, i32
  }
}

module attributes {stable_mosaic.version = 11 : i64} {
  func.func @_matmul_bias_kernel(%arg0: i32, %arg1: i32, %arg2: memref<32x72xbf16, #tpu.memory_space<vmem>>, %arg3: memref<72x16xbf16, #tpu.memory_space<vmem>>, %arg4: memref<1x16xf32, #tpu.memory_space<vmem>>, %arg5: memref<32x16xf32, #tpu.memory_space<vmem>>, %arg6: memref<32x16xf32, #tpu.memory_space<vmem>>) attributes {dimension_semantics = [#tpu.dimension_semantics<parallel>, #tpu.dimension_semantics<arbitrary>], iteration_bounds = array<i64: 1, 1>, scalar_prefetch = 0 : i64, scratch_operands = 1 : i64, tpu.core_type = #tpu.core_type<tc>, window_params = [{transform_indices = @transform_0, window_bounds = array<i64: 32, 72>}, {transform_indices = @transform_1, window_bounds = array<i64: 72, 16>}, {pipeline_mode = #tpu.pipeline_mode<synchronous>, transform_indices = @transform_2, window_bounds = array<i64: 1, 16>}, {transform_indices = @transform_3, window_bounds = array<i64: 32, 16>}]} {
    %c0_i32 = arith.constant 0 : i32
    %0 = arith.cmpi eq, %arg1, %c0_i32 : i32
    %1 = arith.extui %0 : i1 to i32
    %c0_i32_0 = arith.constant 0 : i32
    %2 = arith.cmpi ne, %1, %c0_i32_0 : i32
    scf.if %2 {
      %cst_10 = arith.constant 0.000000e+00 : f32
      %12 = vector.broadcast %cst_10 : f32 to vector<32x16xf32>
      %c0_11 = arith.constant 0 : index
      %c0_12 = arith.constant 0 : index
      %13 = vector.load %arg6[%c0_11, %c0_12] : memref<32x16xf32, #tpu.memory_space<vmem>>, vector<32x16xf32>
      tpu.vector_store %arg6[%c0_11, %c0_12], %12 {strides = array<i32>} : memref<32x16xf32, #tpu.memory_space<vmem>>, vector<32x16xf32>,
    } else {
    }
    %c0 = arith.constant 0 : index
    %c0_1 = arith.constant 0 : index
    %3 = vector.load %arg6[%c0, %c0_1] : memref<32x16xf32, #tpu.memory_space<vmem>>, vector<32x16xf32>
    %c0_2 = arith.constant 0 : index
    %c0_3 = arith.constant 0 : index
    %4 = vector.load %arg2[%c0_2, %c0_3] : memref<32x72xbf16, #tpu.memory_space<vmem>>, vector<32x72xbf16>
    %c0_4 = arith.constant 0 : index
    %c0_5 = arith.constant 0 : index
    %5 = vector.load %arg3[%c0_4, %c0_5] : memref<72x16xbf16, #tpu.memory_space<vmem>>, vector<72x16xbf16>
    %cst = arith.constant dense<0.000000e+00> : vector<32x16xf32>
    %6 = tpu.matmul %4, %5, %cst {dimension_numbers = #tpu.dot_dimension_numbers<[1], [0], [0], [1], [0, 0, 1, 1], [], []>} : vector<32x72xbf16>, vector<72x16xbf16>, vector<32x16xf32> -> vector<32x16xf32>
    %7 = arith.addf %3, %6 : vector<32x16xf32>
    %c0_6 = arith.constant 0 : index
    %c0_7 = arith.constant 0 : index
    %8 = vector.load %arg6[%c0_6, %c0_7] : memref<32x16xf32, #tpu.memory_space<vmem>>, vector<32x16xf32>
    tpu.vector_store %arg6[%c0_6, %c0_7], %7 {strides = array<i32>} : memref<32x16xf32, #tpu.memory_space<vmem>>, vector<32x16xf32>,
    %c0_i32_8 = arith.constant 0 : i32
    %9 = arith.cmpi eq, %arg1, %c0_i32_8 : i32
    %10 = arith.extui %9 : i1 to i32
    %c0_i32_9 = arith.constant 0 : i32
    %11 = arith.cmpi ne, %10, %c0_i32_9 : i32
    scf.if %11 {
      %c0_10 = arith.constant 0 : index
      %c0_11 = arith.constant 0 : index
      %12 = vector.load %arg6[%c0_10, %c0_11] : memref<32x16xf32, #tpu.memory_space<vmem>>, vector<32x16xf32>
      %c0_12 = arith.constant 0 : index
      %c0_13 = arith.constant 0 : index
      %13 = vector.load %arg4[%c0_12, %c0_13] : memref<1x16xf32, #tpu.memory_space<vmem>>, vector<1x16xf32>
      %14 = vector.broadcast %13 : vector<1x16xf32> to vector<32x16xf32>
      %15 = arith.addf %12, %14 : vector<32x16xf32>
      %cst_14 = arith.constant 5.000000e-01 : f32
      %16 = vector.broadcast %cst_14 : f32 to vector<32x16xf32>
      %17 = arith.mulf %16, %15 : vector<32x16xf32>
      %cst_15 = arith.constant 0.707106769 : f32
      %18 = vector.broadcast %cst_15 : f32 to vector<32x16xf32>
      %19 = arith.mulf %15, %18 : vector<32x16xf32>
      %cst_16 = arith.constant 0.000000e+00 : f32
      %20 = vector.broadcast %cst_16 : f32 to vector<32x16xf32>
      %21 = arith.cmpf oge, %19, %20 : vector<32x16xf32>
      %cst_17 = arith.constant 1.000000e+00 : f32
      %cst_18 = arith.constant -1.000000e+00 : f32
      %22 = vector.broadcast %cst_17 : f32 to vector<32x16xf32>
      %23 = vector.broadcast %cst_18 : f32 to vector<32x16xf32>
      %24 = arith.select %21, %22, %23 : vector<32x16xi1>, vector<32x16xf32>
      %25 = math.absf %19 : vector<32x16xf32>
      %cst_19 = arith.constant 0.327591091 : f32
      %26 = vector.broadcast %cst_19 : f32 to vector<32x16xf32>
      %27 = arith.mulf %26, %25 : vector<32x16xf32>
      %cst_20 = arith.constant 1.000000e+00 : f32
      %28 = vector.broadcast %cst_20 : f32 to vector<32x16xf32>
      %29 = arith.addf %28, %27 : vector<32x16xf32>
      %30 = tpu.reciprocal %29 {approx = true} : vector<32x16xf32> -> vector<32x16xf32>
      %cst_21 = arith.constant 1.06140542 : f32
      %31 = vector.broadcast %cst_21 : f32 to vector<32x16xf32>
      %32 = arith.mulf %31, %30 : vector<32x16xf32>
      %cst_22 = arith.constant -1.45315206 : f32
      %33 = vector.broadcast %cst_22 : f32 to vector<32x16xf32>
      %34 = arith.addf %32, %33 : vector<32x16xf32>
      %35 = arith.mulf %34, %30 : vector<32x16xf32>
      %cst_23 = arith.constant 1.42141378 : f32
      %36 = vector.broadcast %cst_23 : f32 to vector<32x16xf32>
      %37 = arith.addf %35, %36 : vector<32x16xf32>
      %38 = arith.mulf %37, %30 : vector<32x16xf32>
      %cst_24 = arith.constant -0.284496725 : f32
      %39 = vector.broadcast %cst_24 : f32 to vector<32x16xf32>
      %40 = arith.addf %38, %39 : vector<32x16xf32>
      %41 = arith.mulf %40, %30 : vector<32x16xf32>
      %cst_25 = arith.constant 0.254829586 : f32
      %42 = vector.broadcast %cst_25 : f32 to vector<32x16xf32>
      %43 = arith.addf %41, %42 : vector<32x16xf32>
      %44 = arith.mulf %43, %30 : vector<32x16xf32>
      %cst_26 = arith.constant 0.000000e+00 : f32
      %45 = vector.broadcast %cst_26 : f32 to vector<32x16xf32>
      %46 = arith.subf %45, %25 : vector<32x16xf32>
      %47 = arith.mulf %46, %25 : vector<32x16xf32>
      %48 = math.exp %47 : vector<32x16xf32>
      %49 = arith.mulf %44, %48 : vector<32x16xf32>
      %cst_27 = arith.constant 1.000000e+00 : f32
      %50 = vector.broadcast %cst_27 : f32 to vector<32x16xf32>
      %51 = arith.subf %50, %49 : vector<32x16xf32>
      %52 = arith.mulf %24, %51 : vector<32x16xf32>
      %cst_28 = arith.constant 1.000000e+00 : f32
      %53 = vector.broadcast %cst_28 : f32 to vector<32x16xf32>
      %54 = arith.addf %53, %52 : vector<32x16xf32>
      %55 = arith.mulf %17, %54 : vector<32x16xf32>
      %c0_29 = arith.constant 0 : index
      %c0_30 = arith.constant 0 : index
      %56 = vector.load %arg5[%c0_29, %c0_30] : memref<32x16xf32, #tpu.memory_space<vmem>>, vector<32x16xf32>
      tpu.vector_store %arg5[%c0_29, %c0_30], %55 {strides = array<i32>} : memref<32x16xf32, #tpu.memory_space<vmem>>, vector<32x16xf32>,
    } else {
    }
    return
  }
  func.func @transform_0(%arg0: i32, %arg1: i32) -> (i32, i32) {
    %c0_i32 = arith.constant 0 : i32
    return %arg0, %arg1 : i32, i32
  }
  func.func @transform_1(%arg0: i32, %arg1: i32) -> (i32, i32) {
    %c0_i32 = arith.constant 0 : i32
    %c0_i32_0 = arith.constant 0 : i32
    return %arg1, %c0_i32 : i32, i32
  }
  func.func @transform_2(%arg0: i32, %arg1: i32) -> (i32, i32) {
    %c0_i32 = arith.constant 0 : i32
    %c0_i32_0 = arith.constant 0 : i32
    %c0_i32_1 = arith.constant 0 : i32
    return %c0_i32, %c0_i32_0 : i32, i32
  }
  func.func @transform_3(%arg0: i32, %arg1: i32) -> (i32, i32) {
    %c0_i32 = arith.constant 0 : i32
    %c0_i32_0 = arith.constant 0 : i32
    return %arg0, %c0_i32 : i32, i32
  }
}

module attributes {stable_mosaic.version = 11 : i64} {
  func.func @_matmul_bias_kernel(%arg0: i32, %arg1: i32, %arg2: memref<32x144xbf16, #tpu.memory_space<vmem>>, %arg3: memref<144x32xbf16, #tpu.memory_space<vmem>>, %arg4: memref<1x32xf32, #tpu.memory_space<vmem>>, %arg5: memref<32x32xf32, #tpu.memory_space<vmem>>, %arg6: memref<32x32xf32, #tpu.memory_space<vmem>>) attributes {dimension_semantics = [#tpu.dimension_semantics<parallel>, #tpu.dimension_semantics<arbitrary>], iteration_bounds = array<i64: 1, 1>, scalar_prefetch = 0 : i64, scratch_operands = 1 : i64, tpu.core_type = #tpu.core_type<tc>, window_params = [{transform_indices = @transform_0, window_bounds = array<i64: 32, 144>}, {transform_indices = @transform_1, window_bounds = array<i64: 144, 32>}, {pipeline_mode = #tpu.pipeline_mode<synchronous>, transform_indices = @transform_2, window_bounds = array<i64: 1, 32>}, {transform_indices = @transform_3, window_bounds = array<i64: 32, 32>}]} {
    %c0_i32 = arith.constant 0 : i32
    %0 = arith.cmpi eq, %arg1, %c0_i32 : i32
    %1 = arith.extui %0 : i1 to i32
    %c0_i32_0 = arith.constant 0 : i32
    %2 = arith.cmpi ne, %1, %c0_i32_0 : i32
    scf.if %2 {
      %cst_10 = arith.constant 0.000000e+00 : f32
      %12 = vector.broadcast %cst_10 : f32 to vector<32x32xf32>
      %c0_11 = arith.constant 0 : index
      %c0_12 = arith.constant 0 : index
      %13 = vector.load %arg6[%c0_11, %c0_12] : memref<32x32xf32, #tpu.memory_space<vmem>>, vector<32x32xf32>
      tpu.vector_store %arg6[%c0_11, %c0_12], %12 {strides = array<i32>} : memref<32x32xf32, #tpu.memory_space<vmem>>, vector<32x32xf32>,
    } else {
    }
    %c0 = arith.constant 0 : index
    %c0_1 = arith.constant 0 : index
    %3 = vector.load %arg6[%c0, %c0_1] : memref<32x32xf32, #tpu.memory_space<vmem>>, vector<32x32xf32>
    %c0_2 = arith.constant 0 : index
    %c0_3 = arith.constant 0 : index
    %4 = vector.load %arg2[%c0_2, %c0_3] : memref<32x144xbf16, #tpu.memory_space<vmem>>, vector<32x144xbf16>
    %c0_4 = arith.constant 0 : index
    %c0_5 = arith.constant 0 : index
    %5 = vector.load %arg3[%c0_4, %c0_5] : memref<144x32xbf16, #tpu.memory_space<vmem>>, vector<144x32xbf16>
    %cst = arith.constant dense<0.000000e+00> : vector<32x32xf32>
    %6 = tpu.matmul %4, %5, %cst {dimension_numbers = #tpu.dot_dimension_numbers<[1], [0], [0], [1], [0, 0, 1, 1], [], []>} : vector<32x144xbf16>, vector<144x32xbf16>, vector<32x32xf32> -> vector<32x32xf32>
    %7 = arith.addf %3, %6 : vector<32x32xf32>
    %c0_6 = arith.constant 0 : index
    %c0_7 = arith.constant 0 : index
    %8 = vector.load %arg6[%c0_6, %c0_7] : memref<32x32xf32, #tpu.memory_space<vmem>>, vector<32x32xf32>
    tpu.vector_store %arg6[%c0_6, %c0_7], %7 {strides = array<i32>} : memref<32x32xf32, #tpu.memory_space<vmem>>, vector<32x32xf32>,
    %c0_i32_8 = arith.constant 0 : i32
    %9 = arith.cmpi eq, %arg1, %c0_i32_8 : i32
    %10 = arith.extui %9 : i1 to i32
    %c0_i32_9 = arith.constant 0 : i32
    %11 = arith.cmpi ne, %10, %c0_i32_9 : i32
    scf.if %11 {
      %c0_10 = arith.constant 0 : index
      %c0_11 = arith.constant 0 : index
      %12 = vector.load %arg6[%c0_10, %c0_11] : memref<32x32xf32, #tpu.memory_space<vmem>>, vector<32x32xf32>
      %c0_12 = arith.constant 0 : index
      %c0_13 = arith.constant 0 : index
      %13 = vector.load %arg4[%c0_12, %c0_13] : memref<1x32xf32, #tpu.memory_space<vmem>>, vector<1x32xf32>
      %14 = vector.broadcast %13 : vector<1x32xf32> to vector<32x32xf32>
      %15 = arith.addf %12, %14 : vector<32x32xf32>
      %cst_14 = arith.constant 5.000000e-01 : f32
      %16 = vector.broadcast %cst_14 : f32 to vector<32x32xf32>
      %17 = arith.mulf %16, %15 : vector<32x32xf32>
      %cst_15 = arith.constant 0.707106769 : f32
      %18 = vector.broadcast %cst_15 : f32 to vector<32x32xf32>
      %19 = arith.mulf %15, %18 : vector<32x32xf32>
      %cst_16 = arith.constant 0.000000e+00 : f32
      %20 = vector.broadcast %cst_16 : f32 to vector<32x32xf32>
      %21 = arith.cmpf oge, %19, %20 : vector<32x32xf32>
      %cst_17 = arith.constant 1.000000e+00 : f32
      %cst_18 = arith.constant -1.000000e+00 : f32
      %22 = vector.broadcast %cst_17 : f32 to vector<32x32xf32>
      %23 = vector.broadcast %cst_18 : f32 to vector<32x32xf32>
      %24 = arith.select %21, %22, %23 : vector<32x32xi1>, vector<32x32xf32>
      %25 = math.absf %19 : vector<32x32xf32>
      %cst_19 = arith.constant 0.327591091 : f32
      %26 = vector.broadcast %cst_19 : f32 to vector<32x32xf32>
      %27 = arith.mulf %26, %25 : vector<32x32xf32>
      %cst_20 = arith.constant 1.000000e+00 : f32
      %28 = vector.broadcast %cst_20 : f32 to vector<32x32xf32>
      %29 = arith.addf %28, %27 : vector<32x32xf32>
      %30 = tpu.reciprocal %29 {approx = true} : vector<32x32xf32> -> vector<32x32xf32>
      %cst_21 = arith.constant 1.06140542 : f32
      %31 = vector.broadcast %cst_21 : f32 to vector<32x32xf32>
      %32 = arith.mulf %31, %30 : vector<32x32xf32>
      %cst_22 = arith.constant -1.45315206 : f32
      %33 = vector.broadcast %cst_22 : f32 to vector<32x32xf32>
      %34 = arith.addf %32, %33 : vector<32x32xf32>
      %35 = arith.mulf %34, %30 : vector<32x32xf32>
      %cst_23 = arith.constant 1.42141378 : f32
      %36 = vector.broadcast %cst_23 : f32 to vector<32x32xf32>
      %37 = arith.addf %35, %36 : vector<32x32xf32>
      %38 = arith.mulf %37, %30 : vector<32x32xf32>
      %cst_24 = arith.constant -0.284496725 : f32
      %39 = vector.broadcast %cst_24 : f32 to vector<32x32xf32>
      %40 = arith.addf %38, %39 : vector<32x32xf32>
      %41 = arith.mulf %40, %30 : vector<32x32xf32>
      %cst_25 = arith.constant 0.254829586 : f32
      %42 = vector.broadcast %cst_25 : f32 to vector<32x32xf32>
      %43 = arith.addf %41, %42 : vector<32x32xf32>
      %44 = arith.mulf %43, %30 : vector<32x32xf32>
      %cst_26 = arith.constant 0.000000e+00 : f32
      %45 = vector.broadcast %cst_26 : f32 to vector<32x32xf32>
      %46 = arith.subf %45, %25 : vector<32x32xf32>
      %47 = arith.mulf %46, %25 : vector<32x32xf32>
      %48 = math.exp %47 : vector<32x32xf32>
      %49 = arith.mulf %44, %48 : vector<32x32xf32>
      %cst_27 = arith.constant 1.000000e+00 : f32
      %50 = vector.broadcast %cst_27 : f32 to vector<32x32xf32>
      %51 = arith.subf %50, %49 : vector<32x32xf32>
      %52 = arith.mulf %24, %51 : vector<32x32xf32>
      %cst_28 = arith.constant 1.000000e+00 : f32
      %53 = vector.broadcast %cst_28 : f32 to vector<32x32xf32>
      %54 = arith.addf %53, %52 : vector<32x32xf32>
      %55 = arith.mulf %17, %54 : vector<32x32xf32>
      %c0_29 = arith.constant 0 : index
      %c0_30 = arith.constant 0 : index
      %56 = vector.load %arg5[%c0_29, %c0_30] : memref<32x32xf32, #tpu.memory_space<vmem>>, vector<32x32xf32>
      tpu.vector_store %arg5[%c0_29, %c0_30], %55 {strides = array<i32>} : memref<32x32xf32, #tpu.memory_space<vmem>>, vector<32x32xf32>,
    } else {
    }
    return
  }
  func.func @transform_0(%arg0: i32, %arg1: i32) -> (i32, i32) {
    %c0_i32 = arith.constant 0 : i32
    return %arg0, %arg1 : i32, i32
  }
  func.func @transform_1(%arg0: i32, %arg1: i32) -> (i32, i32) {
    %c0_i32 = arith.constant 0 : i32
    %c0_i32_0 = arith.constant 0 : i32
    return %arg1, %c0_i32 : i32, i32
  }
  func.func @transform_2(%arg0: i32, %arg1: i32) -> (i32, i32) {
    %c0_i32 = arith.constant 0 : i32
    %c0_i32_0 = arith.constant 0 : i32
    %c0_i32_1 = arith.constant 0 : i32
    return %c0_i32, %c0_i32_0 : i32, i32
  }
  func.func @transform_3(%arg0: i32, %arg1: i32) -> (i32, i32) {
    %c0_i32 = arith.constant 0 : i32
    %c0_i32_0 = arith.constant 0 : i32
    return %arg0, %c0_i32 : i32, i32
  }
}

module attributes {stable_mosaic.version = 11 : i64} {
  func.func @_bn_stats_kernel(%arg0: i32, %arg1: memref<32x32xf32, #tpu.memory_space<vmem>>, %arg2: memref<1x32xf32, #tpu.memory_space<vmem>>, %arg3: memref<1x32xf32, #tpu.memory_space<vmem>>) attributes {dimension_semantics = [#tpu.dimension_semantics<arbitrary>], iteration_bounds = array<i64: 1>, scalar_prefetch = 0 : i64, scratch_operands = 0 : i64, tpu.core_type = #tpu.core_type<tc>, window_params = [{transform_indices = @transform_0, window_bounds = array<i64: 32, 32>}, {pipeline_mode = #tpu.pipeline_mode<synchronous>, transform_indices = @transform_1, window_bounds = array<i64: 1, 32>}, {pipeline_mode = #tpu.pipeline_mode<synchronous>, transform_indices = @transform_2, window_bounds = array<i64: 1, 32>}]} {
    %c0_i32 = arith.constant 0 : i32
    %0 = arith.cmpi eq, %arg0, %c0_i32 : i32
    %1 = arith.extui %0 : i1 to i32
    %c0_i32_0 = arith.constant 0 : i32
    %2 = arith.cmpi ne, %1, %c0_i32_0 : i32
    scf.if %2 {
      %cst_11 = arith.constant 0.000000e+00 : f32
      %15 = vector.broadcast %cst_11 : f32 to vector<1x32xf32>
      %c0_12 = arith.constant 0 : index
      %c0_13 = arith.constant 0 : index
      %16 = vector.load %arg2[%c0_12, %c0_13] : memref<1x32xf32, #tpu.memory_space<vmem>>, vector<1x32xf32>
      tpu.vector_store %arg2[%c0_12, %c0_13], %15 {strides = array<i32>} : memref<1x32xf32, #tpu.memory_space<vmem>>, vector<1x32xf32>,
      %cst_14 = arith.constant 0.000000e+00 : f32
      %17 = vector.broadcast %cst_14 : f32 to vector<1x32xf32>
      %c0_15 = arith.constant 0 : index
      %c0_16 = arith.constant 0 : index
      %18 = vector.load %arg3[%c0_15, %c0_16] : memref<1x32xf32, #tpu.memory_space<vmem>>, vector<1x32xf32>
      tpu.vector_store %arg3[%c0_15, %c0_16], %17 {strides = array<i32>} : memref<1x32xf32, #tpu.memory_space<vmem>>, vector<1x32xf32>,
    } else {
    }
    %c0 = arith.constant 0 : index
    %c0_1 = arith.constant 0 : index
    %3 = vector.load %arg1[%c0, %c0_1] : memref<32x32xf32, #tpu.memory_space<vmem>>, vector<32x32xf32>
    %c0_2 = arith.constant 0 : index
    %c0_3 = arith.constant 0 : index
    %4 = vector.load %arg2[%c0_2, %c0_3] : memref<1x32xf32, #tpu.memory_space<vmem>>, vector<1x32xf32>
    %cst = arith.constant dense<0.000000e+00> : vector<32xf32>
    %5 = vector.multi_reduction <add>, %3, %cst [0] : vector<32x32xf32> to vector<32xf32>
    %6 = vector.shape_cast %5 : vector<32xf32> to vector<1x32xf32>
    %7 = arith.addf %4, %6 : vector<1x32xf32>
    %c0_4 = arith.constant 0 : index
    %c0_5 = arith.constant 0 : index
    %8 = vector.load %arg2[%c0_4, %c0_5] : memref<1x32xf32, #tpu.memory_space<vmem>>, vector<1x32xf32>
    tpu.vector_store %arg2[%c0_4, %c0_5], %7 {strides = array<i32>} : memref<1x32xf32, #tpu.memory_space<vmem>>, vector<1x32xf32>,
    %c0_6 = arith.constant 0 : index
    %c0_7 = arith.constant 0 : index
    %9 = vector.load %arg3[%c0_6, %c0_7] : memref<1x32xf32, #tpu.memory_space<vmem>>, vector<1x32xf32>
    %10 = arith.mulf %3, %3 : vector<32x32xf32>
    %cst_8 = arith.constant dense<0.000000e+00> : vector<32xf32>
    %11 = vector.multi_reduction <add>, %10, %cst_8 [0] : vector<32x32xf32> to vector<32xf32>
    %12 = vector.shape_cast %11 : vector<32xf32> to vector<1x32xf32>
    %13 = arith.addf %9, %12 : vector<1x32xf32>
    %c0_9 = arith.constant 0 : index
    %c0_10 = arith.constant 0 : index
    %14 = vector.load %arg3[%c0_9, %c0_10] : memref<1x32xf32, #tpu.memory_space<vmem>>, vector<1x32xf32>
    tpu.vector_store %arg3[%c0_9, %c0_10], %13 {strides = array<i32>} : memref<1x32xf32, #tpu.memory_space<vmem>>, vector<1x32xf32>,
    return
  }
  func.func @transform_0(%arg0: i32) -> (i32, i32) {
    %c0_i32 = arith.constant 0 : i32
    %c0_i32_0 = arith.constant 0 : i32
    return %arg0, %c0_i32 : i32, i32
  }
  func.func @transform_1(%arg0: i32) -> (i32, i32) {
    %c0_i32 = arith.constant 0 : i32
    %c0_i32_0 = arith.constant 0 : i32
    %c0_i32_1 = arith.constant 0 : i32
    return %c0_i32, %c0_i32_0 : i32, i32
  }
  func.func @transform_2(%arg0: i32) -> (i32, i32) {
    %c0_i32 = arith.constant 0 : i32
    %c0_i32_0 = arith.constant 0 : i32
    %c0_i32_1 = arith.constant 0 : i32
    return %c0_i32, %c0_i32_0 : i32, i32
  }
}

module attributes {stable_mosaic.version = 11 : i64} {
  func.func @_bn_apply_kernel(%arg0: i32, %arg1: memref<32x32xf32, #tpu.memory_space<vmem>>, %arg2: memref<1x32xf32, #tpu.memory_space<vmem>>, %arg3: memref<1x32xf32, #tpu.memory_space<vmem>>, %arg4: memref<32x32xf32, #tpu.memory_space<vmem>>) attributes {dimension_semantics = [#tpu.dimension_semantics<parallel>], iteration_bounds = array<i64: 1>, scalar_prefetch = 0 : i64, scratch_operands = 0 : i64, tpu.core_type = #tpu.core_type<tc>, window_params = [{transform_indices = @transform_0, window_bounds = array<i64: 32, 32>}, {pipeline_mode = #tpu.pipeline_mode<synchronous>, transform_indices = @transform_1, window_bounds = array<i64: 1, 32>}, {pipeline_mode = #tpu.pipeline_mode<synchronous>, transform_indices = @transform_2, window_bounds = array<i64: 1, 32>}, {transform_indices = @transform_3, window_bounds = array<i64: 32, 32>}]} {
    %c0 = arith.constant 0 : index
    %c0_0 = arith.constant 0 : index
    %0 = vector.load %arg1[%c0, %c0_0] : memref<32x32xf32, #tpu.memory_space<vmem>>, vector<32x32xf32>
    %c0_1 = arith.constant 0 : index
    %c0_2 = arith.constant 0 : index
    %1 = vector.load %arg2[%c0_1, %c0_2] : memref<1x32xf32, #tpu.memory_space<vmem>>, vector<1x32xf32>
    %2 = vector.broadcast %1 : vector<1x32xf32> to vector<32x32xf32>
    %3 = arith.mulf %0, %2 : vector<32x32xf32>
    %c0_3 = arith.constant 0 : index
    %c0_4 = arith.constant 0 : index
    %4 = vector.load %arg3[%c0_3, %c0_4] : memref<1x32xf32, #tpu.memory_space<vmem>>, vector<1x32xf32>
    %5 = vector.broadcast %4 : vector<1x32xf32> to vector<32x32xf32>
    %6 = arith.addf %3, %5 : vector<32x32xf32>
    %c0_5 = arith.constant 0 : index
    %c0_6 = arith.constant 0 : index
    %7 = vector.load %arg4[%c0_5, %c0_6] : memref<32x32xf32, #tpu.memory_space<vmem>>, vector<32x32xf32>
    tpu.vector_store %arg4[%c0_5, %c0_6], %6 {strides = array<i32>} : memref<32x32xf32, #tpu.memory_space<vmem>>, vector<32x32xf32>,
    return
  }
  func.func @transform_0(%arg0: i32) -> (i32, i32) {
    %c0_i32 = arith.constant 0 : i32
    %c0_i32_0 = arith.constant 0 : i32
    return %arg0, %c0_i32 : i32, i32
  }
  func.func @transform_1(%arg0: i32) -> (i32, i32) {
    %c0_i32 = arith.constant 0 : i32
    %c0_i32_0 = arith.constant 0 : i32
    %c0_i32_1 = arith.constant 0 : i32
    return %c0_i32, %c0_i32_0 : i32, i32
  }
  func.func @transform_2(%arg0: i32) -> (i32, i32) {
    %c0_i32 = arith.constant 0 : i32
    %c0_i32_0 = arith.constant 0 : i32
    %c0_i32_1 = arith.constant 0 : i32
    return %c0_i32, %c0_i32_0 : i32, i32
  }
  func.func @transform_3(%arg0: i32) -> (i32, i32) {
    %c0_i32 = arith.constant 0 : i32
    %c0_i32_0 = arith.constant 0 : i32
    return %arg0, %c0_i32 : i32, i32
  }
}

module attributes {stable_mosaic.version = 11 : i64} {
  func.func @_matmul_bias_kernel(%arg0: i32, %arg1: i32, %arg2: memref<8x288xbf16, #tpu.memory_space<vmem>>, %arg3: memref<288x48xbf16, #tpu.memory_space<vmem>>, %arg4: memref<1x48xf32, #tpu.memory_space<vmem>>, %arg5: memref<8x48xf32, #tpu.memory_space<vmem>>, %arg6: memref<8x48xf32, #tpu.memory_space<vmem>>) attributes {dimension_semantics = [#tpu.dimension_semantics<parallel>, #tpu.dimension_semantics<arbitrary>], iteration_bounds = array<i64: 1, 1>, scalar_prefetch = 0 : i64, scratch_operands = 1 : i64, tpu.core_type = #tpu.core_type<tc>, window_params = [{transform_indices = @transform_0, window_bounds = array<i64: 8, 288>}, {transform_indices = @transform_1, window_bounds = array<i64: 288, 48>}, {pipeline_mode = #tpu.pipeline_mode<synchronous>, transform_indices = @transform_2, window_bounds = array<i64: 1, 48>}, {transform_indices = @transform_3, window_bounds = array<i64: 8, 48>}]} {
    %c0_i32 = arith.constant 0 : i32
    %0 = arith.cmpi eq, %arg1, %c0_i32 : i32
    %1 = arith.extui %0 : i1 to i32
    %c0_i32_0 = arith.constant 0 : i32
    %2 = arith.cmpi ne, %1, %c0_i32_0 : i32
    scf.if %2 {
      %cst_10 = arith.constant 0.000000e+00 : f32
      %12 = vector.broadcast %cst_10 : f32 to vector<8x48xf32>
      %c0_11 = arith.constant 0 : index
      %c0_12 = arith.constant 0 : index
      %13 = vector.load %arg6[%c0_11, %c0_12] : memref<8x48xf32, #tpu.memory_space<vmem>>, vector<8x48xf32>
      tpu.vector_store %arg6[%c0_11, %c0_12], %12 {strides = array<i32>} : memref<8x48xf32, #tpu.memory_space<vmem>>, vector<8x48xf32>,
    } else {
    }
    %c0 = arith.constant 0 : index
    %c0_1 = arith.constant 0 : index
    %3 = vector.load %arg6[%c0, %c0_1] : memref<8x48xf32, #tpu.memory_space<vmem>>, vector<8x48xf32>
    %c0_2 = arith.constant 0 : index
    %c0_3 = arith.constant 0 : index
    %4 = vector.load %arg2[%c0_2, %c0_3] : memref<8x288xbf16, #tpu.memory_space<vmem>>, vector<8x288xbf16>
    %c0_4 = arith.constant 0 : index
    %c0_5 = arith.constant 0 : index
    %5 = vector.load %arg3[%c0_4, %c0_5] : memref<288x48xbf16, #tpu.memory_space<vmem>>, vector<288x48xbf16>
    %cst = arith.constant dense<0.000000e+00> : vector<8x48xf32>
    %6 = tpu.matmul %4, %5, %cst {dimension_numbers = #tpu.dot_dimension_numbers<[1], [0], [0], [1], [0, 0, 1, 1], [], []>} : vector<8x288xbf16>, vector<288x48xbf16>, vector<8x48xf32> -> vector<8x48xf32>
    %7 = arith.addf %3, %6 : vector<8x48xf32>
    %c0_6 = arith.constant 0 : index
    %c0_7 = arith.constant 0 : index
    %8 = vector.load %arg6[%c0_6, %c0_7] : memref<8x48xf32, #tpu.memory_space<vmem>>, vector<8x48xf32>
    tpu.vector_store %arg6[%c0_6, %c0_7], %7 {strides = array<i32>} : memref<8x48xf32, #tpu.memory_space<vmem>>, vector<8x48xf32>,
    %c0_i32_8 = arith.constant 0 : i32
    %9 = arith.cmpi eq, %arg1, %c0_i32_8 : i32
    %10 = arith.extui %9 : i1 to i32
    %c0_i32_9 = arith.constant 0 : i32
    %11 = arith.cmpi ne, %10, %c0_i32_9 : i32
    scf.if %11 {
      %c0_10 = arith.constant 0 : index
      %c0_11 = arith.constant 0 : index
      %12 = vector.load %arg6[%c0_10, %c0_11] : memref<8x48xf32, #tpu.memory_space<vmem>>, vector<8x48xf32>
      %c0_12 = arith.constant 0 : index
      %c0_13 = arith.constant 0 : index
      %13 = vector.load %arg4[%c0_12, %c0_13] : memref<1x48xf32, #tpu.memory_space<vmem>>, vector<1x48xf32>
      %14 = vector.broadcast %13 : vector<1x48xf32> to vector<8x48xf32>
      %15 = arith.addf %12, %14 : vector<8x48xf32>
      %cst_14 = arith.constant 5.000000e-01 : f32
      %16 = vector.broadcast %cst_14 : f32 to vector<8x48xf32>
      %17 = arith.mulf %16, %15 : vector<8x48xf32>
      %cst_15 = arith.constant 0.707106769 : f32
      %18 = vector.broadcast %cst_15 : f32 to vector<8x48xf32>
      %19 = arith.mulf %15, %18 : vector<8x48xf32>
      %cst_16 = arith.constant 0.000000e+00 : f32
      %20 = vector.broadcast %cst_16 : f32 to vector<8x48xf32>
      %21 = arith.cmpf oge, %19, %20 : vector<8x48xf32>
      %cst_17 = arith.constant 1.000000e+00 : f32
      %cst_18 = arith.constant -1.000000e+00 : f32
      %22 = vector.broadcast %cst_17 : f32 to vector<8x48xf32>
      %23 = vector.broadcast %cst_18 : f32 to vector<8x48xf32>
      %24 = arith.select %21, %22, %23 : vector<8x48xi1>, vector<8x48xf32>
      %25 = math.absf %19 : vector<8x48xf32>
      %cst_19 = arith.constant 0.327591091 : f32
      %26 = vector.broadcast %cst_19 : f32 to vector<8x48xf32>
      %27 = arith.mulf %26, %25 : vector<8x48xf32>
      %cst_20 = arith.constant 1.000000e+00 : f32
      %28 = vector.broadcast %cst_20 : f32 to vector<8x48xf32>
      %29 = arith.addf %28, %27 : vector<8x48xf32>
      %30 = tpu.reciprocal %29 {approx = true} : vector<8x48xf32> -> vector<8x48xf32>
      %cst_21 = arith.constant 1.06140542 : f32
      %31 = vector.broadcast %cst_21 : f32 to vector<8x48xf32>
      %32 = arith.mulf %31, %30 : vector<8x48xf32>
      %cst_22 = arith.constant -1.45315206 : f32
      %33 = vector.broadcast %cst_22 : f32 to vector<8x48xf32>
      %34 = arith.addf %32, %33 : vector<8x48xf32>
      %35 = arith.mulf %34, %30 : vector<8x48xf32>
      %cst_23 = arith.constant 1.42141378 : f32
      %36 = vector.broadcast %cst_23 : f32 to vector<8x48xf32>
      %37 = arith.addf %35, %36 : vector<8x48xf32>
      %38 = arith.mulf %37, %30 : vector<8x48xf32>
      %cst_24 = arith.constant -0.284496725 : f32
      %39 = vector.broadcast %cst_24 : f32 to vector<8x48xf32>
      %40 = arith.addf %38, %39 : vector<8x48xf32>
      %41 = arith.mulf %40, %30 : vector<8x48xf32>
      %cst_25 = arith.constant 0.254829586 : f32
      %42 = vector.broadcast %cst_25 : f32 to vector<8x48xf32>
      %43 = arith.addf %41, %42 : vector<8x48xf32>
      %44 = arith.mulf %43, %30 : vector<8x48xf32>
      %cst_26 = arith.constant 0.000000e+00 : f32
      %45 = vector.broadcast %cst_26 : f32 to vector<8x48xf32>
      %46 = arith.subf %45, %25 : vector<8x48xf32>
      %47 = arith.mulf %46, %25 : vector<8x48xf32>
      %48 = math.exp %47 : vector<8x48xf32>
      %49 = arith.mulf %44, %48 : vector<8x48xf32>
      %cst_27 = arith.constant 1.000000e+00 : f32
      %50 = vector.broadcast %cst_27 : f32 to vector<8x48xf32>
      %51 = arith.subf %50, %49 : vector<8x48xf32>
      %52 = arith.mulf %24, %51 : vector<8x48xf32>
      %cst_28 = arith.constant 1.000000e+00 : f32
      %53 = vector.broadcast %cst_28 : f32 to vector<8x48xf32>
      %54 = arith.addf %53, %52 : vector<8x48xf32>
      %55 = arith.mulf %17, %54 : vector<8x48xf32>
      %c0_29 = arith.constant 0 : index
      %c0_30 = arith.constant 0 : index
      %56 = vector.load %arg5[%c0_29, %c0_30] : memref<8x48xf32, #tpu.memory_space<vmem>>, vector<8x48xf32>
      tpu.vector_store %arg5[%c0_29, %c0_30], %55 {strides = array<i32>} : memref<8x48xf32, #tpu.memory_space<vmem>>, vector<8x48xf32>,
    } else {
    }
    return
  }
  func.func @transform_0(%arg0: i32, %arg1: i32) -> (i32, i32) {
    %c0_i32 = arith.constant 0 : i32
    return %arg0, %arg1 : i32, i32
  }
  func.func @transform_1(%arg0: i32, %arg1: i32) -> (i32, i32) {
    %c0_i32 = arith.constant 0 : i32
    %c0_i32_0 = arith.constant 0 : i32
    return %arg1, %c0_i32 : i32, i32
  }
  func.func @transform_2(%arg0: i32, %arg1: i32) -> (i32, i32) {
    %c0_i32 = arith.constant 0 : i32
    %c0_i32_0 = arith.constant 0 : i32
    %c0_i32_1 = arith.constant 0 : i32
    return %c0_i32, %c0_i32_0 : i32, i32
  }
  func.func @transform_3(%arg0: i32, %arg1: i32) -> (i32, i32) {
    %c0_i32 = arith.constant 0 : i32
    %c0_i32_0 = arith.constant 0 : i32
    return %arg0, %c0_i32 : i32, i32
  }
}

module attributes {stable_mosaic.version = 11 : i64} {
  func.func @_matmul_bias_kernel(%arg0: i32, %arg1: i32, %arg2: memref<2x192xbf16, #tpu.memory_space<vmem>>, %arg3: memref<192x32xbf16, #tpu.memory_space<vmem>>, %arg4: memref<1x32xf32, #tpu.memory_space<vmem>>, %arg5: memref<2x32xf32, #tpu.memory_space<vmem>>, %arg6: memref<2x32xf32, #tpu.memory_space<vmem>>) attributes {dimension_semantics = [#tpu.dimension_semantics<parallel>, #tpu.dimension_semantics<arbitrary>], iteration_bounds = array<i64: 1, 1>, scalar_prefetch = 0 : i64, scratch_operands = 1 : i64, tpu.core_type = #tpu.core_type<tc>, window_params = [{transform_indices = @transform_0, window_bounds = array<i64: 2, 192>}, {transform_indices = @transform_1, window_bounds = array<i64: 192, 32>}, {pipeline_mode = #tpu.pipeline_mode<synchronous>, transform_indices = @transform_2, window_bounds = array<i64: 1, 32>}, {transform_indices = @transform_3, window_bounds = array<i64: 2, 32>}]} {
    %c0_i32 = arith.constant 0 : i32
    %0 = arith.cmpi eq, %arg1, %c0_i32 : i32
    %1 = arith.extui %0 : i1 to i32
    %c0_i32_0 = arith.constant 0 : i32
    %2 = arith.cmpi ne, %1, %c0_i32_0 : i32
    scf.if %2 {
      %cst_10 = arith.constant 0.000000e+00 : f32
      %12 = vector.broadcast %cst_10 : f32 to vector<2x32xf32>
      %c0_11 = arith.constant 0 : index
      %c0_12 = arith.constant 0 : index
      %13 = vector.load %arg6[%c0_11, %c0_12] : memref<2x32xf32, #tpu.memory_space<vmem>>, vector<2x32xf32>
      tpu.vector_store %arg6[%c0_11, %c0_12], %12 {strides = array<i32>} : memref<2x32xf32, #tpu.memory_space<vmem>>, vector<2x32xf32>,
    } else {
    }
    %c0 = arith.constant 0 : index
    %c0_1 = arith.constant 0 : index
    %3 = vector.load %arg6[%c0, %c0_1] : memref<2x32xf32, #tpu.memory_space<vmem>>, vector<2x32xf32>
    %c0_2 = arith.constant 0 : index
    %c0_3 = arith.constant 0 : index
    %4 = vector.load %arg2[%c0_2, %c0_3] : memref<2x192xbf16, #tpu.memory_space<vmem>>, vector<2x192xbf16>
    %c0_4 = arith.constant 0 : index
    %c0_5 = arith.constant 0 : index
    %5 = vector.load %arg3[%c0_4, %c0_5] : memref<192x32xbf16, #tpu.memory_space<vmem>>, vector<192x32xbf16>
    %cst = arith.constant dense<0.000000e+00> : vector<2x32xf32>
    %6 = tpu.matmul %4, %5, %cst {dimension_numbers = #tpu.dot_dimension_numbers<[1], [0], [0], [1], [0, 0, 1, 1], [], []>} : vector<2x192xbf16>, vector<192x32xbf16>, vector<2x32xf32> -> vector<2x32xf32>
    %7 = arith.addf %3, %6 : vector<2x32xf32>
    %c0_6 = arith.constant 0 : index
    %c0_7 = arith.constant 0 : index
    %8 = vector.load %arg6[%c0_6, %c0_7] : memref<2x32xf32, #tpu.memory_space<vmem>>, vector<2x32xf32>
    tpu.vector_store %arg6[%c0_6, %c0_7], %7 {strides = array<i32>} : memref<2x32xf32, #tpu.memory_space<vmem>>, vector<2x32xf32>,
    %c0_i32_8 = arith.constant 0 : i32
    %9 = arith.cmpi eq, %arg1, %c0_i32_8 : i32
    %10 = arith.extui %9 : i1 to i32
    %c0_i32_9 = arith.constant 0 : i32
    %11 = arith.cmpi ne, %10, %c0_i32_9 : i32
    scf.if %11 {
      %c0_10 = arith.constant 0 : index
      %c0_11 = arith.constant 0 : index
      %12 = vector.load %arg6[%c0_10, %c0_11] : memref<2x32xf32, #tpu.memory_space<vmem>>, vector<2x32xf32>
      %c0_12 = arith.constant 0 : index
      %c0_13 = arith.constant 0 : index
      %13 = vector.load %arg4[%c0_12, %c0_13] : memref<1x32xf32, #tpu.memory_space<vmem>>, vector<1x32xf32>
      %14 = vector.broadcast %13 : vector<1x32xf32> to vector<2x32xf32>
      %15 = arith.addf %12, %14 : vector<2x32xf32>
      %c0_14 = arith.constant 0 : index
      %c0_15 = arith.constant 0 : index
      %16 = vector.load %arg5[%c0_14, %c0_15] : memref<2x32xf32, #tpu.memory_space<vmem>>, vector<2x32xf32>
      tpu.vector_store %arg5[%c0_14, %c0_15], %15 {strides = array<i32>} : memref<2x32xf32, #tpu.memory_space<vmem>>, vector<2x32xf32>,
    } else {
    }
    return
  }
  func.func @transform_0(%arg0: i32, %arg1: i32) -> (i32, i32) {
    %c0_i32 = arith.constant 0 : i32
    return %arg0, %arg1 : i32, i32
  }
  func.func @transform_1(%arg0: i32, %arg1: i32) -> (i32, i32) {
    %c0_i32 = arith.constant 0 : i32
    %c0_i32_0 = arith.constant 0 : i32
    return %arg1, %c0_i32 : i32, i32
  }
  func.func @transform_2(%arg0: i32, %arg1: i32) -> (i32, i32) {
    %c0_i32 = arith.constant 0 : i32
    %c0_i32_0 = arith.constant 0 : i32
    %c0_i32_1 = arith.constant 0 : i32
    return %c0_i32, %c0_i32_0 : i32, i32
  }
  func.func @transform_3(%arg0: i32, %arg1: i32) -> (i32, i32) {
    %c0_i32 = arith.constant 0 : i32
    %c0_i32_0 = arith.constant 0 : i32
    return %arg0, %c0_i32 : i32, i32
  }
}

</mosaic_0001>

<llo_original>
// kernel: encoder_forward.12
$region0: #{encoder_forward.12}
  #allocation0 [shape = 'u32[]', space=smem, size = 0x4, offset = 0x4, fixed_abs, tag = 'smem constant byte address 0x4 - core index']
  #allocation1 [shape = 'u32[144,128]{1,0:T(1,128)}', space=vmem, size = 0x12000, scoped, tag = 'internal scratch']
  %s0 = inlined_call_operand.vmem [shape: f32[128,8], index: 0, kind: input, shape index: {}]
  %s1 = inlined_call_operand.vmem [shape: f32[1,8], index: 1, kind: output, shape index: {0}]
  %s2 = inlined_call_operand.vmem [shape: f32[1,8], index: 2, kind: output, shape index: {1}]
  %3 = xla_tuple %s1, %s2
  %s4 = sld [smem:[#allocation0]]
  $region26: #{encoder_forward.12} parent=0
    _
  %s6 = ssub.s32 1, %s4
  %s7 = scalar_select 0, %s6, %s4
  // Predicated region
  $region2: #{encoder_forward.12} parent=0 // pred_check
    _
  $region3: #{encoder_forward.12} parent=0 // pred_check_branch
    %9 = sbr.rel (0) target = $region5
  $region4: #{encoder_forward.12} parent=0 // pred_region
    _
  $region5: #{encoder_forward.12} parent=0 // pred_fallthru
    _
  %p10 = scmp.eq.s32.totalorder 0, 0
  // Predicated region
  $region6: #{encoder_forward.12} parent=0 // pred_check
    %p11 = pneg %p10
  $region7: #{encoder_forward.12} parent=0 // pred_check_branch
    %13 = sbr.rel (%p11) target = $region9
  $region8: #{encoder_forward.12} parent=0 // pred_region
    %vm14 = vcmask 57344
    %15 = vst.msk [vmem:[%s1] sm:$0x1] %vm14, 0.0
    %16 = vst.msk [vmem:[%s2] sm:$0x1] %vm14, 0.0
  $region9: #{encoder_forward.12} parent=0 // pred_fallthru
    _
  %v17 = vld [vmem:[%s0] sm:$0xff]
  %v18 = vld [vmem:[%s0 + $0x8] sm:$0xff]
  %v19 = vld [vmem:[%s0 + $0x10] sm:$0xff]
  %v20 = vld [vmem:[%s0 + $0x18] sm:$0xff]
  %v21 = vld [vmem:[%s0 + $0x20] sm:$0xff]
  %v22 = vld [vmem:[%s0 + $0x28] sm:$0xff]
  %v23 = vld [vmem:[%s0 + $0x30] sm:$0xff]
  %v24 = vld [vmem:[%s0 + $0x38] sm:$0xff]
  %v25 = vld [vmem:[%s0 + $0x40] sm:$0xff]
  %v26 = vld [vmem:[%s0 + $0x48] sm:$0xff]
  %v27 = vld [vmem:[%s0 + $0x50] sm:$0xff]
  %v28 = vld [vmem:[%s0 + $0x58] sm:$0xff]
  %v29 = vld [vmem:[%s0 + $0x60] sm:$0xff]
  %v30 = vld [vmem:[%s0 + $0x68] sm:$0xff]
  %v31 = vld [vmem:[%s0 + $0x70] sm:$0xff]
  %v32 = vld [vmem:[%s0 + $0x78] sm:$0xff]
  %v33 = vld [vmem:[%s1] sm:$0x1]
  %vm34 = vcmask 64512
  %v35 = vsel %vm34, %v17, 0.0
  %v36 = vsel %vm34, %v18, 0.0
  %v37 = vadd.f32 %v35, %v36
  %v38 = vsel %vm34, %v19, 0.0
  %v39 = vadd.f32 %v37, %v38
  %v40 = vsel %vm34, %v20, 0.0
  %v41 = vadd.f32 %v39, %v40
  %v42 = vsel %vm34, %v21, 0.0
  %v43 = vadd.f32 %v41, %v42
  %v44 = vsel %vm34, %v22, 0.0
  %v45 = vadd.f32 %v43, %v44
  %v46 = vsel %vm34, %v23, 0.0
  %v47 = vadd.f32 %v45, %v46
  %v48 = vsel %vm34, %v24, 0.0
  %v49 = vadd.f32 %v47, %v48
  %v50 = vsel %vm34, %v25, 0.0
  %v51 = vadd.f32 %v49, %v50
  %v52 = vsel %vm34, %v26, 0.0
  %v53 = vadd.f32 %v51, %v52
  %v54 = vsel %vm34, %v27, 0.0
  %v55 = vadd.f32 %v53, %v54
  %v56 = vsel %vm34, %v28, 0.0
  %v57 = vadd.f32 %v55, %v56
  %v58 = vsel %vm34, %v29, 0.0
  %v59 = vadd.f32 %v57, %v58
  %v60 = vsel %vm34, %v30, 0.0
  %v61 = vadd.f32 %v59, %v60
  %v62 = vsel %vm34, %v31, 0.0
  %v63 = vadd.f32 %v61, %v62
  %v64 = vsel %vm34, %v32, 0.0
  %v65 = vadd.f32 %v63, %v64
  %v66 = vrot.slane %v65, 4
  %v67 = vadd.f32 %v65, %v66
  %v68 = vrot.slane %v67, 2
  %v69 = vadd.f32 %v67, %v68
  %v70 = vrot.slane %v69, 1
  %v71 = vadd.f32 %v69, %v70
  %v72 = vadd.f32 %v33, %v71
  %vm73 = vcmask 57344
  %74 = vst.msk [vmem:[%s1] sm:$0x1] %vm73, %v72
  %v75 = vld [vmem:[%s2] sm:$0x1]
  %v76 = vmul.f32 %v17, %v17
  %v77 = vmul.f32 %v18, %v18
  %v78 = vmul.f32 %v19, %v19
  %v79 = vmul.f32 %v20, %v20
  %v80 = vmul.f32 %v21, %v21
  %v81 = vmul.f32 %v22, %v22
  %v82 = vmul.f32 %v23, %v23
  %v83 = vmul.f32 %v24, %v24
  %v84 = vmul.f32 %v25, %v25
  %v85 = vmul.f32 %v26, %v26
  %v86 = vmul.f32 %v27, %v27
  %v87 = vmul.f32 %v28, %v28
  %v88 = vmul.f32 %v29, %v29
  %v89 = vmul.f32 %v30, %v30
  %v90 = vmul.f32 %v31, %v31
  %v91 = vmul.f32 %v32, %v32
  %v92 = vsel %vm34, %v76, 0.0
  %v93 = vsel %vm34, %v77, 0.0
  %v94 = vadd.f32 %v92, %v93
  %v95 = vsel %vm34, %v78, 0.0
  %v96 = vadd.f32 %v94, %v95
  %v97 = vsel %vm34, %v79, 0.0
  %v98 = vadd.f32 %v96, %v97
  %v99 = vsel %vm34, %v80, 0.0
  %v100 = vadd.f32 %v98, %v99
  %v101 = vsel %vm34, %v81, 0.0
  %v102 = vadd.f32 %v100, %v101
  %v103 = vsel %vm34, %v82, 0.0
  %v104 = vadd.f32 %v102, %v103
  %v105 = vsel %vm34, %v83, 0.0
  %v106 = vadd.f32 %v104, %v105
  %v107 = vsel %vm34, %v84, 0.0
  %v108 = vadd.f32 %v106, %v107
  %v109 = vsel %vm34, %v85, 0.0
  %v110 = vadd.f32 %v108, %v109
  %v111 = vsel %vm34, %v86, 0.0
  %v112 = vadd.f32 %v110, %v111
  %v113 = vsel %vm34, %v87, 0.0
  %v114 = vadd.f32 %v112, %v113
  %v115 = vsel %vm34, %v88, 0.0
  %v116 = vadd.f32 %v114, %v115
  %v117 = vsel %vm34, %v89, 0.0
  %v118 = vadd.f32 %v116, %v117
  %v119 = vsel %vm34, %v90, 0.0
  %v120 = vadd.f32 %v118, %v119
  %v121 = vsel %vm34, %v91, 0.0
  %v122 = vadd.f32 %v120, %v121
  %v123 = vrot.slane %v122, 4
  %v124 = vadd.f32 %v122, %v123
  %v125 = vrot.slane %v124, 2
  %v126 = vadd.f32 %v124, %v125
  %v127 = vrot.slane %v126, 1
  %v128 = vadd.f32 %v126, %v127
  %v129 = vadd.f32 %v75, %v128
  %130 = vst.msk [vmem:[%s2] sm:$0x1] %vm73, %v129
  // Predicated region
  $region10: #{encoder_forward.12} parent=0 // pred_check
    _
  $region11: #{encoder_forward.12} parent=0 // pred_check_branch
    %132 = sbr.rel (0) target = $region13
  $region12: #{encoder_forward.12} parent=0 // pred_region
    _
  $region13: #{encoder_forward.12} parent=0 // pred_fallthru
    _
  // Predicated region
  $region14: #{encoder_forward.12} parent=0 // pred_check
    _
  $region15: #{encoder_forward.12} parent=0 // pred_check_branch
    %134 = sbr.rel (0) target = $region17
  $region16: #{encoder_forward.12} parent=0 // pred_region
    _
  $region17: #{encoder_forward.12} parent=0 // pred_fallthru
    _
  // Predicated region
  $region18: #{encoder_forward.12} parent=0 // pred_check
    _
  $region19: #{encoder_forward.12} parent=0 // pred_check_branch
    %136 = sbr.rel (0) target = $region21
  $region20: #{encoder_forward.12} parent=0 // pred_region
    _
  $region21: #{encoder_forward.12} parent=0 // pred_fallthru
    _
  // Predicated region
  $region22: #{encoder_forward.12} parent=0 // pred_check
    _
  $region23: #{encoder_forward.12} parent=0 // pred_check_branch
    %138 = sbr.rel (0) target = $region25
  $region24: #{encoder_forward.12} parent=0 // pred_region
    _
  $region25: #{encoder_forward.12} parent=0 // pred_fallthru
    _

// kernel: encoder_forward.13
$region0: #{encoder_forward.13}
  #allocation0 [shape = 'u32[]', space=smem, size = 0x4, offset = 0x4, fixed_abs, tag = 'smem constant byte address 0x4 - core index']
  #allocation1 [shape = 'u32[144,128]{1,0:T(1,128)}', space=vmem, size = 0x12000, scoped, tag = 'internal scratch']
  %s0 = inlined_call_operand.vmem [shape: f32[128,8], index: 0, kind: input, shape index: {}]
  %s1 = inlined_call_operand.vmem [shape: f32[1,8], index: 1, kind: input, shape index: {}]
  %s2 = inlined_call_operand.vmem [shape: f32[1,8], index: 2, kind: input, shape index: {}]
  %s3 = inlined_call_operand.vmem [shape: f32[128,8], index: 3, kind: output, shape index: {}]
  %s4 = sld [smem:[#allocation0]]
  $region22: #{encoder_forward.13} parent=0
    _
  %s6 = ssub.s32 1, %s4
  %s7 = scalar_select 0, %s6, %s4
  // Predicated region
  $region2: #{encoder_forward.13} parent=0 // pred_check
    _
  $region3: #{encoder_forward.13} parent=0 // pred_check_branch
    %9 = sbr.rel (0) target = $region5
  $region4: #{encoder_forward.13} parent=0 // pred_region
    _
  $region5: #{encoder_forward.13} parent=0 // pred_fallthru
    _
  // Predicated region
  $region6: #{encoder_forward.13} parent=0 // pred_check
    _
  $region7: #{encoder_forward.13} parent=0 // pred_check_branch
    %11 = sbr.rel (0) target = $region9
  $region8: #{encoder_forward.13} parent=0 // pred_region
    _
  $region9: #{encoder_forward.13} parent=0 // pred_fallthru
    _
  // Predicated region
  $region10: #{encoder_forward.13} parent=0 // pred_check
    _
  $region11: #{encoder_forward.13} parent=0 // pred_check_branch
    %13 = sbr.rel (0) target = $region13
  $region12: #{encoder_forward.13} parent=0 // pred_region
    _
  $region13: #{encoder_forward.13} parent=0 // pred_fallthru
    _
  %v14 = vld [vmem:[%s0] sm:$0xff]
  %v15 = vld [vmem:[%s0 + $0x8] sm:$0xff]
  %v16 = vld [vmem:[%s0 + $0x10] sm:$0xff]
  %v17 = vld [vmem:[%s0 + $0x18] sm:$0xff]
  %v18 = vld [vmem:[%s0 + $0x20] sm:$0xff]
  %v19 = vld [vmem:[%s0 + $0x28] sm:$0xff]
  %v20 = vld [vmem:[%s0 + $0x30] sm:$0xff]
  %v21 = vld [vmem:[%s0 + $0x38] sm:$0xff]
  %v22 = vld [vmem:[%s0 + $0x40] sm:$0xff]
  %v23 = vld [vmem:[%s0 + $0x48] sm:$0xff]
  %v24 = vld [vmem:[%s0 + $0x50] sm:$0xff]
  %v25 = vld [vmem:[%s0 + $0x58] sm:$0xff]
  %v26 = vld [vmem:[%s0 + $0x60] sm:$0xff]
  %v27 = vld [vmem:[%s0 + $0x68] sm:$0xff]
  %v28 = vld [vmem:[%s0 + $0x70] sm:$0xff]
  %v29 = vld [vmem:[%s0 + $0x78] sm:$0xff]
  %v30 = vld [vmem:[%s1] sm:$0x1]
  %v32 = vlaneseq
  %v33 = vshrl.u32 %v32, 7
  %v34 = vsub.s32 0, %v33
  %v35 = vrot.slane %v30, %v34
  %v37 = vmul.f32 %v14, %v35
  %v38 = vmul.f32 %v15, %v35
  %v39 = vmul.f32 %v16, %v35
  %v40 = vmul.f32 %v17, %v35
  %v41 = vmul.f32 %v18, %v35
  %v42 = vmul.f32 %v19, %v35
  %v43 = vmul.f32 %v20, %v35
  %v44 = vmul.f32 %v21, %v35
  %v45 = vmul.f32 %v22, %v35
  %v46 = vmul.f32 %v23, %v35
  %v47 = vmul.f32 %v24, %v35
  %v48 = vmul.f32 %v25, %v35
  %v49 = vmul.f32 %v26, %v35
  %v50 = vmul.f32 %v27, %v35
  %v51 = vmul.f32 %v28, %v35
  %v52 = vmul.f32 %v29, %v35
  %v53 = vld [vmem:[%s2] sm:$0x1]
  %v55 = vlaneseq
  %v56 = vshrl.u32 %v55, 7
  %v57 = vsub.s32 0, %v56
  %v58 = vrot.slane %v53, %v57
  %v60 = vadd.f32 %v37, %v58
  %v61 = vadd.f32 %v38, %v58
  %v62 = vadd.f32 %v39, %v58
  %v63 = vadd.f32 %v40, %v58
  %v64 = vadd.f32 %v41, %v58
  %v65 = vadd.f32 %v42, %v58
  %v66 = vadd.f32 %v43, %v58
  %v67 = vadd.f32 %v44, %v58
  %v68 = vadd.f32 %v45, %v58
  %v69 = vadd.f32 %v46, %v58
  %v70 = vadd.f32 %v47, %v58
  %v71 = vadd.f32 %v48, %v58
  %v72 = vadd.f32 %v49, %v58
  %v73 = vadd.f32 %v50, %v58
  %v74 = vadd.f32 %v51, %v58
  %v75 = vadd.f32 %v52, %v58
  %vm76 = vcmask 64512
  %77 = vst.msk [vmem:[%s3] sm:$0xff] %vm76, %v60
  %78 = vst.msk [vmem:[%s3 + $0x8] sm:$0xff] %vm76, %v61
  %79 = vst.msk [vmem:[%s3 + $0x10] sm:$0xff] %vm76, %v62
  %80 = vst.msk [vmem:[%s3 + $0x18] sm:$0xff] %vm76, %v63
  %81 = vst.msk [vmem:[%s3 + $0x20] sm:$0xff] %vm76, %v64
  %82 = vst.msk [vmem:[%s3 + $0x28] sm:$0xff] %vm76, %v65
  %83 = vst.msk [vmem:[%s3 + $0x30] sm:$0xff] %vm76, %v66
  %84 = vst.msk [vmem:[%s3 + $0x38] sm:$0xff] %vm76, %v67
  %85 = vst.msk [vmem:[%s3 + $0x40] sm:$0xff] %vm76, %v68
  %86 = vst.msk [vmem:[%s3 + $0x48] sm:$0xff] %vm76, %v69
  %87 = vst.msk [vmem:[%s3 + $0x50] sm:$0xff] %vm76, %v70
  %88 = vst.msk [vmem:[%s3 + $0x58] sm:$0xff] %vm76, %v71
  %89 = vst.msk [vmem:[%s3 + $0x60] sm:$0xff] %vm76, %v72
  %90 = vst.msk [vmem:[%s3 + $0x68] sm:$0xff] %vm76, %v73
  %91 = vst.msk [vmem:[%s3 + $0x70] sm:$0xff] %vm76, %v74
  %92 = vst.msk [vmem:[%s3 + $0x78] sm:$0xff] %vm76, %v75
  // Predicated region
  $region14: #{encoder_forward.13} parent=0 // pred_check
    _
  $region15: #{encoder_forward.13} parent=0 // pred_check_branch
    %94 = sbr.rel (0) target = $region17
  $region16: #{encoder_forward.13} parent=0 // pred_region
    _
  $region17: #{encoder_forward.13} parent=0 // pred_fallthru
    _
  // Predicated region
  $region18: #{encoder_forward.13} parent=0 // pred_check
    _
  $region19: #{encoder_forward.13} parent=0 // pred_check_branch
    %96 = sbr.rel (0) target = $region21
  $region20: #{encoder_forward.13} parent=0 // pred_region
    _
  $region21: #{encoder_forward.13} parent=0 // pred_fallthru
    _

// kernel: encoder_forward.10
$region0: #{encoder_forward.10}
  #allocation0 [shape = 'u32[]', space=smem, size = 0x4, offset = 0x4, fixed_abs, tag = 'smem constant byte address 0x4 - core index']
  #allocation1 [shape = 'u32[144,128]{1,0:T(1,128)}', space=vmem, size = 0x12000, scoped, tag = 'internal scratch']
  #allocation2 [shape = 'f32[128,8]{1,0:T(8,128)}', space=vmem, size = 0x10000, scoped, tag = 'scratch operand']
  %s0 = inlined_call_operand.vmem [shape: bf16[128,27], index: 0, kind: input, shape index: {}]
  %s1 = inlined_call_operand.vmem [shape: bf16[27,8], index: 1, kind: input, shape index: {}]
  %s2 = inlined_call_operand.vmem [shape: f32[1,8], index: 2, kind: input, shape index: {}]
  %s3 = inlined_call_operand.vmem [shape: f32[128,8], index: 3, kind: output, shape index: {}]
  %s4 = sld [smem:[#allocation0]]
  $region30: #{encoder_forward.10} parent=0
    _
  %s6 = ssub.s32 1, %s4
  %s7 = scalar_select 0, %s6, %s4
  // Predicated region
  $region2: #{encoder_forward.10} parent=0 // pred_check
    _
  $region3: #{encoder_forward.10} parent=0 // pred_check_branch
    %9 = sbr.rel (0) target = $region5
  $region4: #{encoder_forward.10} parent=0 // pred_region
    _
  $region5: #{encoder_forward.10} parent=0 // pred_fallthru
    _
  // Predicated region
  $region6: #{encoder_forward.10} parent=0 // pred_check
    _
  $region7: #{encoder_forward.10} parent=0 // pred_check_branch
    %11 = sbr.rel (0) target = $region9
  $region8: #{encoder_forward.10} parent=0 // pred_region
    _
  $region9: #{encoder_forward.10} parent=0 // pred_fallthru
    _
  // Predicated region
  $region10: #{encoder_forward.10} parent=0 // pred_check
    _
  $region11: #{encoder_forward.10} parent=0 // pred_check_branch
    %13 = sbr.rel (0) target = $region13
  $region12: #{encoder_forward.10} parent=0 // pred_region
    _
  $region13: #{encoder_forward.10} parent=0 // pred_fallthru
    _
  %p15 = scmp.eq.s32.totalorder 0, 0
  // Predicated region
  $region14: #{encoder_forward.10} parent=0 // pred_check
    %p16 = pneg %p15
  $region15: #{encoder_forward.10} parent=0 // pred_check_branch
    %18 = sbr.rel (%p16) target = $region17
  $region16: #{encoder_forward.10} parent=0 // pred_region
    %vm19 = vcmask 64512
    %20 = vst.msk [vmem:[#allocation2] sm:$0xff] %vm19, 0.0
    %21 = vst.msk [vmem:[#allocation2 + $0x8] sm:$0xff] %vm19, 0.0
    %22 = vst.msk [vmem:[#allocation2 + $0x10] sm:$0xff] %vm19, 0.0
    %23 = vst.msk [vmem:[#allocation2 + $0x18] sm:$0xff] %vm19, 0.0
    %24 = vst.msk [vmem:[#allocation2 + $0x20] sm:$0xff] %vm19, 0.0
    %25 = vst.msk [vmem:[#allocation2 + $0x28] sm:$0xff] %vm19, 0.0
    %26 = vst.msk [vmem:[#allocation2 + $0x30] sm:$0xff] %vm19, 0.0
    %27 = vst.msk [vmem:[#allocation2 + $0x38] sm:$0xff] %vm19, 0.0
    %28 = vst.msk [vmem:[#allocation2 + $0x40] sm:$0xff] %vm19, 0.0
    %29 = vst.msk [vmem:[#allocation2 + $0x48] sm:$0xff] %vm19, 0.0
    %30 = vst.msk [vmem:[#allocation2 + $0x50] sm:$0xff] %vm19, 0.0
    %31 = vst.msk [vmem:[#allocation2 + $0x58] sm:$0xff] %vm19, 0.0
    %32 = vst.msk [vmem:[#allocation2 + $0x60] sm:$0xff] %vm19, 0.0
    %33 = vst.msk [vmem:[#allocation2 + $0x68] sm:$0xff] %vm19, 0.0
    %34 = vst.msk [vmem:[#allocation2 + $0x70] sm:$0xff] %vm19, 0.0
    %35 = vst.msk [vmem:[#allocation2 + $0x78] sm:$0xff] %vm19, 0.0
  $region17: #{encoder_forward.10} parent=0 // pred_fallthru
    _
  %v36 = vld [vmem:[#allocation2] sm:$0xff]
  %v37 = vld [vmem:[#allocation2 + $0x8] sm:$0xff]
  %v38 = vld [vmem:[#allocation2 + $0x10] sm:$0xff]
  %v39 = vld [vmem:[#allocation2 + $0x18] sm:$0xff]
  %v40 = vld [vmem:[#allocation2 + $0x20] sm:$0xff]
  %v41 = vld [vmem:[#allocation2 + $0x28] sm:$0xff]
  %v42 = vld [vmem:[#allocation2 + $0x30] sm:$0xff]
  %v43 = vld [vmem:[#allocation2 + $0x38] sm:$0xff]
  %v44 = vld [vmem:[#allocation2 + $0x40] sm:$0xff]
  %v45 = vld [vmem:[#allocation2 + $0x48] sm:$0xff]
  %v46 = vld [vmem:[#allocation2 + $0x50] sm:$0xff]
  %v47 = vld [vmem:[#allocation2 + $0x58] sm:$0xff]
  %v48 = vld [vmem:[#allocation2 + $0x60] sm:$0xff]
  %v49 = vld [vmem:[#allocation2 + $0x68] sm:$0xff]
  %v50 = vld [vmem:[#allocation2 + $0x70] sm:$0xff]
  %v51 = vld [vmem:[#allocation2 + $0x78] sm:$0xff]
  %v52 = vld [vmem:[%s0] sm:$0xf]
  %v53 = vld [vmem:[%s0 + $0x4] sm:$0xf]
  %v54 = vld [vmem:[%s0 + $0x8] sm:$0xf]
  %v55 = vld [vmem:[%s0 + $0xc] sm:$0xf]
  %v56 = vld [vmem:[%s0 + $0x10] sm:$0xf]
  %v57 = vld [vmem:[%s0 + $0x14] sm:$0xf]
  %v58 = vld [vmem:[%s0 + $0x18] sm:$0xf]
  %v59 = vld [vmem:[%s0 + $0x1c] sm:$0xf]
  %v60 = vld [vmem:[%s0 + $0x20] sm:$0xf]
  %v61 = vld [vmem:[%s0 + $0x24] sm:$0xf]
  %v62 = vld [vmem:[%s0 + $0x28] sm:$0xf]
  %v63 = vld [vmem:[%s0 + $0x2c] sm:$0xf]
  %v64 = vld [vmem:[%s0 + $0x30] sm:$0xf]
  %v65 = vld [vmem:[%s0 + $0x34] sm:$0xf]
  %v66 = vld [vmem:[%s0 + $0x38] sm:$0xf]
  %v67 = vld [vmem:[%s0 + $0x3c] sm:$0xf]
  %v68 = vld [vmem:[%s1] sm:$0xf]
  %v69 = vld [vmem:[%s1 + $0x4] sm:$0xf]
  %v70 = vld [vmem:[%s1 + $0x8] sm:$0xf]
  %v71 = vld [vmem:[%s1 + $0xc] sm:$0x3]
  %v88 = vunpack.c.l.b16 %v52
  %v89 = vunpack.c.l.b16 %v53
  %v90 = vunpack.c.l.b16 %v54
  %v91 = vunpack.c.l.b16 %v55
  %v92 = vunpack.c.l.b16 %v56
  %v93 = vunpack.c.l.b16 %v57
  %v94 = vunpack.c.l.b16 %v58
  %v95 = vunpack.c.l.b16 %v59
  %v96 = vunpack.c.l.b16 %v60
  %v97 = vunpack.c.l.b16 %v61
  %v98 = vunpack.c.l.b16 %v62
  %v99 = vunpack.c.l.b16 %v63
  %v100 = vunpack.c.l.b16 %v64
  %v101 = vunpack.c.l.b16 %v65
  %v102 = vunpack.c.l.b16 %v66
  %v103 = vunpack.c.l.b16 %v67
  %v104 = vpack.c.b16 %v89, %v88
  %v105 = vpack.c.b16 %v91, %v90
  %v106 = vpack.c.b16 %v93, %v92
  %v107 = vpack.c.b16 %v95, %v94
  %v108 = vpack.c.b16 %v97, %v96
  %v109 = vpack.c.b16 %v99, %v98
  %v110 = vpack.c.b16 %v101, %v100
  %v111 = vpack.c.b16 %v103, %v102
  %v116 = vunpack.c.l.b16 %v68
  %v117 = vunpack.c.l.b16 %v69
  %v118 = vunpack.c.l.b16 %v70
  %v119 = vunpack.c.l.b16 %v71
  %v120 = vpack.c.b16 %v117, %v116
  %v121 = vpack.c.b16 %v119, %v118
  %vm123 = vcmask 220160
  %v125 = vsel %vm123, %v104, 0
  %v128 = vsel %vm123, %v105, 0
  %v131 = vsel %vm123, %v106, 0
  %v134 = vsel %vm123, %v107, 0
  %v137 = vsel %vm123, %v108, 0
  %v140 = vsel %vm123, %v109, 0
  %v143 = vsel %vm123, %v110, 0
  %v146 = vsel %vm123, %v111, 0
  %vm148 = vcmask 1044480
  %vm149 = vcmask 1045504
  %v150 = vsel %vm148, 4294967295, 65535
  %v151 = vsel %vm149, %v150, 0
  %v153 = vand.u32 %v121, %v151
  %155 = vmatprep.subr.bf16.mxu0 0
  %156 = vmatpush1.bf16.msra.mxu0 %v120
  %157 = vmatprep.subr.bf16.mxu0 0
  %158 = vmatpush1.bf16.msra.mxu0 %v153
  %159 = vmatprep.subr.bf16.mxu0 0
  %160 = vmatpush1.bf16.msra.mxu0 0
  %161 = vmatprep.subr.bf16.mxu0 0
  %162 = vmatpush1.bf16.msra.mxu0 0
  %163 = vmatprep.subr.bf16.mxu0 0
  %164 = vmatpush1.bf16.msra.mxu0 0
  %165 = vmatprep.subr.bf16.mxu0 0
  %166 = vmatpush1.bf16.msra.mxu0 0
  %167 = vmatprep.subr.bf16.mxu0 0
  %168 = vmatpush1.bf16.msra.mxu0 0
  %169 = vmatprep.subr.bf16.mxu0 0
  %170 = vmatpush1.bf16.msra.mxu0 0
  %171 = vmatprep.subr.bf16.mxu0 0
  %172 = vmatpush1.bf16.msra.mxu0 0
  %173 = vmatprep.subr.bf16.mxu0 0
  %174 = vmatpush1.bf16.msra.mxu0 0
  %175 = vmatprep.subr.bf16.mxu0 0
  %176 = vmatpush1.bf16.msra.mxu0 0
  %177 = vmatprep.subr.bf16.mxu0 0
  %178 = vmatpush1.bf16.msra.mxu0 0
  %179 = vmatprep.subr.bf16.mxu0 0
  %180 = vmatpush1.bf16.msra.mxu0 0
  %181 = vmatprep.subr.bf16.mxu0 0
  %182 = vmatpush1.bf16.msra.mxu0 0
  %183 = vmatprep.subr.bf16.mxu0 0
  %184 = vmatpush1.bf16.msra.mxu0 0
  %185 = vmatprep.subr.bf16.mxu0 0
  %186 = vmatpush1.bf16.msra.mxu0 0
  %187 = vmatprep.mubr.bf16.mxu0 0
  %188 = vmatmul.mubr.bf16.gmra.mrb[0].mxu0 %v125
  %v189 = vpop.f32.mrb[0].mxu0
  %v190 = vadd.f32 0.0, %v189
  %v191 = vpop.f32.mrb[0].mxu0
  %v192 = vpop.f32.mrb[0].mxu0
  %v193 = vadd.f32 0.0, %v192
  %v194 = vpop.f32.mrb[0].mxu0
  %195 = vmatprep.mubr.bf16.mxu0 0
  %196 = vmatmul.mubr.bf16.gmra.mrb[0].mxu0 %v128
  %v197 = vpop.f32.mrb[0].mxu0
  %v198 = vadd.f32 0.0, %v197
  %v199 = vpop.f32.mrb[0].mxu0
  %v200 = vpop.f32.mrb[0].mxu0
  %v201 = vadd.f32 0.0, %v200
  %v202 = vpop.f32.mrb[0].mxu0
  %203 = vmatprep.mubr.bf16.mxu0 0
  %204 = vmatmul.mubr.bf16.gmra.mrb[0].mxu0 %v131
  %v205 = vpop.f32.mrb[0].mxu0
  %v206 = vadd.f32 0.0, %v205
  %v207 = vpop.f32.mrb[0].mxu0
  %v208 = vpop.f32.mrb[0].mxu0
  %v209 = vadd.f32 0.0, %v208
  %v210 = vpop.f32.mrb[0].mxu0
  %211 = vmatprep.mubr.bf16.mxu0 0
  %212 = vmatmul.mubr.bf16.gmra.mrb[0].mxu0 %v134
  %v213 = vpop.f32.mrb[0].mxu0
  %v214 = vadd.f32 0.0, %v213
  %v215 = vpop.f32.mrb[0].mxu0
  %v216 = vpop.f32.mrb[0].mxu0
  %v217 = vadd.f32 0.0, %v216
  %v218 = vpop.f32.mrb[0].mxu0
  %219 = vmatprep.mubr.bf16.mxu0 0
  %220 = vmatmul.mubr.bf16.gmra.mrb[0].mxu0 %v137
  %v221 = vpop.f32.mrb[0].mxu0
  %v222 = vadd.f32 0.0, %v221
  %v223 = vpop.f32.mrb[0].mxu0
  %v224 = vpop.f32.mrb[0].mxu0
  %v225 = vadd.f32 0.0, %v224
  %v226 = vpop.f32.mrb[0].mxu0
  %227 = vmatprep.mubr.bf16.mxu0 0
  %228 = vmatmul.mubr.bf16.gmra.mrb[0].mxu0 %v140
  %v229 = vpop.f32.mrb[0].mxu0
  %v230 = vadd.f32 0.0, %v229
  %v231 = vpop.f32.mrb[0].mxu0
  %v232 = vpop.f32.mrb[0].mxu0
  %v233 = vadd.f32 0.0, %v232
  %v234 = vpop.f32.mrb[0].mxu0
  %235 = vmatprep.mubr.bf16.mxu0 0
  %236 = vmatmul.mubr.bf16.gmra.mrb[0].mxu0 %v143
  %v237 = vpop.f32.mrb[0].mxu0
  %v238 = vadd.f32 0.0, %v237
  %v239 = vpop.f32.mrb[0].mxu0
  %v240 = vpop.f32.mrb[0].mxu0
  %v241 = vadd.f32 0.0, %v240
  %v242 = vpop.f32.mrb[0].mxu0
  %243 = vmatprep.mubr.bf16.mxu0 0
  %244 = vmatmul.mubr.bf16.gmra.mrb[0].mxu0 %v146
  %v245 = vpop.f32.mrb[0].mxu0
  %v246 = vadd.f32 0.0, %v245
  %v247 = vpop.f32.mrb[0].mxu0
  %v248 = vpop.f32.mrb[0].mxu0
  %v249 = vadd.f32 0.0, %v248
  %v250 = vpop.f32.mrb[0].mxu0
  %251 = vdwg.mxu0
  %v252 = vadd.f32 %v36, %v190
  %v253 = vadd.f32 %v37, %v193
  %v254 = vadd.f32 %v38, %v198
  %v255 = vadd.f32 %v39, %v201
  %v256 = vadd.f32 %v40, %v206
  %v257 = vadd.f32 %v41, %v209
  %v258 = vadd.f32 %v42, %v214
  %v259 = vadd.f32 %v43, %v217
  %v260 = vadd.f32 %v44, %v222
  %v261 = vadd.f32 %v45, %v225
  %v262 = vadd.f32 %v46, %v230
  %v263 = vadd.f32 %v47, %v233
  %v264 = vadd.f32 %v48, %v238
  %v265 = vadd.f32 %v49, %v241
  %v266 = vadd.f32 %v50, %v246
  %v267 = vadd.f32 %v51, %v249
  %vm268 = vcmask 64512
  %269 = vst.msk [vmem:[#allocation2] sm:$0xff] %vm268, %v252
  %270 = vst.msk [vmem:[#allocation2 + $0x8] sm:$0xff] %vm268, %v253
  %271 = vst.msk [vmem:[#allocation2 + $0x10] sm:$0xff] %vm268, %v254
  %272 = vst.msk [vmem:[#allocation2 + $0x18] sm:$0xff] %vm268, %v255
  %273 = vst.msk [vmem:[#allocation2 + $0x20] sm:$0xff] %vm268, %v256
  %274 = vst.msk [vmem:[#allocation2 + $0x28] sm:$0xff] %vm268, %v257
  %275 = vst.msk [vmem:[#allocation2 + $0x30] sm:$0xff] %vm268, %v258
  %276 = vst.msk [vmem:[#allocation2 + $0x38] sm:$0xff] %vm268, %v259
  %277 = vst.msk [vmem:[#allocation2 + $0x40] sm:$0xff] %vm268, %v260
  %278 = vst.msk [vmem:[#allocation2 + $0x48] sm:$0xff] %vm268, %v261
  %279 = vst.msk [vmem:[#allocation2 + $0x50] sm:$0xff] %vm268, %v262
  %280 = vst.msk [vmem:[#allocation2 + $0x58] sm:$0xff] %vm268, %v263
  %281 = vst.msk [vmem:[#allocation2 + $0x60] sm:$0xff] %vm268, %v264
  %282 = vst.msk [vmem:[#allocation2 + $0x68] sm:$0xff] %vm268, %v265
  %283 = vst.msk [vmem:[#allocation2 + $0x70] sm:$0xff] %vm268, %v266
  %284 = vst.msk [vmem:[#allocation2 + $0x78] sm:$0xff] %vm268, %v267
  // Predicated region
  $region18: #{encoder_forward.10} parent=0 // pred_check
    %p285 = pneg %p15
  $region19: #{encoder_forward.10} parent=0 // pred_check_branch
    %287 = sbr.rel (%p285) target = $region21
  $region20: #{encoder_forward.10} parent=0 // pred_region
    %v288 = vld [vmem:[#allocation2] sm:$0xff]
    %v289 = vld [vmem:[#allocation2 + $0x8] sm:$0xff]
    %v290 = vld [vmem:[#allocation2 + $0x10] sm:$0xff]
    %v291 = vld [vmem:[#allocation2 + $0x18] sm:$0xff]
    %v292 = vld [vmem:[#allocation2 + $0x20] sm:$0xff]
    %v293 = vld [vmem:[#allocation2 + $0x28] sm:$0xff]
    %v294 = vld [vmem:[#allocation2 + $0x30] sm:$0xff]
    %v295 = vld [vmem:[#allocation2 + $0x38] sm:$0xff]
    %v296 = vld [vmem:[#allocation2 + $0x40] sm:$0xff]
    %v297 = vld [vmem:[#allocation2 + $0x48] sm:$0xff]
    %v298 = vld [vmem:[#allocation2 + $0x50] sm:$0xff]
    %v299 = vld [vmem:[#allocation2 + $0x58] sm:$0xff]
    %v300 = vld [vmem:[#allocation2 + $0x60] sm:$0xff]
    %v301 = vld [vmem:[#allocation2 + $0x68] sm:$0xff]
    %v302 = vld [vmem:[#allocation2 + $0x70] sm:$0xff]
    %v303 = vld [vmem:[#allocation2 + $0x78] sm:$0xff]
    %v304 = vld [vmem:[%s2] sm:$0x1]
    %v306 = vlaneseq
    %v307 = vshrl.u32 %v306, 7
    %v308 = vsub.s32 0, %v307
    %v309 = vrot.slane %v304, %v308
    %v311 = vadd.f32 %v288, %v309
    %v312 = vadd.f32 %v289, %v309
    %v313 = vadd.f32 %v290, %v309
    %v314 = vadd.f32 %v291, %v309
    %v315 = vadd.f32 %v292, %v309
    %v316 = vadd.f32 %v293, %v309
    %v317 = vadd.f32 %v294, %v309
    %v318 = vadd.f32 %v295, %v309
    %v319 = vadd.f32 %v296, %v309
    %v320 = vadd.f32 %v297, %v309
    %v321 = vadd.f32 %v298, %v309
    %v322 = vadd.f32 %v299, %v309
    %v323 = vadd.f32 %v300, %v309
    %v324 = vadd.f32 %v301, %v309
    %v325 = vadd.f32 %v302, %v309
    %v326 = vadd.f32 %v303, %v309
    %v327 = vmul.f32 %v311, 0.5
    %v328 = vmul.f32 %v312, 0.5
    %v329 = vmul.f32 %v313, 0.5
    %v330 = vmul.f32 %v314, 0.5
    %v331 = vmul.f32 %v315, 0.5
    %v332 = vmul.f32 %v316, 0.5
    %v333 = vmul.f32 %v317, 0.5
    %v334 = vmul.f32 %v318, 0.5
    %v335 = vmul.f32 %v319, 0.5
    %v336 = vmul.f32 %v320, 0.5
    %v337 = vmul.f32 %v321, 0.5
    %v338 = vmul.f32 %v322, 0.5
    %v339 = vmul.f32 %v323, 0.5
    %v340 = vmul.f32 %v324, 0.5
    %v341 = vmul.f32 %v325, 0.5
    %v342 = vmul.f32 %v326, 0.5
    %v343 = vmul.f32 %v311, 0.70710677
    %v344 = vmul.f32 %v312, 0.70710677
    %v345 = vmul.f32 %v313, 0.70710677
    %v346 = vmul.f32 %v314, 0.70710677
    %v347 = vmul.f32 %v315, 0.70710677
    %v348 = vmul.f32 %v316, 0.70710677
    %v349 = vmul.f32 %v317, 0.70710677
    %v350 = vmul.f32 %v318, 0.70710677
    %v351 = vmul.f32 %v319, 0.70710677
    %v352 = vmul.f32 %v320, 0.70710677
    %v353 = vmul.f32 %v321, 0.70710677
    %v354 = vmul.f32 %v322, 0.70710677
    %v355 = vmul.f32 %v323, 0.70710677
    %v356 = vmul.f32 %v324, 0.70710677
    %v357 = vmul.f32 %v325, 0.70710677
    %v358 = vmul.f32 %v326, 0.70710677
    %vm359 = vcmp.ge.f32.partialorder %v343, 0.0
    %vm360 = vcmp.ge.f32.partialorder %v344, 0.0
    %vm361 = vcmp.ge.f32.partialorder %v345, 0.0
    %vm362 = vcmp.ge.f32.partialorder %v346, 0.0
    %vm363 = vcmp.ge.f32.partialorder %v347, 0.0
    %vm364 = vcmp.ge.f32.partialorder %v348, 0.0
    %vm365 = vcmp.ge.f32.partialorder %v349, 0.0
    %vm366 = vcmp.ge.f32.partialorder %v350, 0.0
    %vm367 = vcmp.ge.f32.partialorder %v351, 0.0
    %vm368 = vcmp.ge.f32.partialorder %v352, 0.0
    %vm369 = vcmp.ge.f32.partialorder %v353, 0.0
    %vm370 = vcmp.ge.f32.partialorder %v354, 0.0
    %vm371 = vcmp.ge.f32.partialorder %v355, 0.0
    %vm372 = vcmp.ge.f32.partialorder %v356, 0.0
    %vm373 = vcmp.ge.f32.partialorder %v357, 0.0
    %vm374 = vcmp.ge.f32.partialorder %v358, 0.0
    %v375 = vsel %vm359, 1.0, -1.0
    %v376 = vsel %vm360, 1.0, -1.0
    %v377 = vsel %vm361, 1.0, -1.0
    %v378 = vsel %vm362, 1.0, -1.0
    %v379 = vsel %vm363, 1.0, -1.0
    %v380 = vsel %vm364, 1.0, -1.0
    %v381 = vsel %vm365, 1.0, -1.0
    %v382 = vsel %vm366, 1.0, -1.0
    %v383 = vsel %vm367, 1.0, -1.0
    %v384 = vsel %vm368, 1.0, -1.0
    %v385 = vsel %vm369, 1.0, -1.0
    %v386 = vsel %vm370, 1.0, -1.0
    %v387 = vsel %vm371, 1.0, -1.0
    %v388 = vsel %vm372, 1.0, -1.0
    %v389 = vsel %vm373, 1.0, -1.0
    %v390 = vsel %vm374, 1.0, -1.0
    %v391 = vand.u32 2147483647, %v343
    %v392 = vand.u32 2147483647, %v344
    %v393 = vand.u32 2147483647, %v345
    %v394 = vand.u32 2147483647, %v346
    %v395 = vand.u32 2147483647, %v347
    %v396 = vand.u32 2147483647, %v348
    %v397 = vand.u32 2147483647, %v349
    %v398 = vand.u32 2147483647, %v350
    %v399 = vand.u32 2147483647, %v351
    %v400 = vand.u32 2147483647, %v352
    %v401 = vand.u32 2147483647, %v353
    %v402 = vand.u32 2147483647, %v354
    %v403 = vand.u32 2147483647, %v355
    %v404 = vand.u32 2147483647, %v356
    %v405 = vand.u32 2147483647, %v357
    %v406 = vand.u32 2147483647, %v358
    %v407 = vmul.f32 %v391, 0.3275911
    %v408 = vmul.f32 %v392, 0.3275911
    %v409 = vmul.f32 %v393, 0.3275911
    %v410 = vmul.f32 %v394, 0.3275911
    %v411 = vmul.f32 %v395, 0.3275911
    %v412 = vmul.f32 %v396, 0.3275911
    %v413 = vmul.f32 %v397, 0.3275911
    %v414 = vmul.f32 %v398, 0.3275911
    %v415 = vmul.f32 %v399, 0.3275911
    %v416 = vmul.f32 %v400, 0.3275911
    %v417 = vmul.f32 %v401, 0.3275911
    %v418 = vmul.f32 %v402, 0.3275911
    %v419 = vmul.f32 %v403, 0.3275911
    %v420 = vmul.f32 %v404, 0.3275911
    %v421 = vmul.f32 %v405, 0.3275911
    %v422 = vmul.f32 %v406, 0.3275911
    %v423 = vadd.f32 %v407, 1.0
    %v424 = vadd.f32 %v408, 1.0
    %v425 = vadd.f32 %v409, 1.0
    %v426 = vadd.f32 %v410, 1.0
    %v427 = vadd.f32 %v411, 1.0
    %v428 = vadd.f32 %v412, 1.0
    %v429 = vadd.f32 %v413, 1.0
    %v430 = vadd.f32 %v414, 1.0
    %v431 = vadd.f32 %v415, 1.0
    %v432 = vadd.f32 %v416, 1.0
    %v433 = vadd.f32 %v417, 1.0
    %v434 = vadd.f32 %v418, 1.0
    %v435 = vadd.f32 %v419, 1.0
    %v436 = vadd.f32 %v420, 1.0
    %v437 = vadd.f32 %v421, 1.0
    %v438 = vadd.f32 %v422, 1.0
    %v439 = vrcp.pop %v423
    %v440 = vrcp.pop %v424
    %v441 = vrcp.pop %v425
    %v442 = vrcp.pop %v426
    %v443 = vrcp.pop %v427
    %v444 = vrcp.pop %v428
    %v445 = vrcp.pop %v429
    %v446 = vrcp.pop %v430
    %v447 = vrcp.pop %v431
    %v448 = vrcp.pop %v432
    %v449 = vrcp.pop %v433
    %v450 = vrcp.pop %v434
    %v451 = vrcp.pop %v435
    %v452 = vrcp.pop %v436
    %v453 = vrcp.pop %v437
    %v454 = vrcp.pop %v438
    %v455 = vmul.f32 %v439, 1.0614054
    %v456 = vmul.f32 %v440, 1.0614054
    %v457 = vmul.f32 %v441, 1.0614054
    %v458 = vmul.f32 %v442, 1.0614054
    %v459 = vmul.f32 %v443, 1.0614054
    %v460 = vmul.f32 %v444, 1.0614054
    %v461 = vmul.f32 %v445, 1.0614054
    %v462 = vmul.f32 %v446, 1.0614054
    %v463 = vmul.f32 %v447, 1.0614054
    %v464 = vmul.f32 %v448, 1.0614054
    %v465 = vmul.f32 %v449, 1.0614054
    %v466 = vmul.f32 %v450, 1.0614054
    %v467 = vmul.f32 %v451, 1.0614054
    %v468 = vmul.f32 %v452, 1.0614054
    %v469 = vmul.f32 %v453, 1.0614054
    %v470 = vmul.f32 %v454, 1.0614054
    %v471 = vadd.f32 %v455, -1.4531521
    %v472 = vadd.f32 %v456, -1.4531521
    %v473 = vadd.f32 %v457, -1.4531521
    %v474 = vadd.f32 %v458, -1.4531521
    %v475 = vadd.f32 %v459, -1.4531521
    %v476 = vadd.f32 %v460, -1.4531521
    %v477 = vadd.f32 %v461, -1.4531521
    %v478 = vadd.f32 %v462, -1.4531521
    %v479 = vadd.f32 %v463, -1.4531521
    %v480 = vadd.f32 %v464, -1.4531521
    %v481 = vadd.f32 %v465, -1.4531521
    %v482 = vadd.f32 %v466, -1.4531521
    %v483 = vadd.f32 %v467, -1.4531521
    %v484 = vadd.f32 %v468, -1.4531521
    %v485 = vadd.f32 %v469, -1.4531521
    %v486 = vadd.f32 %v470, -1.4531521
    %v487 = vmul.f32 %v471, %v439
    %v488 = vmul.f32 %v472, %v440
    %v489 = vmul.f32 %v473, %v441
    %v490 = vmul.f32 %v474, %v442
    %v491 = vmul.f32 %v475, %v443
    %v492 = vmul.f32 %v476, %v444
    %v493 = vmul.f32 %v477, %v445
    %v494 = vmul.f32 %v478, %v446
    %v495 = vmul.f32 %v479, %v447
    %v496 = vmul.f32 %v480, %v448
    %v497 = vmul.f32 %v481, %v449
    %v498 = vmul.f32 %v482, %v450
    %v499 = vmul.f32 %v483, %v451
    %v500 = vmul.f32 %v484, %v452
    %v501 = vmul.f32 %v485, %v453
    %v502 = vmul.f32 %v486, %v454
    %v503 = vadd.f32 %v487, 1.4214138
    %v504 = vadd.f32 %v488, 1.4214138
    %v505 = vadd.f32 %v489, 1.4214138
    %v506 = vadd.f32 %v490, 1.4214138
    %v507 = vadd.f32 %v491, 1.4214138
    %v508 = vadd.f32 %v492, 1.4214138
    %v509 = vadd.f32 %v493, 1.4214138
    %v510 = vadd.f32 %v494, 1.4214138
    %v511 = vadd.f32 %v495, 1.4214138
    %v512 = vadd.f32 %v496, 1.4214138
    %v513 = vadd.f32 %v497, 1.4214138
    %v514 = vadd.f32 %v498, 1.4214138
    %v515 = vadd.f32 %v499, 1.4214138
    %v516 = vadd.f32 %v500, 1.4214138
    %v517 = vadd.f32 %v501, 1.4214138
    %v518 = vadd.f32 %v502, 1.4214138
    %v519 = vmul.f32 %v503, %v439
    %v520 = vmul.f32 %v504, %v440
    %v521 = vmul.f32 %v505, %v441
    %v522 = vmul.f32 %v506, %v442
    %v523 = vmul.f32 %v507, %v443
    %v524 = vmul.f32 %v508, %v444
    %v525 = vmul.f32 %v509, %v445
    %v526 = vmul.f32 %v510, %v446
    %v527 = vmul.f32 %v511, %v447
    %v528 = vmul.f32 %v512, %v448
    %v529 = vmul.f32 %v513, %v449
    %v530 = vmul.f32 %v514, %v450
    %v531 = vmul.f32 %v515, %v451
    %v532 = vmul.f32 %v516, %v452
    %v533 = vmul.f32 %v517, %v453
    %v534 = vmul.f32 %v518, %v454
    %v535 = vadd.f32 %v519, -0.28449672
    %v536 = vadd.f32 %v520, -0.28449672
    %v537 = vadd.f32 %v521, -0.28449672
    %v538 = vadd.f32 %v522, -0.28449672
    %v539 = vadd.f32 %v523, -0.28449672
    %v540 = vadd.f32 %v524, -0.28449672
    %v541 = vadd.f32 %v525, -0.28449672
    %v542 = vadd.f32 %v526, -0.28449672
    %v543 = vadd.f32 %v527, -0.28449672
    %v544 = vadd.f32 %v528, -0.28449672
    %v545 = vadd.f32 %v529, -0.28449672
    %v546 = vadd.f32 %v530, -0.28449672
    %v547 = vadd.f32 %v531, -0.28449672
    %v548 = vadd.f32 %v532, -0.28449672
    %v549 = vadd.f32 %v533, -0.28449672
    %v550 = vadd.f32 %v534, -0.28449672
    %v551 = vmul.f32 %v535, %v439
    %v552 = vmul.f32 %v536, %v440
    %v553 = vmul.f32 %v537, %v441
    %v554 = vmul.f32 %v538, %v442
    %v555 = vmul.f32 %v539, %v443
    %v556 = vmul.f32 %v540, %v444
    %v557 = vmul.f32 %v541, %v445
    %v558 = vmul.f32 %v542, %v446
    %v559 = vmul.f32 %v543, %v447
    %v560 = vmul.f32 %v544, %v448
    %v561 = vmul.f32 %v545, %v449
    %v562 = vmul.f32 %v546, %v450
    %v563 = vmul.f32 %v547, %v451
    %v564 = vmul.f32 %v548, %v452
    %v565 = vmul.f32 %v549, %v453
    %v566 = vmul.f32 %v550, %v454
    %v567 = vadd.f32 %v551, 0.2548296
    %v568 = vadd.f32 %v552, 0.2548296
    %v569 = vadd.f32 %v553, 0.2548296
    %v570 = vadd.f32 %v554, 0.2548296
    %v571 = vadd.f32 %v555, 0.2548296
    %v572 = vadd.f32 %v556, 0.2548296
    %v573 = vadd.f32 %v557, 0.2548296
    %v574 = vadd.f32 %v558, 0.2548296
    %v575 = vadd.f32 %v559, 0.2548296
    %v576 = vadd.f32 %v560, 0.2548296
    %v577 = vadd.f32 %v561, 0.2548296
    %v578 = vadd.f32 %v562, 0.2548296
    %v579 = vadd.f32 %v563, 0.2548296
    %v580 = vadd.f32 %v564, 0.2548296
    %v581 = vadd.f32 %v565, 0.2548296
    %v582 = vadd.f32 %v566, 0.2548296
    %v583 = vmul.f32 %v567, %v439
    %v584 = vmul.f32 %v568, %v440
    %v585 = vmul.f32 %v569, %v441
    %v586 = vmul.f32 %v570, %v442
    %v587 = vmul.f32 %v571, %v443
    %v588 = vmul.f32 %v572, %v444
    %v589 = vmul.f32 %v573, %v445
    %v590 = vmul.f32 %v574, %v446
    %v591 = vmul.f32 %v575, %v447
    %v592 = vmul.f32 %v576, %v448
    %v593 = vmul.f32 %v577, %v449
    %v594 = vmul.f32 %v578, %v450
    %v595 = vmul.f32 %v579, %v451
    %v596 = vmul.f32 %v580, %v452
    %v597 = vmul.f32 %v581, %v453
    %v598 = vmul.f32 %v582, %v454
    %v599 = vsub.f32 0.0, %v391
    %v600 = vsub.f32 0.0, %v392
    %v601 = vsub.f32 0.0, %v393
    %v602 = vsub.f32 0.0, %v394
    %v603 = vsub.f32 0.0, %v395
    %v604 = vsub.f32 0.0, %v396
    %v605 = vsub.f32 0.0, %v397
    %v606 = vsub.f32 0.0, %v398
    %v607 = vsub.f32 0.0, %v399
    %v608 = vsub.f32 0.0, %v400
    %v609 = vsub.f32 0.0, %v401
    %v610 = vsub.f32 0.0, %v402
    %v611 = vsub.f32 0.0, %v403
    %v612 = vsub.f32 0.0, %v404
    %v613 = vsub.f32 0.0, %v405
    %v614 = vsub.f32 0.0, %v406
    %v615 = vmul.f32 %v599, %v391
    %v616 = vmul.f32 %v600, %v392
    %v617 = vmul.f32 %v601, %v393
    %v618 = vmul.f32 %v602, %v394
    %v619 = vmul.f32 %v603, %v395
    %v620 = vmul.f32 %v604, %v396
    %v621 = vmul.f32 %v605, %v397
    %v622 = vmul.f32 %v606, %v398
    %v623 = vmul.f32 %v607, %v399
    %v624 = vmul.f32 %v608, %v400
    %v625 = vmul.f32 %v609, %v401
    %v626 = vmul.f32 %v610, %v402
    %v627 = vmul.f32 %v611, %v403
    %v628 = vmul.f32 %v612, %v404
    %v629 = vmul.f32 %v613, %v405
    %v630 = vmul.f32 %v614, %v406
    %v631 = vmul.f32 %v615, 1.442695
    %v632 = vpow.pop %v631
    %v633 = vmul.f32 %v616, 1.442695
    %v634 = vpow.pop %v633
    %v635 = vmul.f32 %v617, 1.442695
    %v636 = vpow.pop %v635
    %v637 = vmul.f32 %v618, 1.442695
    %v638 = vpow.pop %v637
    %v639 = vmul.f32 %v619, 1.442695
    %v640 = vpow.pop %v639
    %v641 = vmul.f32 %v620, 1.442695
    %v642 = vpow.pop %v641
    %v643 = vmul.f32 %v621, 1.442695
    %v644 = vpow.pop %v643
    %v645 = vmul.f32 %v622, 1.442695
    %v646 = vpow.pop %v645
    %v647 = vmul.f32 %v623, 1.442695
    %v648 = vpow.pop %v647
    %v649 = vmul.f32 %v624, 1.442695
    %v650 = vpow.pop %v649
    %v651 = vmul.f32 %v625, 1.442695
    %v652 = vpow.pop %v651
    %v653 = vmul.f32 %v626, 1.442695
    %v654 = vpow.pop %v653
    %v655 = vmul.f32 %v627, 1.442695
    %v656 = vpow.pop %v655
    %v657 = vmul.f32 %v628, 1.442695
    %v658 = vpow.pop %v657
    %v659 = vmul.f32 %v629, 1.442695
    %v660 = vpow.pop %v659
    %v661 = vmul.f32 %v630, 1.442695
    %v662 = vpow.pop %v661
    %v663 = vmul.f32 %v583, %v632
    %v664 = vmul.f32 %v584, %v634
    %v665 = vmul.f32 %v585, %v636
    %v666 = vmul.f32 %v586, %v638
    %v667 = vmul.f32 %v587, %v640
    %v668 = vmul.f32 %v588, %v642
    %v669 = vmul.f32 %v589, %v644
    %v670 = vmul.f32 %v590, %v646
    %v671 = vmul.f32 %v591, %v648
    %v672 = vmul.f32 %v592, %v650
    %v673 = vmul.f32 %v593, %v652
    %v674 = vmul.f32 %v594, %v654
    %v675 = vmul.f32 %v595, %v656
    %v676 = vmul.f32 %v596, %v658
    %v677 = vmul.f32 %v597, %v660
    %v678 = vmul.f32 %v598, %v662
    %v679 = vsub.f32 1.0, %v663
    %v680 = vsub.f32 1.0, %v664
    %v681 = vsub.f32 1.0, %v665
    %v682 = vsub.f32 1.0, %v666
    %v683 = vsub.f32 1.0, %v667
    %v684 = vsub.f32 1.0, %v668
    %v685 = vsub.f32 1.0, %v669
    %v686 = vsub.f32 1.0, %v670
    %v687 = vsub.f32 1.0, %v671
    %v688 = vsub.f32 1.0, %v672
    %v689 = vsub.f32 1.0, %v673
    %v690 = vsub.f32 1.0, %v674
    %v691 = vsub.f32 1.0, %v675
    %v692 = vsub.f32 1.0, %v676
    %v693 = vsub.f32 1.0, %v677
    %v694 = vsub.f32 1.0, %v678
    %v695 = vmul.f32 %v375, %v679
    %v696 = vmul.f32 %v376, %v680
    %v697 = vmul.f32 %v377, %v681
    %v698 = vmul.f32 %v378, %v682
    %v699 = vmul.f32 %v379, %v683
    %v700 = vmul.f32 %v380, %v684
    %v701 = vmul.f32 %v381, %v685
    %v702 = vmul.f32 %v382, %v686
    %v703 = vmul.f32 %v383, %v687
    %v704 = vmul.f32 %v384, %v688
    %v705 = vmul.f32 %v385, %v689
    %v706 = vmul.f32 %v386, %v690
    %v707 = vmul.f32 %v387, %v691
    %v708 = vmul.f32 %v388, %v692
    %v709 = vmul.f32 %v389, %v693
    %v710 = vmul.f32 %v390, %v694
    %v711 = vadd.f32 %v695, 1.0
    %v712 = vadd.f32 %v696, 1.0
    %v713 = vadd.f32 %v697, 1.0
    %v714 = vadd.f32 %v698, 1.0
    %v715 = vadd.f32 %v699, 1.0
    %v716 = vadd.f32 %v700, 1.0
    %v717 = vadd.f32 %v701, 1.0
    %v718 = vadd.f32 %v702, 1.0
    %v719 = vadd.f32 %v703, 1.0
    %v720 = vadd.f32 %v704, 1.0
    %v721 = vadd.f32 %v705, 1.0
    %v722 = vadd.f32 %v706, 1.0
    %v723 = vadd.f32 %v707, 1.0
    %v724 = vadd.f32 %v708, 1.0
    %v725 = vadd.f32 %v709, 1.0
    %v726 = vadd.f32 %v710, 1.0
    %v727 = vmul.f32 %v327, %v711
    %v728 = vmul.f32 %v328, %v712
    %v729 = vmul.f32 %v329, %v713
    %v730 = vmul.f32 %v330, %v714
    %v731 = vmul.f32 %v331, %v715
    %v732 = vmul.f32 %v332, %v716
    %v733 = vmul.f32 %v333, %v717
    %v734 = vmul.f32 %v334, %v718
    %v735 = vmul.f32 %v335, %v719
    %v736 = vmul.f32 %v336, %v720
    %v737 = vmul.f32 %v337, %v721
    %v738 = vmul.f32 %v338, %v722
    %v739 = vmul.f32 %v339, %v723
    %v740 = vmul.f32 %v340, %v724
    %v741 = vmul.f32 %v341, %v725
    %v742 = vmul.f32 %v342, %v726
    %743 = vst.msk [vmem:[%s3] sm:$0xff] %vm268, %v727
    %744 = vst.msk [vmem:[%s3 + $0x8] sm:$0xff] %vm268, %v728
    %745 = vst.msk [vmem:[%s3 + $0x10] sm:$0xff] %vm268, %v729
    %746 = vst.msk [vmem:[%s3 + $0x18] sm:$0xff] %vm268, %v730
    %747 = vst.msk [vmem:[%s3 + $0x20] sm:$0xff] %vm268, %v731
    %748 = vst.msk [vmem:[%s3 + $0x28] sm:$0xff] %vm268, %v732
    %749 = vst.msk [vmem:[%s3 + $0x30] sm:$0xff] %vm268, %v733
    %750 = vst.msk [vmem:[%s3 + $0x38] sm:$0xff] %vm268, %v734
    %751 = vst.msk [vmem:[%s3 + $0x40] sm:$0xff] %vm268, %v735
    %752 = vst.msk [vmem:[%s3 + $0x48] sm:$0xff] %vm268, %v736
    %753 = vst.msk [vmem:[%s3 + $0x50] sm:$0xff] %vm268, %v737
    %754 = vst.msk [vmem:[%s3 + $0x58] sm:$0xff] %vm268, %v738
    %755 = vst.msk [vmem:[%s3 + $0x60] sm:$0xff] %vm268, %v739
    %756 = vst.msk [vmem:[%s3 + $0x68] sm:$0xff] %vm268, %v740
    %757 = vst.msk [vmem:[%s3 + $0x70] sm:$0xff] %vm268, %v741
    %758 = vst.msk [vmem:[%s3 + $0x78] sm:$0xff] %vm268, %v742
  $region21: #{encoder_forward.10} parent=0 // pred_fallthru
    _
  // Predicated region
  $region22: #{encoder_forward.10} parent=0 // pred_check
    _
  $region23: #{encoder_forward.10} parent=0 // pred_check_branch
    %760 = sbr.rel (0) target = $region25
  $region24: #{encoder_forward.10} parent=0 // pred_region
    _
  $region25: #{encoder_forward.10} parent=0 // pred_fallthru
    _
  // Predicated region
  $region26: #{encoder_forward.10} parent=0 // pred_check
    _
  $region27: #{encoder_forward.10} parent=0 // pred_check_branch
    %762 = sbr.rel (0) target = $region29
  $region28: #{encoder_forward.10} parent=0 // pred_region
    _
  $region29: #{encoder_forward.10} parent=0 // pred_fallthru
    _

// kernel: encoder_forward.11
$region0: #{encoder_forward.11}
  #allocation0 [shape = 'u32[]', space=smem, size = 0x4, offset = 0x4, fixed_abs, tag = 'smem constant byte address 0x4 - core index']
  #allocation1 [shape = 'u32[144,128]{1,0:T(1,128)}', space=vmem, size = 0x12000, scoped, tag = 'internal scratch']
  #allocation2 [shape = 'f32[128,8]{1,0:T(8,128)}', space=vmem, size = 0x10000, scoped, tag = 'scratch operand']
  %s0 = inlined_call_operand.vmem [shape: bf16[128,72], index: 0, kind: input, shape index: {}]
  %s1 = inlined_call_operand.vmem [shape: bf16[72,8], index: 1, kind: input, shape index: {}]
  %s2 = inlined_call_operand.vmem [shape: f32[1,8], index: 2, kind: input, shape index: {}]
  %s3 = inlined_call_operand.vmem [shape: f32[128,8], index: 3, kind: output, shape index: {}]
  %s4 = sld [smem:[#allocation0]]
  $region30: #{encoder_forward.11} parent=0
    _
  %s6 = ssub.s32 1, %s4
  %s7 = scalar_select 0, %s6, %s4
  // Predicated region
  $region2: #{encoder_forward.11} parent=0 // pred_check
    _
  $region3: #{encoder_forward.11} parent=0 // pred_check_branch
    %9 = sbr.rel (0) target = $region5
  $region4: #{encoder_forward.11} parent=0 // pred_region
    _
  $region5: #{encoder_forward.11} parent=0 // pred_fallthru
    _
  // Predicated region
  $region6: #{encoder_forward.11} parent=0 // pred_check
    _
  $region7: #{encoder_forward.11} parent=0 // pred_check_branch
    %11 = sbr.rel (0) target = $region9
  $region8: #{encoder_forward.11} parent=0 // pred_region
    _
  $region9: #{encoder_forward.11} parent=0 // pred_fallthru
    _
  // Predicated region
  $region10: #{encoder_forward.11} parent=0 // pred_check
    _
  $region11: #{encoder_forward.11} parent=0 // pred_check_branch
    %13 = sbr.rel (0) target = $region13
  $region12: #{encoder_forward.11} parent=0 // pred_region
    _
  $region13: #{encoder_forward.11} parent=0 // pred_fallthru
    _
  %p15 = scmp.eq.s32.totalorder 0, 0
  // Predicated region
  $region14: #{encoder_forward.11} parent=0 // pred_check
    %p16 = pneg %p15
  $region15: #{encoder_forward.11} parent=0 // pred_check_branch
    %18 = sbr.rel (%p16) target = $region17
  $region16: #{encoder_forward.11} parent=0 // pred_region
    %vm19 = vcmask 64512
    %20 = vst.msk [vmem:[#allocation2] sm:$0xff] %vm19, 0.0
    %21 = vst.msk [vmem:[#allocation2 + $0x8] sm:$0xff] %vm19, 0.0
    %22 = vst.msk [vmem:[#allocation2 + $0x10] sm:$0xff] %vm19, 0.0
    %23 = vst.msk [vmem:[#allocation2 + $0x18] sm:$0xff] %vm19, 0.0
    %24 = vst.msk [vmem:[#allocation2 + $0x20] sm:$0xff] %vm19, 0.0
    %25 = vst.msk [vmem:[#allocation2 + $0x28] sm:$0xff] %vm19, 0.0
    %26 = vst.msk [vmem:[#allocation2 + $0x30] sm:$0xff] %vm19, 0.0
    %27 = vst.msk [vmem:[#allocation2 + $0x38] sm:$0xff] %vm19, 0.0
    %28 = vst.msk [vmem:[#allocation2 + $0x40] sm:$0xff] %vm19, 0.0
    %29 = vst.msk [vmem:[#allocation2 + $0x48] sm:$0xff] %vm19, 0.0
    %30 = vst.msk [vmem:[#allocation2 + $0x50] sm:$0xff] %vm19, 0.0
    %31 = vst.msk [vmem:[#allocation2 + $0x58] sm:$0xff] %vm19, 0.0
    %32 = vst.msk [vmem:[#allocation2 + $0x60] sm:$0xff] %vm19, 0.0
    %33 = vst.msk [vmem:[#allocation2 + $0x68] sm:$0xff] %vm19, 0.0
    %34 = vst.msk [vmem:[#allocation2 + $0x70] sm:$0xff] %vm19, 0.0
    %35 = vst.msk [vmem:[#allocation2 + $0x78] sm:$0xff] %vm19, 0.0
  $region17: #{encoder_forward.11} parent=0 // pred_fallthru
    _
  %v36 = vld [vmem:[#allocation2] sm:$0xff]
  %v37 = vld [vmem:[#allocation2 + $0x8] sm:$0xff]
  %v38 = vld [vmem:[#allocation2 + $0x10] sm:$0xff]
  %v39 = vld [vmem:[#allocation2 + $0x18] sm:$0xff]
  %v40 = vld [vmem:[#allocation2 + $0x20] sm:$0xff]
  %v41 = vld [vmem:[#allocation2 + $0x28] sm:$0xff]
  %v42 = vld [vmem:[#allocation2 + $0x30] sm:$0xff]
  %v43 = vld [vmem:[#allocation2 + $0x38] sm:$0xff]
  %v44 = vld [vmem:[#allocation2 + $0x40] sm:$0xff]
  %v45 = vld [vmem:[#allocation2 + $0x48] sm:$0xff]
  %v46 = vld [vmem:[#allocation2 + $0x50] sm:$0xff]
  %v47 = vld [vmem:[#allocation2 + $0x58] sm:$0xff]
  %v48 = vld [vmem:[#allocation2 + $0x60] sm:$0xff]
  %v49 = vld [vmem:[#allocation2 + $0x68] sm:$0xff]
  %v50 = vld [vmem:[#allocation2 + $0x70] sm:$0xff]
  %v51 = vld [vmem:[#allocation2 + $0x78] sm:$0xff]
  %v52 = vld [vmem:[%s0] sm:$0xf]
  %v53 = vld [vmem:[%s0 + $0x4] sm:$0xf]
  %v54 = vld [vmem:[%s0 + $0x8] sm:$0xf]
  %v55 = vld [vmem:[%s0 + $0xc] sm:$0xf]
  %v56 = vld [vmem:[%s0 + $0x10] sm:$0xf]
  %v57 = vld [vmem:[%s0 + $0x14] sm:$0xf]
  %v58 = vld [vmem:[%s0 + $0x18] sm:$0xf]
  %v59 = vld [vmem:[%s0 + $0x1c] sm:$0xf]
  %v60 = vld [vmem:[%s0 + $0x20] sm:$0xf]
  %v61 = vld [vmem:[%s0 + $0x24] sm:$0xf]
  %v62 = vld [vmem:[%s0 + $0x28] sm:$0xf]
  %v63 = vld [vmem:[%s0 + $0x2c] sm:$0xf]
  %v64 = vld [vmem:[%s0 + $0x30] sm:$0xf]
  %v65 = vld [vmem:[%s0 + $0x34] sm:$0xf]
  %v66 = vld [vmem:[%s0 + $0x38] sm:$0xf]
  %v67 = vld [vmem:[%s0 + $0x3c] sm:$0xf]
  %v68 = vld [vmem:[%s1] sm:$0xf]
  %v69 = vld [vmem:[%s1 + $0x4] sm:$0xf]
  %v70 = vld [vmem:[%s1 + $0x8] sm:$0xf]
  %v71 = vld [vmem:[%s1 + $0xc] sm:$0xf]
  %v72 = vld [vmem:[%s1 + $0x10] sm:$0xf]
  %v73 = vld [vmem:[%s1 + $0x14] sm:$0xf]
  %v74 = vld [vmem:[%s1 + $0x18] sm:$0xf]
  %v75 = vld [vmem:[%s1 + $0x1c] sm:$0xf]
  %v76 = vld [vmem:[%s1 + $0x20] sm:$0xf]
  %v93 = vunpack.c.l.b16 %v52
  %v94 = vunpack.c.l.b16 %v53
  %v95 = vunpack.c.l.b16 %v54
  %v96 = vunpack.c.l.b16 %v55
  %v97 = vunpack.c.l.b16 %v56
  %v98 = vunpack.c.l.b16 %v57
  %v99 = vunpack.c.l.b16 %v58
  %v100 = vunpack.c.l.b16 %v59
  %v101 = vunpack.c.l.b16 %v60
  %v102 = vunpack.c.l.b16 %v61
  %v103 = vunpack.c.l.b16 %v62
  %v104 = vunpack.c.l.b16 %v63
  %v105 = vunpack.c.l.b16 %v64
  %v106 = vunpack.c.l.b16 %v65
  %v107 = vunpack.c.l.b16 %v66
  %v108 = vunpack.c.l.b16 %v67
  %v109 = vpack.c.b16 %v94, %v93
  %v110 = vpack.c.b16 %v96, %v95
  %v111 = vpack.c.b16 %v98, %v97
  %v112 = vpack.c.b16 %v100, %v99
  %v113 = vpack.c.b16 %v102, %v101
  %v114 = vpack.c.b16 %v104, %v103
  %v115 = vpack.c.b16 %v106, %v105
  %v116 = vpack.c.b16 %v108, %v107
  %v126 = vunpack.c.l.b16 %v68
  %v127 = vunpack.c.l.b16 %v69
  %v128 = vunpack.c.l.b16 %v70
  %v129 = vunpack.c.l.b16 %v71
  %v130 = vunpack.c.l.b16 %v72
  %v131 = vunpack.c.l.b16 %v73
  %v132 = vunpack.c.l.b16 %v74
  %v133 = vunpack.c.l.b16 %v75
  %v134 = vunpack.c.l.b16 %v76
  %v135 = vpack.c.b16 %v127, %v126
  %v136 = vpack.c.b16 %v129, %v128
  %v137 = vpack.c.b16 %v131, %v130
  %v138 = vpack.c.b16 %v133, %v132
  %v139 = vpack.c.b16 %v134, %v134
  %vm144 = vcmask 588800
  %v146 = vsel %vm144, %v109, 0
  %v149 = vsel %vm144, %v110, 0
  %v152 = vsel %vm144, %v111, 0
  %v155 = vsel %vm144, %v112, 0
  %v158 = vsel %vm144, %v113, 0
  %v161 = vsel %vm144, %v114, 0
  %v164 = vsel %vm144, %v115, 0
  %v167 = vsel %vm144, %v116, 0
  %vm169 = vcmask 1043456
  %v171 = vsel %vm169, %v139, 0
  %173 = vmatprep.subr.bf16.mxu0 0
  %174 = vmatpush1.bf16.msra.mxu0 %v135
  %175 = vmatprep.subr.bf16.mxu0 0
  %176 = vmatpush1.bf16.msra.mxu0 %v136
  %177 = vmatprep.subr.bf16.mxu0 0
  %178 = vmatpush1.bf16.msra.mxu0 %v137
  %179 = vmatprep.subr.bf16.mxu0 0
  %180 = vmatpush1.bf16.msra.mxu0 %v138
  %181 = vmatprep.subr.bf16.mxu0 0
  %182 = vmatpush1.bf16.msra.mxu0 %v171
  %183 = vmatprep.subr.bf16.mxu0 0
  %184 = vmatpush1.bf16.msra.mxu0 0
  %185 = vmatprep.subr.bf16.mxu0 0
  %186 = vmatpush1.bf16.msra.mxu0 0
  %187 = vmatprep.subr.bf16.mxu0 0
  %188 = vmatpush1.bf16.msra.mxu0 0
  %189 = vmatprep.subr.bf16.mxu0 0
  %190 = vmatpush1.bf16.msra.mxu0 0
  %191 = vmatprep.subr.bf16.mxu0 0
  %192 = vmatpush1.bf16.msra.mxu0 0
  %193 = vmatprep.subr.bf16.mxu0 0
  %194 = vmatpush1.bf16.msra.mxu0 0
  %195 = vmatprep.subr.bf16.mxu0 0
  %196 = vmatpush1.bf16.msra.mxu0 0
  %197 = vmatprep.subr.bf16.mxu0 0
  %198 = vmatpush1.bf16.msra.mxu0 0
  %199 = vmatprep.subr.bf16.mxu0 0
  %200 = vmatpush1.bf16.msra.mxu0 0
  %201 = vmatprep.subr.bf16.mxu0 0
  %202 = vmatpush1.bf16.msra.mxu0 0
  %203 = vmatprep.subr.bf16.mxu0 0
  %204 = vmatpush1.bf16.msra.mxu0 0
  %205 = vmatprep.mubr.bf16.mxu0 0
  %206 = vmatmul.mubr.bf16.gmra.mrb[0].mxu0 %v146
  %v207 = vpop.f32.mrb[0].mxu0
  %v208 = vadd.f32 0.0, %v207
  %v209 = vpop.f32.mrb[0].mxu0
  %v210 = vpop.f32.mrb[0].mxu0
  %v211 = vadd.f32 0.0, %v210
  %v212 = vpop.f32.mrb[0].mxu0
  %213 = vmatprep.mubr.bf16.mxu0 0
  %214 = vmatmul.mubr.bf16.gmra.mrb[0].mxu0 %v149
  %v215 = vpop.f32.mrb[0].mxu0
  %v216 = vadd.f32 0.0, %v215
  %v217 = vpop.f32.mrb[0].mxu0
  %v218 = vpop.f32.mrb[0].mxu0
  %v219 = vadd.f32 0.0, %v218
  %v220 = vpop.f32.mrb[0].mxu0
  %221 = vmatprep.mubr.bf16.mxu0 0
  %222 = vmatmul.mubr.bf16.gmra.mrb[0].mxu0 %v152
  %v223 = vpop.f32.mrb[0].mxu0
  %v224 = vadd.f32 0.0, %v223
  %v225 = vpop.f32.mrb[0].mxu0
  %v226 = vpop.f32.mrb[0].mxu0
  %v227 = vadd.f32 0.0, %v226
  %v228 = vpop.f32.mrb[0].mxu0
  %229 = vmatprep.mubr.bf16.mxu0 0
  %230 = vmatmul.mubr.bf16.gmra.mrb[0].mxu0 %v155
  %v231 = vpop.f32.mrb[0].mxu0
  %v232 = vadd.f32 0.0, %v231
  %v233 = vpop.f32.mrb[0].mxu0
  %v234 = vpop.f32.mrb[0].mxu0
  %v235 = vadd.f32 0.0, %v234
  %v236 = vpop.f32.mrb[0].mxu0
  %237 = vmatprep.mubr.bf16.mxu0 0
  %238 = vmatmul.mubr.bf16.gmra.mrb[0].mxu0 %v158
  %v239 = vpop.f32.mrb[0].mxu0
  %v240 = vadd.f32 0.0, %v239
  %v241 = vpop.f32.mrb[0].mxu0
  %v242 = vpop.f32.mrb[0].mxu0
  %v243 = vadd.f32 0.0, %v242
  %v244 = vpop.f32.mrb[0].mxu0
  %245 = vmatprep.mubr.bf16.mxu0 0
  %246 = vmatmul.mubr.bf16.gmra.mrb[0].mxu0 %v161
  %v247 = vpop.f32.mrb[0].mxu0
  %v248 = vadd.f32 0.0, %v247
  %v249 = vpop.f32.mrb[0].mxu0
  %v250 = vpop.f32.mrb[0].mxu0
  %v251 = vadd.f32 0.0, %v250
  %v252 = vpop.f32.mrb[0].mxu0
  %253 = vmatprep.mubr.bf16.mxu0 0
  %254 = vmatmul.mubr.bf16.gmra.mrb[0].mxu0 %v164
  %v255 = vpop.f32.mrb[0].mxu0
  %v256 = vadd.f32 0.0, %v255
  %v257 = vpop.f32.mrb[0].mxu0
  %v258 = vpop.f32.mrb[0].mxu0
  %v259 = vadd.f32 0.0, %v258
  %v260 = vpop.f32.mrb[0].mxu0
  %261 = vmatprep.mubr.bf16.mxu0 0
  %262 = vmatmul.mubr.bf16.gmra.mrb[0].mxu0 %v167
  %v263 = vpop.f32.mrb[0].mxu0
  %v264 = vadd.f32 0.0, %v263
  %v265 = vpop.f32.mrb[0].mxu0
  %v266 = vpop.f32.mrb[0].mxu0
  %v267 = vadd.f32 0.0, %v266
  %v268 = vpop.f32.mrb[0].mxu0
  %269 = vdwg.mxu0
  %v270 = vadd.f32 %v36, %v208
  %v271 = vadd.f32 %v37, %v211
  %v272 = vadd.f32 %v38, %v216
  %v273 = vadd.f32 %v39, %v219
  %v274 = vadd.f32 %v40, %v224
  %v275 = vadd.f32 %v41, %v227
  %v276 = vadd.f32 %v42, %v232
  %v277 = vadd.f32 %v43, %v235
  %v278 = vadd.f32 %v44, %v240
  %v279 = vadd.f32 %v45, %v243
  %v280 = vadd.f32 %v46, %v248
  %v281 = vadd.f32 %v47, %v251
  %v282 = vadd.f32 %v48, %v256
  %v283 = vadd.f32 %v49, %v259
  %v284 = vadd.f32 %v50, %v264
  %v285 = vadd.f32 %v51, %v267
  %vm286 = vcmask 64512
  %287 = vst.msk [vmem:[#allocation2] sm:$0xff] %vm286, %v270
  %288 = vst.msk [vmem:[#allocation2 + $0x8] sm:$0xff] %vm286, %v271
  %289 = vst.msk [vmem:[#allocation2 + $0x10] sm:$0xff] %vm286, %v272
  %290 = vst.msk [vmem:[#allocation2 + $0x18] sm:$0xff] %vm286, %v273
  %291 = vst.msk [vmem:[#allocation2 + $0x20] sm:$0xff] %vm286, %v274
  %292 = vst.msk [vmem:[#allocation2 + $0x28] sm:$0xff] %vm286, %v275
  %293 = vst.msk [vmem:[#allocation2 + $0x30] sm:$0xff] %vm286, %v276
  %294 = vst.msk [vmem:[#allocation2 + $0x38] sm:$0xff] %vm286, %v277
  %295 = vst.msk [vmem:[#allocation2 + $0x40] sm:$0xff] %vm286, %v278
  %296 = vst.msk [vmem:[#allocation2 + $0x48] sm:$0xff] %vm286, %v279
  %297 = vst.msk [vmem:[#allocation2 + $0x50] sm:$0xff] %vm286, %v280
  %298 = vst.msk [vmem:[#allocation2 + $0x58] sm:$0xff] %vm286, %v281
  %299 = vst.msk [vmem:[#allocation2 + $0x60] sm:$0xff] %vm286, %v282
  %300 = vst.msk [vmem:[#allocation2 + $0x68] sm:$0xff] %vm286, %v283
  %301 = vst.msk [vmem:[#allocation2 + $0x70] sm:$0xff] %vm286, %v284
  %302 = vst.msk [vmem:[#allocation2 + $0x78] sm:$0xff] %vm286, %v285
  // Predicated region
  $region18: #{encoder_forward.11} parent=0 // pred_check
    %p303 = pneg %p15
  $region19: #{encoder_forward.11} parent=0 // pred_check_branch
    %305 = sbr.rel (%p303) target = $region21
  $region20: #{encoder_forward.11} parent=0 // pred_region
    %v306 = vld [vmem:[#allocation2] sm:$0xff]
    %v307 = vld [vmem:[#allocation2 + $0x8] sm:$0xff]
    %v308 = vld [vmem:[#allocation2 + $0x10] sm:$0xff]
    %v309 = vld [vmem:[#allocation2 + $0x18] sm:$0xff]
    %v310 = vld [vmem:[#allocation2 + $0x20] sm:$0xff]
    %v311 = vld [vmem:[#allocation2 + $0x28] sm:$0xff]
    %v312 = vld [vmem:[#allocation2 + $0x30] sm:$0xff]
    %v313 = vld [vmem:[#allocation2 + $0x38] sm:$0xff]
    %v314 = vld [vmem:[#allocation2 + $0x40] sm:$0xff]
    %v315 = vld [vmem:[#allocation2 + $0x48] sm:$0xff]
    %v316 = vld [vmem:[#allocation2 + $0x50] sm:$0xff]
    %v317 = vld [vmem:[#allocation2 + $0x58] sm:$0xff]
    %v318 = vld [vmem:[#allocation2 + $0x60] sm:$0xff]
    %v319 = vld [vmem:[#allocation2 + $0x68] sm:$0xff]
    %v320 = vld [vmem:[#allocation2 + $0x70] sm:$0xff]
    %v321 = vld [vmem:[#allocation2 + $0x78] sm:$0xff]
    %v322 = vld [vmem:[%s2] sm:$0x1]
    %v324 = vlaneseq
    %v325 = vshrl.u32 %v324, 7
    %v326 = vsub.s32 0, %v325
    %v327 = vrot.slane %v322, %v326
    %v329 = vadd.f32 %v306, %v327
    %v330 = vadd.f32 %v307, %v327
    %v331 = vadd.f32 %v308, %v327
    %v332 = vadd.f32 %v309, %v327
    %v333 = vadd.f32 %v310, %v327
    %v334 = vadd.f32 %v311, %v327
    %v335 = vadd.f32 %v312, %v327
    %v336 = vadd.f32 %v313, %v327
    %v337 = vadd.f32 %v314, %v327
    %v338 = vadd.f32 %v315, %v327
    %v339 = vadd.f32 %v316, %v327
    %v340 = vadd.f32 %v317, %v327
    %v341 = vadd.f32 %v318, %v327
    %v342 = vadd.f32 %v319, %v327
    %v343 = vadd.f32 %v320, %v327
    %v344 = vadd.f32 %v321, %v327
    %v345 = vmul.f32 %v329, 0.5
    %v346 = vmul.f32 %v330, 0.5
    %v347 = vmul.f32 %v331, 0.5
    %v348 = vmul.f32 %v332, 0.5
    %v349 = vmul.f32 %v333, 0.5
    %v350 = vmul.f32 %v334, 0.5
    %v351 = vmul.f32 %v335, 0.5
    %v352 = vmul.f32 %v336, 0.5
    %v353 = vmul.f32 %v337, 0.5
    %v354 = vmul.f32 %v338, 0.5
    %v355 = vmul.f32 %v339, 0.5
    %v356 = vmul.f32 %v340, 0.5
    %v357 = vmul.f32 %v341, 0.5
    %v358 = vmul.f32 %v342, 0.5
    %v359 = vmul.f32 %v343, 0.5
    %v360 = vmul.f32 %v344, 0.5
    %v361 = vmul.f32 %v329, 0.70710677
    %v362 = vmul.f32 %v330, 0.70710677
    %v363 = vmul.f32 %v331, 0.70710677
    %v364 = vmul.f32 %v332, 0.70710677
    %v365 = vmul.f32 %v333, 0.70710677
    %v366 = vmul.f32 %v334, 0.70710677
    %v367 = vmul.f32 %v335, 0.70710677
    %v368 = vmul.f32 %v336, 0.70710677
    %v369 = vmul.f32 %v337, 0.70710677
    %v370 = vmul.f32 %v338, 0.70710677
    %v371 = vmul.f32 %v339, 0.70710677
    %v372 = vmul.f32 %v340, 0.70710677
    %v373 = vmul.f32 %v341, 0.70710677
    %v374 = vmul.f32 %v342, 0.70710677
    %v375 = vmul.f32 %v343, 0.70710677
    %v376 = vmul.f32 %v344, 0.70710677
    %vm377 = vcmp.ge.f32.partialorder %v361, 0.0
    %vm378 = vcmp.ge.f32.partialorder %v362, 0.0
    %vm379 = vcmp.ge.f32.partialorder %v363, 0.0
    %vm380 = vcmp.ge.f32.partialorder %v364, 0.0
    %vm381 = vcmp.ge.f32.partialorder %v365, 0.0
    %vm382 = vcmp.ge.f32.partialorder %v366, 0.0
    %vm383 = vcmp.ge.f32.partialorder %v367, 0.0
    %vm384 = vcmp.ge.f32.partialorder %v368, 0.0
    %vm385 = vcmp.ge.f32.partialorder %v369, 0.0
    %vm386 = vcmp.ge.f32.partialorder %v370, 0.0
    %vm387 = vcmp.ge.f32.partialorder %v371, 0.0
    %vm388 = vcmp.ge.f32.partialorder %v372, 0.0
    %vm389 = vcmp.ge.f32.partialorder %v373, 0.0
    %vm390 = vcmp.ge.f32.partialorder %v374, 0.0
    %vm391 = vcmp.ge.f32.partialorder %v375, 0.0
    %vm392 = vcmp.ge.f32.partialorder %v376, 0.0
    %v393 = vsel %vm377, 1.0, -1.0
    %v394 = vsel %vm378, 1.0, -1.0
    %v395 = vsel %vm379, 1.0, -1.0
    %v396 = vsel %vm380, 1.0, -1.0
    %v397 = vsel %vm381, 1.0, -1.0
    %v398 = vsel %vm382, 1.0, -1.0
    %v399 = vsel %vm383, 1.0, -1.0
    %v400 = vsel %vm384, 1.0, -1.0
    %v401 = vsel %vm385, 1.0, -1.0
    %v402 = vsel %vm386, 1.0, -1.0
    %v403 = vsel %vm387, 1.0, -1.0
    %v404 = vsel %vm388, 1.0, -1.0
    %v405 = vsel %vm389, 1.0, -1.0
    %v406 = vsel %vm390, 1.0, -1.0
    %v407 = vsel %vm391, 1.0, -1.0
    %v408 = vsel %vm392, 1.0, -1.0
    %v409 = vand.u32 2147483647, %v361
    %v410 = vand.u32 2147483647, %v362
    %v411 = vand.u32 2147483647, %v363
    %v412 = vand.u32 2147483647, %v364
    %v413 = vand.u32 2147483647, %v365
    %v414 = vand.u32 2147483647, %v366
    %v415 = vand.u32 2147483647, %v367
    %v416 = vand.u32 2147483647, %v368
    %v417 = vand.u32 2147483647, %v369
    %v418 = vand.u32 2147483647, %v370
    %v419 = vand.u32 2147483647, %v371
    %v420 = vand.u32 2147483647, %v372
    %v421 = vand.u32 2147483647, %v373
    %v422 = vand.u32 2147483647, %v374
    %v423 = vand.u32 2147483647, %v375
    %v424 = vand.u32 2147483647, %v376
    %v425 = vmul.f32 %v409, 0.3275911
    %v426 = vmul.f32 %v410, 0.3275911
    %v427 = vmul.f32 %v411, 0.3275911
    %v428 = vmul.f32 %v412, 0.3275911
    %v429 = vmul.f32 %v413, 0.3275911
    %v430 = vmul.f32 %v414, 0.3275911
    %v431 = vmul.f32 %v415, 0.3275911
    %v432 = vmul.f32 %v416, 0.3275911
    %v433 = vmul.f32 %v417, 0.3275911
    %v434 = vmul.f32 %v418, 0.3275911
    %v435 = vmul.f32 %v419, 0.3275911
    %v436 = vmul.f32 %v420, 0.3275911
    %v437 = vmul.f32 %v421, 0.3275911
    %v438 = vmul.f32 %v422, 0.3275911
    %v439 = vmul.f32 %v423, 0.3275911
    %v440 = vmul.f32 %v424, 0.3275911
    %v441 = vadd.f32 %v425, 1.0
    %v442 = vadd.f32 %v426, 1.0
    %v443 = vadd.f32 %v427, 1.0
    %v444 = vadd.f32 %v428, 1.0
    %v445 = vadd.f32 %v429, 1.0
    %v446 = vadd.f32 %v430, 1.0
    %v447 = vadd.f32 %v431, 1.0
    %v448 = vadd.f32 %v432, 1.0
    %v449 = vadd.f32 %v433, 1.0
    %v450 = vadd.f32 %v434, 1.0
    %v451 = vadd.f32 %v435, 1.0
    %v452 = vadd.f32 %v436, 1.0
    %v453 = vadd.f32 %v437, 1.0
    %v454 = vadd.f32 %v438, 1.0
    %v455 = vadd.f32 %v439, 1.0
    %v456 = vadd.f32 %v440, 1.0
    %v457 = vrcp.pop %v441
    %v458 = vrcp.pop %v442
    %v459 = vrcp.pop %v443
    %v460 = vrcp.pop %v444
    %v461 = vrcp.pop %v445
    %v462 = vrcp.pop %v446
    %v463 = vrcp.pop %v447
    %v464 = vrcp.pop %v448
    %v465 = vrcp.pop %v449
    %v466 = vrcp.pop %v450
    %v467 = vrcp.pop %v451
    %v468 = vrcp.pop %v452
    %v469 = vrcp.pop %v453
    %v470 = vrcp.pop %v454
    %v471 = vrcp.pop %v455
    %v472 = vrcp.pop %v456
    %v473 = vmul.f32 %v457, 1.0614054
    %v474 = vmul.f32 %v458, 1.0614054
    %v475 = vmul.f32 %v459, 1.0614054
    %v476 = vmul.f32 %v460, 1.0614054
    %v477 = vmul.f32 %v461, 1.0614054
    %v478 = vmul.f32 %v462, 1.0614054
    %v479 = vmul.f32 %v463, 1.0614054
    %v480 = vmul.f32 %v464, 1.0614054
    %v481 = vmul.f32 %v465, 1.0614054
    %v482 = vmul.f32 %v466, 1.0614054
    %v483 = vmul.f32 %v467, 1.0614054
    %v484 = vmul.f32 %v468, 1.0614054
    %v485 = vmul.f32 %v469, 1.0614054
    %v486 = vmul.f32 %v470, 1.0614054
    %v487 = vmul.f32 %v471, 1.0614054
    %v488 = vmul.f32 %v472, 1.0614054
    %v489 = vadd.f32 %v473, -1.4531521
    %v490 = vadd.f32 %v474, -1.4531521
    %v491 = vadd.f32 %v475, -1.4531521
    %v492 = vadd.f32 %v476, -1.4531521
    %v493 = vadd.f32 %v477, -1.4531521
    %v494 = vadd.f32 %v478, -1.4531521
    %v495 = vadd.f32 %v479, -1.4531521
    %v496 = vadd.f32 %v480, -1.4531521
    %v497 = vadd.f32 %v481, -1.4531521
    %v498 = vadd.f32 %v482, -1.4531521
    %v499 = vadd.f32 %v483, -1.4531521
    %v500 = vadd.f32 %v484, -1.4531521
    %v501 = vadd.f32 %v485, -1.4531521
    %v502 = vadd.f32 %v486, -1.4531521
    %v503 = vadd.f32 %v487, -1.4531521
    %v504 = vadd.f32 %v488, -1.4531521
    %v505 = vmul.f32 %v489, %v457
    %v506 = vmul.f32 %v490, %v458
    %v507 = vmul.f32 %v491, %v459
    %v508 = vmul.f32 %v492, %v460
    %v509 = vmul.f32 %v493, %v461
    %v510 = vmul.f32 %v494, %v462
    %v511 = vmul.f32 %v495, %v463
    %v512 = vmul.f32 %v496, %v464
    %v513 = vmul.f32 %v497, %v465
    %v514 = vmul.f32 %v498, %v466
    %v515 = vmul.f32 %v499, %v467
    %v516 = vmul.f32 %v500, %v468
    %v517 = vmul.f32 %v501, %v469
    %v518 = vmul.f32 %v502, %v470
    %v519 = vmul.f32 %v503, %v471
    %v520 = vmul.f32 %v504, %v472
    %v521 = vadd.f32 %v505, 1.4214138
    %v522 = vadd.f32 %v506, 1.4214138
    %v523 = vadd.f32 %v507, 1.4214138
    %v524 = vadd.f32 %v508, 1.4214138
    %v525 = vadd.f32 %v509, 1.4214138
    %v526 = vadd.f32 %v510, 1.4214138
    %v527 = vadd.f32 %v511, 1.4214138
    %v528 = vadd.f32 %v512, 1.4214138
    %v529 = vadd.f32 %v513, 1.4214138
    %v530 = vadd.f32 %v514, 1.4214138
    %v531 = vadd.f32 %v515, 1.4214138
    %v532 = vadd.f32 %v516, 1.4214138
    %v533 = vadd.f32 %v517, 1.4214138
    %v534 = vadd.f32 %v518, 1.4214138
    %v535 = vadd.f32 %v519, 1.4214138
    %v536 = vadd.f32 %v520, 1.4214138
    %v537 = vmul.f32 %v521, %v457
    %v538 = vmul.f32 %v522, %v458
    %v539 = vmul.f32 %v523, %v459
    %v540 = vmul.f32 %v524, %v460
    %v541 = vmul.f32 %v525, %v461
    %v542 = vmul.f32 %v526, %v462
    %v543 = vmul.f32 %v527, %v463
    %v544 = vmul.f32 %v528, %v464
    %v545 = vmul.f32 %v529, %v465
    %v546 = vmul.f32 %v530, %v466
    %v547 = vmul.f32 %v531, %v467
    %v548 = vmul.f32 %v532, %v468
    %v549 = vmul.f32 %v533, %v469
    %v550 = vmul.f32 %v534, %v470
    %v551 = vmul.f32 %v535, %v471
    %v552 = vmul.f32 %v536, %v472
    %v553 = vadd.f32 %v537, -0.28449672
    %v554 = vadd.f32 %v538, -0.28449672
    %v555 = vadd.f32 %v539, -0.28449672
    %v556 = vadd.f32 %v540, -0.28449672
    %v557 = vadd.f32 %v541, -0.28449672
    %v558 = vadd.f32 %v542, -0.28449672
    %v559 = vadd.f32 %v543, -0.28449672
    %v560 = vadd.f32 %v544, -0.28449672
    %v561 = vadd.f32 %v545, -0.28449672
    %v562 = vadd.f32 %v546, -0.28449672
    %v563 = vadd.f32 %v547, -0.28449672
    %v564 = vadd.f32 %v548, -0.28449672
    %v565 = vadd.f32 %v549, -0.28449672
    %v566 = vadd.f32 %v550, -0.28449672
    %v567 = vadd.f32 %v551, -0.28449672
    %v568 = vadd.f32 %v552, -0.28449672
    %v569 = vmul.f32 %v553, %v457
    %v570 = vmul.f32 %v554, %v458
    %v571 = vmul.f32 %v555, %v459
    %v572 = vmul.f32 %v556, %v460
    %v573 = vmul.f32 %v557, %v461
    %v574 = vmul.f32 %v558, %v462
    %v575 = vmul.f32 %v559, %v463
    %v576 = vmul.f32 %v560, %v464
    %v577 = vmul.f32 %v561, %v465
    %v578 = vmul.f32 %v562, %v466
    %v579 = vmul.f32 %v563, %v467
    %v580 = vmul.f32 %v564, %v468
    %v581 = vmul.f32 %v565, %v469
    %v582 = vmul.f32 %v566, %v470
    %v583 = vmul.f32 %v567, %v471
    %v584 = vmul.f32 %v568, %v472
    %v585 = vadd.f32 %v569, 0.2548296
    %v586 = vadd.f32 %v570, 0.2548296
    %v587 = vadd.f32 %v571, 0.2548296
    %v588 = vadd.f32 %v572, 0.2548296
    %v589 = vadd.f32 %v573, 0.2548296
    %v590 = vadd.f32 %v574, 0.2548296
    %v591 = vadd.f32 %v575, 0.2548296
    %v592 = vadd.f32 %v576, 0.2548296
    %v593 = vadd.f32 %v577, 0.2548296
    %v594 = vadd.f32 %v578, 0.2548296
    %v595 = vadd.f32 %v579, 0.2548296
    %v596 = vadd.f32 %v580, 0.2548296
    %v597 = vadd.f32 %v581, 0.2548296
    %v598 = vadd.f32 %v582, 0.2548296
    %v599 = vadd.f32 %v583, 0.2548296
    %v600 = vadd.f32 %v584, 0.2548296
    %v601 = vmul.f32 %v585, %v457
    %v602 = vmul.f32 %v586, %v458
    %v603 = vmul.f32 %v587, %v459
    %v604 = vmul.f32 %v588, %v460
    %v605 = vmul.f32 %v589, %v461
    %v606 = vmul.f32 %v590, %v462
    %v607 = vmul.f32 %v591, %v463
    %v608 = vmul.f32 %v592, %v464
    %v609 = vmul.f32 %v593, %v465
    %v610 = vmul.f32 %v594, %v466
    %v611 = vmul.f32 %v595, %v467
    %v612 = vmul.f32 %v596, %v468
    %v613 = vmul.f32 %v597, %v469
    %v614 = vmul.f32 %v598, %v470
    %v615 = vmul.f32 %v599, %v471
    %v616 = vmul.f32 %v600, %v472
    %v617 = vsub.f32 0.0, %v409
    %v618 = vsub.f32 0.0, %v410
    %v619 = vsub.f32 0.0, %v411
    %v620 = vsub.f32 0.0, %v412
    %v621 = vsub.f32 0.0, %v413
    %v622 = vsub.f32 0.0, %v414
    %v623 = vsub.f32 0.0, %v415
    %v624 = vsub.f32 0.0, %v416
    %v625 = vsub.f32 0.0, %v417
    %v626 = vsub.f32 0.0, %v418
    %v627 = vsub.f32 0.0, %v419
    %v628 = vsub.f32 0.0, %v420
    %v629 = vsub.f32 0.0, %v421
    %v630 = vsub.f32 0.0, %v422
    %v631 = vsub.f32 0.0, %v423
    %v632 = vsub.f32 0.0, %v424
    %v633 = vmul.f32 %v617, %v409
    %v634 = vmul.f32 %v618, %v410
    %v635 = vmul.f32 %v619, %v411
    %v636 = vmul.f32 %v620, %v412
    %v637 = vmul.f32 %v621, %v413
    %v638 = vmul.f32 %v622, %v414
    %v639 = vmul.f32 %v623, %v415
    %v640 = vmul.f32 %v624, %v416
    %v641 = vmul.f32 %v625, %v417
    %v642 = vmul.f32 %v626, %v418
    %v643 = vmul.f32 %v627, %v419
    %v644 = vmul.f32 %v628, %v420
    %v645 = vmul.f32 %v629, %v421
    %v646 = vmul.f32 %v630, %v422
    %v647 = vmul.f32 %v631, %v423
    %v648 = vmul.f32 %v632, %v424
    %v649 = vmul.f32 %v633, 1.442695
    %v650 = vpow.pop %v649
    %v651 = vmul.f32 %v634, 1.442695
    %v652 = vpow.pop %v651
    %v653 = vmul.f32 %v635, 1.442695
    %v654 = vpow.pop %v653
    %v655 = vmul.f32 %v636, 1.442695
    %v656 = vpow.pop %v655
    %v657 = vmul.f32 %v637, 1.442695
    %v658 = vpow.pop %v657
    %v659 = vmul.f32 %v638, 1.442695
    %v660 = vpow.pop %v659
    %v661 = vmul.f32 %v639, 1.442695
    %v662 = vpow.pop %v661
    %v663 = vmul.f32 %v640, 1.442695
    %v664 = vpow.pop %v663
    %v665 = vmul.f32 %v641, 1.442695
    %v666 = vpow.pop %v665
    %v667 = vmul.f32 %v642, 1.442695
    %v668 = vpow.pop %v667
    %v669 = vmul.f32 %v643, 1.442695
    %v670 = vpow.pop %v669
    %v671 = vmul.f32 %v644, 1.442695
    %v672 = vpow.pop %v671
    %v673 = vmul.f32 %v645, 1.442695
    %v674 = vpow.pop %v673
    %v675 = vmul.f32 %v646, 1.442695
    %v676 = vpow.pop %v675
    %v677 = vmul.f32 %v647, 1.442695
    %v678 = vpow.pop %v677
    %v679 = vmul.f32 %v648, 1.442695
    %v680 = vpow.pop %v679
    %v681 = vmul.f32 %v601, %v650
    %v682 = vmul.f32 %v602, %v652
    %v683 = vmul.f32 %v603, %v654
    %v684 = vmul.f32 %v604, %v656
    %v685 = vmul.f32 %v605, %v658
    %v686 = vmul.f32 %v606, %v660
    %v687 = vmul.f32 %v607, %v662
    %v688 = vmul.f32 %v608, %v664
    %v689 = vmul.f32 %v609, %v666
    %v690 = vmul.f32 %v610, %v668
    %v691 = vmul.f32 %v611, %v670
    %v692 = vmul.f32 %v612, %v672
    %v693 = vmul.f32 %v613, %v674
    %v694 = vmul.f32 %v614, %v676
    %v695 = vmul.f32 %v615, %v678
    %v696 = vmul.f32 %v616, %v680
    %v697 = vsub.f32 1.0, %v681
    %v698 = vsub.f32 1.0, %v682
    %v699 = vsub.f32 1.0, %v683
    %v700 = vsub.f32 1.0, %v684
    %v701 = vsub.f32 1.0, %v685
    %v702 = vsub.f32 1.0, %v686
    %v703 = vsub.f32 1.0, %v687
    %v704 = vsub.f32 1.0, %v688
    %v705 = vsub.f32 1.0, %v689
    %v706 = vsub.f32 1.0, %v690
    %v707 = vsub.f32 1.0, %v691
    %v708 = vsub.f32 1.0, %v692
    %v709 = vsub.f32 1.0, %v693
    %v710 = vsub.f32 1.0, %v694
    %v711 = vsub.f32 1.0, %v695
    %v712 = vsub.f32 1.0, %v696
    %v713 = vmul.f32 %v393, %v697
    %v714 = vmul.f32 %v394, %v698
    %v715 = vmul.f32 %v395, %v699
    %v716 = vmul.f32 %v396, %v700
    %v717 = vmul.f32 %v397, %v701
    %v718 = vmul.f32 %v398, %v702
    %v719 = vmul.f32 %v399, %v703
    %v720 = vmul.f32 %v400, %v704
    %v721 = vmul.f32 %v401, %v705
    %v722 = vmul.f32 %v402, %v706
    %v723 = vmul.f32 %v403, %v707
    %v724 = vmul.f32 %v404, %v708
    %v725 = vmul.f32 %v405, %v709
    %v726 = vmul.f32 %v406, %v710
    %v727 = vmul.f32 %v407, %v711
    %v728 = vmul.f32 %v408, %v712
    %v729 = vadd.f32 %v713, 1.0
    %v730 = vadd.f32 %v714, 1.0
    %v731 = vadd.f32 %v715, 1.0
    %v732 = vadd.f32 %v716, 1.0
    %v733 = vadd.f32 %v717, 1.0
    %v734 = vadd.f32 %v718, 1.0
    %v735 = vadd.f32 %v719, 1.0
    %v736 = vadd.f32 %v720, 1.0
    %v737 = vadd.f32 %v721, 1.0
    %v738 = vadd.f32 %v722, 1.0
    %v739 = vadd.f32 %v723, 1.0
    %v740 = vadd.f32 %v724, 1.0
    %v741 = vadd.f32 %v725, 1.0
    %v742 = vadd.f32 %v726, 1.0
    %v743 = vadd.f32 %v727, 1.0
    %v744 = vadd.f32 %v728, 1.0
    %v745 = vmul.f32 %v345, %v729
    %v746 = vmul.f32 %v346, %v730
    %v747 = vmul.f32 %v347, %v731
    %v748 = vmul.f32 %v348, %v732
    %v749 = vmul.f32 %v349, %v733
    %v750 = vmul.f32 %v350, %v734
    %v751 = vmul.f32 %v351, %v735
    %v752 = vmul.f32 %v352, %v736
    %v753 = vmul.f32 %v353, %v737
    %v754 = vmul.f32 %v354, %v738
    %v755 = vmul.f32 %v355, %v739
    %v756 = vmul.f32 %v356, %v740
    %v757 = vmul.f32 %v357, %v741
    %v758 = vmul.f32 %v358, %v742
    %v759 = vmul.f32 %v359, %v743
    %v760 = vmul.f32 %v360, %v744
    %761 = vst.msk [vmem:[%s3] sm:$0xff] %vm286, %v745
    %762 = vst.msk [vmem:[%s3 + $0x8] sm:$0xff] %vm286, %v746
    %763 = vst.msk [vmem:[%s3 + $0x10] sm:$0xff] %vm286, %v747
    %764 = vst.msk [vmem:[%s3 + $0x18] sm:$0xff] %vm286, %v748
    %765 = vst.msk [vmem:[%s3 + $0x20] sm:$0xff] %vm286, %v749
    %766 = vst.msk [vmem:[%s3 + $0x28] sm:$0xff] %vm286, %v750
    %767 = vst.msk [vmem:[%s3 + $0x30] sm:$0xff] %vm286, %v751
    %768 = vst.msk [vmem:[%s3 + $0x38] sm:$0xff] %vm286, %v752
    %769 = vst.msk [vmem:[%s3 + $0x40] sm:$0xff] %vm286, %v753
    %770 = vst.msk [vmem:[%s3 + $0x48] sm:$0xff] %vm286, %v754
    %771 = vst.msk [vmem:[%s3 + $0x50] sm:$0xff] %vm286, %v755
    %772 = vst.msk [vmem:[%s3 + $0x58] sm:$0xff] %vm286, %v756
    %773 = vst.msk [vmem:[%s3 + $0x60] sm:$0xff] %vm286, %v757
    %774 = vst.msk [vmem:[%s3 + $0x68] sm:$0xff] %vm286, %v758
    %775 = vst.msk [vmem:[%s3 + $0x70] sm:$0xff] %vm286, %v759
    %776 = vst.msk [vmem:[%s3 + $0x78] sm:$0xff] %vm286, %v760
  $region21: #{encoder_forward.11} parent=0 // pred_fallthru
    _
  // Predicated region
  $region22: #{encoder_forward.11} parent=0 // pred_check
    _
  $region23: #{encoder_forward.11} parent=0 // pred_check_branch
    %778 = sbr.rel (0) target = $region25
  $region24: #{encoder_forward.11} parent=0 // pred_region
    _
  $region25: #{encoder_forward.11} parent=0 // pred_fallthru
    _
  // Predicated region
  $region26: #{encoder_forward.11} parent=0 // pred_check
    _
  $region27: #{encoder_forward.11} parent=0 // pred_check_branch
    %780 = sbr.rel (0) target = $region29
  $region28: #{encoder_forward.11} parent=0 // pred_region
    _
  $region29: #{encoder_forward.11} parent=0 // pred_fallthru
    _

// kernel: encoder_forward.14
$region0: #{encoder_forward.14}
  #allocation0 [shape = 'u32[]', space=smem, size = 0x4, offset = 0x4, fixed_abs, tag = 'smem constant byte address 0x4 - core index']
  #allocation1 [shape = 'u32[144,128]{1,0:T(1,128)}', space=vmem, size = 0x12000, scoped, tag = 'internal scratch']
  #allocation2 [shape = 'f32[32,16]{1,0:T(8,128)}', space=vmem, size = 0x4000, scoped, tag = 'scratch operand']
  %s0 = inlined_call_operand.vmem [shape: bf16[32,72], index: 0, kind: input, shape index: {}]
  %s1 = inlined_call_operand.vmem [shape: bf16[72,16], index: 1, kind: input, shape index: {}]
  %s2 = inlined_call_operand.vmem [shape: f32[1,16], index: 2, kind: input, shape index: {}]
  %s3 = inlined_call_operand.vmem [shape: f32[32,16], index: 3, kind: output, shape index: {}]
  %s4 = sld [smem:[#allocation0]]
  $region30: #{encoder_forward.14} parent=0
    _
  %s6 = ssub.s32 1, %s4
  %s7 = scalar_select 0, %s6, %s4
  // Predicated region
  $region2: #{encoder_forward.14} parent=0 // pred_check
    _
  $region3: #{encoder_forward.14} parent=0 // pred_check_branch
    %9 = sbr.rel (0) target = $region5
  $region4: #{encoder_forward.14} parent=0 // pred_region
    _
  $region5: #{encoder_forward.14} parent=0 // pred_fallthru
    _
  // Predicated region
  $region6: #{encoder_forward.14} parent=0 // pred_check
    _
  $region7: #{encoder_forward.14} parent=0 // pred_check_branch
    %11 = sbr.rel (0) target = $region9
  $region8: #{encoder_forward.14} parent=0 // pred_region
    _
  $region9: #{encoder_forward.14} parent=0 // pred_fallthru
    _
  // Predicated region
  $region10: #{encoder_forward.14} parent=0 // pred_check
    _
  $region11: #{encoder_forward.14} parent=0 // pred_check_branch
    %13 = sbr.rel (0) target = $region13
  $region12: #{encoder_forward.14} parent=0 // pred_region
    _
  $region13: #{encoder_forward.14} parent=0 // pred_fallthru
    _
  %p15 = scmp.eq.s32.totalorder 0, 0
  // Predicated region
  $region14: #{encoder_forward.14} parent=0 // pred_check
    %p16 = pneg %p15
  $region15: #{encoder_forward.14} parent=0 // pred_check_branch
    %18 = sbr.rel (%p16) target = $region17
  $region16: #{encoder_forward.14} parent=0 // pred_region
    %vm19 = vcmask 130048
    %20 = vst.msk [vmem:[#allocation2] sm:$0xff] %vm19, 0.0
    %21 = vst.msk [vmem:[#allocation2 + $0x8] sm:$0xff] %vm19, 0.0
    %22 = vst.msk [vmem:[#allocation2 + $0x10] sm:$0xff] %vm19, 0.0
    %23 = vst.msk [vmem:[#allocation2 + $0x18] sm:$0xff] %vm19, 0.0
  $region17: #{encoder_forward.14} parent=0 // pred_fallthru
    _
  %v24 = vld [vmem:[#allocation2] sm:$0xff]
  %v25 = vld [vmem:[#allocation2 + $0x8] sm:$0xff]
  %v26 = vld [vmem:[#allocation2 + $0x10] sm:$0xff]
  %v27 = vld [vmem:[#allocation2 + $0x18] sm:$0xff]
  %v28 = vld [vmem:[%s0] sm:$0xf]
  %v29 = vld [vmem:[%s0 + $0x4] sm:$0xf]
  %v30 = vld [vmem:[%s0 + $0x8] sm:$0xf]
  %v31 = vld [vmem:[%s0 + $0xc] sm:$0xf]
  %v32 = vld [vmem:[%s1] sm:$0xf]
  %v33 = vld [vmem:[%s1 + $0x4] sm:$0xf]
  %v34 = vld [vmem:[%s1 + $0x8] sm:$0xf]
  %v35 = vld [vmem:[%s1 + $0xc] sm:$0xf]
  %v36 = vld [vmem:[%s1 + $0x10] sm:$0xf]
  %v37 = vld [vmem:[%s1 + $0x14] sm:$0xf]
  %v38 = vld [vmem:[%s1 + $0x18] sm:$0xf]
  %v39 = vld [vmem:[%s1 + $0x1c] sm:$0xf]
  %v40 = vld [vmem:[%s1 + $0x20] sm:$0xf]
  %v45 = vunpack.c.l.b16 %v28
  %v46 = vunpack.c.l.b16 %v29
  %v47 = vunpack.c.l.b16 %v30
  %v48 = vunpack.c.l.b16 %v31
  %v49 = vpack.c.b16 %v46, %v45
  %v50 = vpack.c.b16 %v48, %v47
  %v60 = vunpack.c.l.b16 %v32
  %v61 = vunpack.c.l.b16 %v33
  %v62 = vunpack.c.l.b16 %v34
  %v63 = vunpack.c.l.b16 %v35
  %v64 = vunpack.c.l.b16 %v36
  %v65 = vunpack.c.l.b16 %v37
  %v66 = vunpack.c.l.b16 %v38
  %v67 = vunpack.c.l.b16 %v39
  %v68 = vunpack.c.l.b16 %v40
  %v69 = vpack.c.b16 %v61, %v60
  %v70 = vpack.c.b16 %v63, %v62
  %v71 = vpack.c.b16 %v65, %v64
  %v72 = vpack.c.b16 %v67, %v66
  %v73 = vpack.c.b16 %v68, %v68
  %vm78 = vcmask 588800
  %v80 = vsel %vm78, %v49, 0
  %v83 = vsel %vm78, %v50, 0
  %vm85 = vcmask 1043456
  %v87 = vsel %vm85, %v73, 0
  %89 = vmatprep.subr.bf16.mxu0 0
  %90 = vmatpush1.bf16.msra.mxu0 %v69
  %91 = vmatprep.subr.bf16.mxu0 0
  %92 = vmatpush1.bf16.msra.mxu0 %v70
  %93 = vmatprep.subr.bf16.mxu0 0
  %94 = vmatpush1.bf16.msra.mxu0 %v71
  %95 = vmatprep.subr.bf16.mxu0 0
  %96 = vmatpush1.bf16.msra.mxu0 %v72
  %97 = vmatprep.subr.bf16.mxu0 0
  %98 = vmatpush1.bf16.msra.mxu0 %v87
  %99 = vmatprep.subr.bf16.mxu0 0
  %100 = vmatpush1.bf16.msra.mxu0 0
  %101 = vmatprep.subr.bf16.mxu0 0
  %102 = vmatpush1.bf16.msra.mxu0 0
  %103 = vmatprep.subr.bf16.mxu0 0
  %104 = vmatpush1.bf16.msra.mxu0 0
  %105 = vmatprep.subr.bf16.mxu0 0
  %106 = vmatpush1.bf16.msra.mxu0 0
  %107 = vmatprep.subr.bf16.mxu0 0
  %108 = vmatpush1.bf16.msra.mxu0 0
  %109 = vmatprep.subr.bf16.mxu0 0
  %110 = vmatpush1.bf16.msra.mxu0 0
  %111 = vmatprep.subr.bf16.mxu0 0
  %112 = vmatpush1.bf16.msra.mxu0 0
  %113 = vmatprep.subr.bf16.mxu0 0
  %114 = vmatpush1.bf16.msra.mxu0 0
  %115 = vmatprep.subr.bf16.mxu0 0
  %116 = vmatpush1.bf16.msra.mxu0 0
  %117 = vmatprep.subr.bf16.mxu0 0
  %118 = vmatpush1.bf16.msra.mxu0 0
  %119 = vmatprep.subr.bf16.mxu0 0
  %120 = vmatpush1.bf16.msra.mxu0 0
  %121 = vmatprep.mubr.bf16.mxu0 0
  %122 = vmatmul.mubr.bf16.gmra.mrb[0].mxu0 %v80
  %v123 = vpop.f32.mrb[0].mxu0
  %v124 = vadd.f32 0.0, %v123
  %v125 = vpop.f32.mrb[0].mxu0
  %v126 = vpop.f32.mrb[0].mxu0
  %v127 = vadd.f32 0.0, %v126
  %v128 = vpop.f32.mrb[0].mxu0
  %129 = vmatprep.mubr.bf16.mxu0 0
  %130 = vmatmul.mubr.bf16.gmra.mrb[0].mxu0 %v83
  %v131 = vpop.f32.mrb[0].mxu0
  %v132 = vadd.f32 0.0, %v131
  %v133 = vpop.f32.mrb[0].mxu0
  %v134 = vpop.f32.mrb[0].mxu0
  %v135 = vadd.f32 0.0, %v134
  %v136 = vpop.f32.mrb[0].mxu0
  %137 = vdwg.mxu0
  %v138 = vadd.f32 %v24, %v124
  %v139 = vadd.f32 %v25, %v127
  %v140 = vadd.f32 %v26, %v132
  %v141 = vadd.f32 %v27, %v135
  %vm142 = vcmask 130048
  %143 = vst.msk [vmem:[#allocation2] sm:$0xff] %vm142, %v138
  %144 = vst.msk [vmem:[#allocation2 + $0x8] sm:$0xff] %vm142, %v139
  %145 = vst.msk [vmem:[#allocation2 + $0x10] sm:$0xff] %vm142, %v140
  %146 = vst.msk [vmem:[#allocation2 + $0x18] sm:$0xff] %vm142, %v141
  // Predicated region
  $region18: #{encoder_forward.14} parent=0 // pred_check
    %p147 = pneg %p15
  $region19: #{encoder_forward.14} parent=0 // pred_check_branch
    %149 = sbr.rel (%p147) target = $region21
  $region20: #{encoder_forward.14} parent=0 // pred_region
    %v150 = vld [vmem:[#allocation2] sm:$0xff]
    %v151 = vld [vmem:[#allocation2 + $0x8] sm:$0xff]
    %v152 = vld [vmem:[#allocation2 + $0x10] sm:$0xff]
    %v153 = vld [vmem:[#allocation2 + $0x18] sm:$0xff]
    %v154 = vld [vmem:[%s2] sm:$0x1]
    %v156 = vlaneseq
    %v157 = vshrl.u32 %v156, 7
    %v158 = vsub.s32 0, %v157
    %v159 = vrot.slane %v154, %v158
    %v161 = vadd.f32 %v150, %v159
    %v162 = vadd.f32 %v151, %v159
    %v163 = vadd.f32 %v152, %v159
    %v164 = vadd.f32 %v153, %v159
    %v165 = vmul.f32 %v161, 0.5
    %v166 = vmul.f32 %v162, 0.5
    %v167 = vmul.f32 %v163, 0.5
    %v168 = vmul.f32 %v164, 0.5
    %v169 = vmul.f32 %v161, 0.70710677
    %v170 = vmul.f32 %v162, 0.70710677
    %v171 = vmul.f32 %v163, 0.70710677
    %v172 = vmul.f32 %v164, 0.70710677
    %vm173 = vcmp.ge.f32.partialorder %v169, 0.0
    %vm174 = vcmp.ge.f32.partialorder %v170, 0.0
    %vm175 = vcmp.ge.f32.partialorder %v171, 0.0
    %vm176 = vcmp.ge.f32.partialorder %v172, 0.0
    %v177 = vsel %vm173, 1.0, -1.0
    %v178 = vsel %vm174, 1.0, -1.0
    %v179 = vsel %vm175, 1.0, -1.0
    %v180 = vsel %vm176, 1.0, -1.0
    %v181 = vand.u32 2147483647, %v169
    %v182 = vand.u32 2147483647, %v170
    %v183 = vand.u32 2147483647, %v171
    %v184 = vand.u32 2147483647, %v172
    %v185 = vmul.f32 %v181, 0.3275911
    %v186 = vmul.f32 %v182, 0.3275911
    %v187 = vmul.f32 %v183, 0.3275911
    %v188 = vmul.f32 %v184, 0.3275911
    %v189 = vadd.f32 %v185, 1.0
    %v190 = vadd.f32 %v186, 1.0
    %v191 = vadd.f32 %v187, 1.0
    %v192 = vadd.f32 %v188, 1.0
    %v193 = vrcp.pop %v189
    %v194 = vrcp.pop %v190
    %v195 = vrcp.pop %v191
    %v196 = vrcp.pop %v192
    %v197 = vmul.f32 %v193, 1.0614054
    %v198 = vmul.f32 %v194, 1.0614054
    %v199 = vmul.f32 %v195, 1.0614054
    %v200 = vmul.f32 %v196, 1.0614054
    %v201 = vadd.f32 %v197, -1.4531521
    %v202 = vadd.f32 %v198, -1.4531521
    %v203 = vadd.f32 %v199, -1.4531521
    %v204 = vadd.f32 %v200, -1.4531521
    %v205 = vmul.f32 %v201, %v193
    %v206 = vmul.f32 %v202, %v194
    %v207 = vmul.f32 %v203, %v195
    %v208 = vmul.f32 %v204, %v196
    %v209 = vadd.f32 %v205, 1.4214138
    %v210 = vadd.f32 %v206, 1.4214138
    %v211 = vadd.f32 %v207, 1.4214138
    %v212 = vadd.f32 %v208, 1.4214138
    %v213 = vmul.f32 %v209, %v193
    %v214 = vmul.f32 %v210, %v194
    %v215 = vmul.f32 %v211, %v195
    %v216 = vmul.f32 %v212, %v196
    %v217 = vadd.f32 %v213, -0.28449672
    %v218 = vadd.f32 %v214, -0.28449672
    %v219 = vadd.f32 %v215, -0.28449672
    %v220 = vadd.f32 %v216, -0.28449672
    %v221 = vmul.f32 %v217, %v193
    %v222 = vmul.f32 %v218, %v194
    %v223 = vmul.f32 %v219, %v195
    %v224 = vmul.f32 %v220, %v196
    %v225 = vadd.f32 %v221, 0.2548296
    %v226 = vadd.f32 %v222, 0.2548296
    %v227 = vadd.f32 %v223, 0.2548296
    %v228 = vadd.f32 %v224, 0.2548296
    %v229 = vmul.f32 %v225, %v193
    %v230 = vmul.f32 %v226, %v194
    %v231 = vmul.f32 %v227, %v195
    %v232 = vmul.f32 %v228, %v196
    %v233 = vsub.f32 0.0, %v181
    %v234 = vsub.f32 0.0, %v182
    %v235 = vsub.f32 0.0, %v183
    %v236 = vsub.f32 0.0, %v184
    %v237 = vmul.f32 %v233, %v181
    %v238 = vmul.f32 %v234, %v182
    %v239 = vmul.f32 %v235, %v183
    %v240 = vmul.f32 %v236, %v184
    %v241 = vmul.f32 %v237, 1.442695
    %v242 = vpow.pop %v241
    %v243 = vmul.f32 %v238, 1.442695
    %v244 = vpow.pop %v243
    %v245 = vmul.f32 %v239, 1.442695
    %v246 = vpow.pop %v245
    %v247 = vmul.f32 %v240, 1.442695
    %v248 = vpow.pop %v247
    %v249 = vmul.f32 %v229, %v242
    %v250 = vmul.f32 %v230, %v244
    %v251 = vmul.f32 %v231, %v246
    %v252 = vmul.f32 %v232, %v248
    %v253 = vsub.f32 1.0, %v249
    %v254 = vsub.f32 1.0, %v250
    %v255 = vsub.f32 1.0, %v251
    %v256 = vsub.f32 1.0, %v252
    %v257 = vmul.f32 %v177, %v253
    %v258 = vmul.f32 %v178, %v254
    %v259 = vmul.f32 %v179, %v255
    %v260 = vmul.f32 %v180, %v256
    %v261 = vadd.f32 %v257, 1.0
    %v262 = vadd.f32 %v258, 1.0
    %v263 = vadd.f32 %v259, 1.0
    %v264 = vadd.f32 %v260, 1.0
    %v265 = vmul.f32 %v165, %v261
    %v266 = vmul.f32 %v166, %v262
    %v267 = vmul.f32 %v167, %v263
    %v268 = vmul.f32 %v168, %v264
    %269 = vst.msk [vmem:[%s3] sm:$0xff] %vm142, %v265
    %270 = vst.msk [vmem:[%s3 + $0x8] sm:$0xff] %vm142, %v266
    %271 = vst.msk [vmem:[%s3 + $0x10] sm:$0xff] %vm142, %v267
    %272 = vst.msk [vmem:[%s3 + $0x18] sm:$0xff] %vm142, %v268
  $region21: #{encoder_forward.14} parent=0 // pred_fallthru
    _
  // Predicated region
  $region22: #{encoder_forward.14} parent=0 // pred_check
    _
  $region23: #{encoder_forward.14} parent=0 // pred_check_branch
    %274 = sbr.rel (0) target = $region25
  $region24: #{encoder_forward.14} parent=0 // pred_region
    _
  $region25: #{encoder_forward.14} parent=0 // pred_fallthru
    _
  // Predicated region
  $region26: #{encoder_forward.14} parent=0 // pred_check
    _
  $region27: #{encoder_forward.14} parent=0 // pred_check_branch
    %276 = sbr.rel (0) target = $region29
  $region28: #{encoder_forward.14} parent=0 // pred_region
    _
  $region29: #{encoder_forward.14} parent=0 // pred_fallthru
    _

// kernel: encoder_forward.16
$region0: #{encoder_forward.16}
  #allocation0 [shape = 'u32[]', space=smem, size = 0x4, offset = 0x4, fixed_abs, tag = 'smem constant byte address 0x4 - core index']
  #allocation1 [shape = 'u32[144,128]{1,0:T(1,128)}', space=vmem, size = 0x12000, scoped, tag = 'internal scratch']
  %s0 = inlined_call_operand.vmem [shape: f32[32,32], index: 0, kind: input, shape index: {}]
  %s1 = inlined_call_operand.vmem [shape: f32[1,32], index: 1, kind: output, shape index: {0}]
  %s2 = inlined_call_operand.vmem [shape: f32[1,32], index: 2, kind: output, shape index: {1}]
  %3 = xla_tuple %s1, %s2
  %s4 = sld [smem:[#allocation0]]
  $region26: #{encoder_forward.16} parent=0
    _
  %s6 = ssub.s32 1, %s4
  %s7 = scalar_select 0, %s6, %s4
  // Predicated region
  $region2: #{encoder_forward.16} parent=0 // pred_check
    _
  $region3: #{encoder_forward.16} parent=0 // pred_check_branch
    %9 = sbr.rel (0) target = $region5
  $region4: #{encoder_forward.16} parent=0 // pred_region
    _
  $region5: #{encoder_forward.16} parent=0 // pred_fallthru
    _
  %p10 = scmp.eq.s32.totalorder 0, 0
  // Predicated region
  $region6: #{encoder_forward.16} parent=0 // pred_check
    %p11 = pneg %p10
  $region7: #{encoder_forward.16} parent=0 // pred_check_branch
    %13 = sbr.rel (%p11) target = $region9
  $region8: #{encoder_forward.16} parent=0 // pred_region
    %vm14 = vcmask 253952
    %15 = vst.msk [vmem:[%s1] sm:$0x1] %vm14, 0.0
    %16 = vst.msk [vmem:[%s2] sm:$0x1] %vm14, 0.0
  $region9: #{encoder_forward.16} parent=0 // pred_fallthru
    _
  %v17 = vld [vmem:[%s0] sm:$0xff]
  %v18 = vld [vmem:[%s0 + $0x8] sm:$0xff]
  %v19 = vld [vmem:[%s0 + $0x10] sm:$0xff]
  %v20 = vld [vmem:[%s0 + $0x18] sm:$0xff]
  %v21 = vld [vmem:[%s1] sm:$0x1]
  %vm22 = vcmask 261120
  %v23 = vsel %vm22, %v17, 0.0
  %v24 = vsel %vm22, %v18, 0.0
  %v25 = vadd.f32 %v23, %v24
  %v26 = vsel %vm22, %v19, 0.0
  %v27 = vadd.f32 %v25, %v26
  %v28 = vsel %vm22, %v20, 0.0
  %v29 = vadd.f32 %v27, %v28
  %v30 = vrot.slane %v29, 4
  %v31 = vadd.f32 %v29, %v30
  %v32 = vrot.slane %v31, 2
  %v33 = vadd.f32 %v31, %v32
  %v34 = vrot.slane %v33, 1
  %v35 = vadd.f32 %v33, %v34
  %v36 = vadd.f32 %v21, %v35
  %vm37 = vcmask 253952
  %38 = vst.msk [vmem:[%s1] sm:$0x1] %vm37, %v36
  %v39 = vld [vmem:[%s2] sm:$0x1]
  %v40 = vmul.f32 %v17, %v17
  %v41 = vmul.f32 %v18, %v18
  %v42 = vmul.f32 %v19, %v19
  %v43 = vmul.f32 %v20, %v20
  %v44 = vsel %vm22, %v40, 0.0
  %v45 = vsel %vm22, %v41, 0.0
  %v46 = vadd.f32 %v44, %v45
  %v47 = vsel %vm22, %v42, 0.0
  %v48 = vadd.f32 %v46, %v47
  %v49 = vsel %vm22, %v43, 0.0
  %v50 = vadd.f32 %v48, %v49
  %v51 = vrot.slane %v50, 4
  %v52 = vadd.f32 %v50, %v51
  %v53 = vrot.slane %v52, 2
  %v54 = vadd.f32 %v52, %v53
  %v55 = vrot.slane %v54, 1
  %v56 = vadd.f32 %v54, %v55
  %v57 = vadd.f32 %v39, %v56
  %58 = vst.msk [vmem:[%s2] sm:$0x1] %vm37, %v57
  // Predicated region
  $region10: #{encoder_forward.16} parent=0 // pred_check
    _
  $region11: #{encoder_forward.16} parent=0 // pred_check_branch
    %60 = sbr.rel (0) target = $region13
  $region12: #{encoder_forward.16} parent=0 // pred_region
    _
  $region13: #{encoder_forward.16} parent=0 // pred_fallthru
    _
  // Predicated region
  $region14: #{encoder_forward.16} parent=0 // pred_check
    _
  $region15: #{encoder_forward.16} parent=0 // pred_check_branch
    %62 = sbr.rel (0) target = $region17
  $region16: #{encoder_forward.16} parent=0 // pred_region
    _
  $region17: #{encoder_forward.16} parent=0 // pred_fallthru
    _
  // Predicated region
  $region18: #{encoder_forward.16} parent=0 // pred_check
    _
  $region19: #{encoder_forward.16} parent=0 // pred_check_branch
    %64 = sbr.rel (0) target = $region21
  $region20: #{encoder_forward.16} parent=0 // pred_region
    _
  $region21: #{encoder_forward.16} parent=0 // pred_fallthru
    _
  // Predicated region
  $region22: #{encoder_forward.16} parent=0 // pred_check
    _
  $region23: #{encoder_forward.16} parent=0 // pred_check_branch
    %66 = sbr.rel (0) target = $region25
  $region24: #{encoder_forward.16} parent=0 // pred_region
    _
  $region25: #{encoder_forward.16} parent=0 // pred_fallthru
    _

// kernel: encoder_forward.15
$region0: #{encoder_forward.15}
  #allocation0 [shape = 'u32[]', space=smem, size = 0x4, offset = 0x4, fixed_abs, tag = 'smem constant byte address 0x4 - core index']
  #allocation1 [shape = 'u32[144,128]{1,0:T(1,128)}', space=vmem, size = 0x12000, scoped, tag = 'internal scratch']
  #allocation2 [shape = 'f32[32,32]{1,0:T(8,128)}', space=vmem, size = 0x4000, scoped, tag = 'scratch operand']
  %s0 = inlined_call_operand.vmem [shape: bf16[32,144], index: 0, kind: input, shape index: {}]
  %s1 = inlined_call_operand.vmem [shape: bf16[144,32], index: 1, kind: input, shape index: {}]
  %s2 = inlined_call_operand.vmem [shape: f32[1,32], index: 2, kind: input, shape index: {}]
  %s3 = inlined_call_operand.vmem [shape: f32[32,32], index: 3, kind: output, shape index: {}]
  %s4 = sld [smem:[#allocation0]]
  $region30: #{encoder_forward.15} parent=0
    _
  %s6 = ssub.s32 1, %s4
  %s7 = scalar_select 0, %s6, %s4
  // Predicated region
  $region2: #{encoder_forward.15} parent=0 // pred_check
    _
  $region3: #{encoder_forward.15} parent=0 // pred_check_branch
    %9 = sbr.rel (0) target = $region5
  $region4: #{encoder_forward.15} parent=0 // pred_region
    _
  $region5: #{encoder_forward.15} parent=0 // pred_fallthru
    _
  // Predicated region
  $region6: #{encoder_forward.15} parent=0 // pred_check
    _
  $region7: #{encoder_forward.15} parent=0 // pred_check_branch
    %11 = sbr.rel (0) target = $region9
  $region8: #{encoder_forward.15} parent=0 // pred_region
    _
  $region9: #{encoder_forward.15} parent=0 // pred_fallthru
    _
  // Predicated region
  $region10: #{encoder_forward.15} parent=0 // pred_check
    _
  $region11: #{encoder_forward.15} parent=0 // pred_check_branch
    %13 = sbr.rel (0) target = $region13
  $region12: #{encoder_forward.15} parent=0 // pred_region
    _
  $region13: #{encoder_forward.15} parent=0 // pred_fallthru
    _
  %p15 = scmp.eq.s32.totalorder 0, 0
  // Predicated region
  $region14: #{encoder_forward.15} parent=0 // pred_check
    %p16 = pneg %p15
  $region15: #{encoder_forward.15} parent=0 // pred_check_branch
    %18 = sbr.rel (%p16) target = $region17
  $region16: #{encoder_forward.15} parent=0 // pred_region
    %vm19 = vcmask 261120
    %20 = vst.msk [vmem:[#allocation2] sm:$0xff] %vm19, 0.0
    %21 = vst.msk [vmem:[#allocation2 + $0x8] sm:$0xff] %vm19, 0.0
    %22 = vst.msk [vmem:[#allocation2 + $0x10] sm:$0xff] %vm19, 0.0
    %23 = vst.msk [vmem:[#allocation2 + $0x18] sm:$0xff] %vm19, 0.0
  $region17: #{encoder_forward.15} parent=0 // pred_fallthru
    _
  %v24 = vld [vmem:[#allocation2] sm:$0xff]
  %v25 = vld [vmem:[#allocation2 + $0x8] sm:$0xff]
  %v26 = vld [vmem:[#allocation2 + $0x10] sm:$0xff]
  %v27 = vld [vmem:[#allocation2 + $0x18] sm:$0xff]
  %v28 = vld [vmem:[%s0] sm:$0xff]
  %v29 = vld [vmem:[%s0 + $0x8] sm:$0xff]
  %v30 = vld [vmem:[%s0 + $0x10] sm:$0xff]
  %v31 = vld [vmem:[%s0 + $0x18] sm:$0xff]
  %v32 = vld [vmem:[%s1] sm:$0xf]
  %v33 = vld [vmem:[%s1 + $0x4] sm:$0xf]
  %v34 = vld [vmem:[%s1 + $0x8] sm:$0xf]
  %v35 = vld [vmem:[%s1 + $0xc] sm:$0xf]
  %v36 = vld [vmem:[%s1 + $0x10] sm:$0xf]
  %v37 = vld [vmem:[%s1 + $0x14] sm:$0xf]
  %v38 = vld [vmem:[%s1 + $0x18] sm:$0xf]
  %v39 = vld [vmem:[%s1 + $0x1c] sm:$0xf]
  %v40 = vld [vmem:[%s1 + $0x20] sm:$0xf]
  %v41 = vld [vmem:[%s1 + $0x24] sm:$0xf]
  %v42 = vld [vmem:[%s1 + $0x28] sm:$0xf]
  %v43 = vld [vmem:[%s1 + $0x2c] sm:$0xf]
  %v44 = vld [vmem:[%s1 + $0x30] sm:$0xf]
  %v45 = vld [vmem:[%s1 + $0x34] sm:$0xf]
  %v46 = vld [vmem:[%s1 + $0x38] sm:$0xf]
  %v47 = vld [vmem:[%s1 + $0x3c] sm:$0xf]
  %v48 = vld [vmem:[%s1 + $0x40] sm:$0xf]
  %v49 = vld [vmem:[%s1 + $0x44] sm:$0xf]
  %v54 = vunpack.c.l.b16 %v28
  %v55 = vunpack.c.h.b16 %v28
  %v56 = vunpack.c.l.b16 %v29
  %v57 = vunpack.c.h.b16 %v29
  %v58 = vunpack.c.l.b16 %v30
  %v59 = vunpack.c.h.b16 %v30
  %v60 = vunpack.c.l.b16 %v31
  %v61 = vunpack.c.h.b16 %v31
  %v62 = vpack.c.b16 %v56, %v54
  %v63 = vpack.c.b16 %v57, %v55
  %v64 = vpack.c.b16 %v60, %v58
  %v65 = vpack.c.b16 %v61, %v59
  %v86 = vunpack.c.l.b16 %v32
  %v87 = vunpack.c.l.b16 %v33
  %v88 = vunpack.c.l.b16 %v34
  %v89 = vunpack.c.l.b16 %v35
  %v90 = vunpack.c.l.b16 %v36
  %v91 = vunpack.c.l.b16 %v37
  %v92 = vunpack.c.l.b16 %v38
  %v93 = vunpack.c.l.b16 %v39
  %v94 = vunpack.c.l.b16 %v40
  %v95 = vunpack.c.l.b16 %v41
  %v96 = vunpack.c.l.b16 %v42
  %v97 = vunpack.c.l.b16 %v43
  %v98 = vunpack.c.l.b16 %v44
  %v99 = vunpack.c.l.b16 %v45
  %v100 = vunpack.c.l.b16 %v46
  %v101 = vunpack.c.l.b16 %v47
  %v102 = vunpack.c.l.b16 %v48
  %v103 = vunpack.c.l.b16 %v49
  %v104 = vpack.c.b16 %v87, %v86
  %v105 = vpack.c.b16 %v89, %v88
  %v106 = vpack.c.b16 %v91, %v90
  %v107 = vpack.c.b16 %v93, %v92
  %v108 = vpack.c.b16 %v95, %v94
  %v109 = vpack.c.b16 %v97, %v96
  %v110 = vpack.c.b16 %v99, %v98
  %v111 = vpack.c.b16 %v101, %v100
  %v112 = vpack.c.b16 %v103, %v102
  %vm122 = vcmask 130048
  %v124 = vsel %vm122, %v63, 0
  %v127 = vsel %vm122, %v65, 0
  %129 = vmatprep.subr.bf16.mxu0 0
  %130 = vmatpush1.bf16.msra.mxu0 %v104
  %131 = vmatprep.subr.bf16.mxu0 0
  %132 = vmatpush1.bf16.msra.mxu0 %v105
  %133 = vmatprep.subr.bf16.mxu0 0
  %134 = vmatpush1.bf16.msra.mxu0 %v106
  %135 = vmatprep.subr.bf16.mxu0 0
  %136 = vmatpush1.bf16.msra.mxu0 %v107
  %137 = vmatprep.subr.bf16.mxu0 0
  %138 = vmatpush1.bf16.msra.mxu0 %v108
  %139 = vmatprep.subr.bf16.mxu0 0
  %140 = vmatpush1.bf16.msra.mxu0 %v109
  %141 = vmatprep.subr.bf16.mxu0 0
  %142 = vmatpush1.bf16.msra.mxu0 %v110
  %143 = vmatprep.subr.bf16.mxu0 0
  %144 = vmatpush1.bf16.msra.mxu0 %v111
  %145 = vmatprep.subr.bf16.mxu0 0
  %146 = vmatpush1.bf16.msra.mxu0 %v112
  %147 = vmatprep.subr.bf16.mxu0 0
  %148 = vmatpush1.bf16.msra.mxu0 0
  %149 = vmatprep.subr.bf16.mxu0 0
  %150 = vmatpush1.bf16.msra.mxu0 0
  %151 = vmatprep.subr.bf16.mxu0 0
  %152 = vmatpush1.bf16.msra.mxu0 0
  %153 = vmatprep.subr.bf16.mxu0 0
  %154 = vmatpush1.bf16.msra.mxu0 0
  %155 = vmatprep.subr.bf16.mxu0 0
  %156 = vmatpush1.bf16.msra.mxu0 0
  %157 = vmatprep.subr.bf16.mxu0 0
  %158 = vmatpush1.bf16.msra.mxu0 0
  %159 = vmatprep.subr.bf16.mxu0 0
  %160 = vmatpush1.bf16.msra.mxu0 0
  %161 = vmatprep.mubr.bf16.mxu0 %v124
  %162 = vmatmul.mubr.bf16.gmra.mrb[0].mxu0 %v62
  %v163 = vpop.f32.mrb[0].mxu0
  %v164 = vadd.f32 0.0, %v163
  %v165 = vpop.f32.mrb[0].mxu0
  %v166 = vpop.f32.mrb[0].mxu0
  %v167 = vadd.f32 0.0, %v166
  %v168 = vpop.f32.mrb[0].mxu0
  %169 = vmatprep.mubr.bf16.mxu0 %v127
  %170 = vmatmul.mubr.bf16.gmra.mrb[0].mxu0 %v64
  %v171 = vpop.f32.mrb[0].mxu0
  %v172 = vadd.f32 0.0, %v171
  %v173 = vpop.f32.mrb[0].mxu0
  %v174 = vpop.f32.mrb[0].mxu0
  %v175 = vadd.f32 0.0, %v174
  %v176 = vpop.f32.mrb[0].mxu0
  %177 = vdwg.mxu0
  %v178 = vadd.f32 %v24, %v164
  %v179 = vadd.f32 %v25, %v167
  %v180 = vadd.f32 %v26, %v172
  %v181 = vadd.f32 %v27, %v175
  %vm182 = vcmask 261120
  %183 = vst.msk [vmem:[#allocation2] sm:$0xff] %vm182, %v178
  %184 = vst.msk [vmem:[#allocation2 + $0x8] sm:$0xff] %vm182, %v179
  %185 = vst.msk [vmem:[#allocation2 + $0x10] sm:$0xff] %vm182, %v180
  %186 = vst.msk [vmem:[#allocation2 + $0x18] sm:$0xff] %vm182, %v181
  // Predicated region
  $region18: #{encoder_forward.15} parent=0 // pred_check
    %p187 = pneg %p15
  $region19: #{encoder_forward.15} parent=0 // pred_check_branch
    %189 = sbr.rel (%p187) target = $region21
  $region20: #{encoder_forward.15} parent=0 // pred_region
    %v190 = vld [vmem:[#allocation2] sm:$0xff]
    %v191 = vld [vmem:[#allocation2 + $0x8] sm:$0xff]
    %v192 = vld [vmem:[#allocation2 + $0x10] sm:$0xff]
    %v193 = vld [vmem:[#allocation2 + $0x18] sm:$0xff]
    %v194 = vld [vmem:[%s2] sm:$0x1]
    %v196 = vlaneseq
    %v197 = vshrl.u32 %v196, 7
    %v198 = vsub.s32 0, %v197
    %v199 = vrot.slane %v194, %v198
    %v201 = vadd.f32 %v190, %v199
    %v202 = vadd.f32 %v191, %v199
    %v203 = vadd.f32 %v192, %v199
    %v204 = vadd.f32 %v193, %v199
    %v205 = vmul.f32 %v201, 0.5
    %v206 = vmul.f32 %v202, 0.5
    %v207 = vmul.f32 %v203, 0.5
    %v208 = vmul.f32 %v204, 0.5
    %v209 = vmul.f32 %v201, 0.70710677
    %v210 = vmul.f32 %v202, 0.70710677
    %v211 = vmul.f32 %v203, 0.70710677
    %v212 = vmul.f32 %v204, 0.70710677
    %vm213 = vcmp.ge.f32.partialorder %v209, 0.0
    %vm214 = vcmp.ge.f32.partialorder %v210, 0.0
    %vm215 = vcmp.ge.f32.partialorder %v211, 0.0
    %vm216 = vcmp.ge.f32.partialorder %v212, 0.0
    %v217 = vsel %vm213, 1.0, -1.0
    %v218 = vsel %vm214, 1.0, -1.0
    %v219 = vsel %vm215, 1.0, -1.0
    %v220 = vsel %vm216, 1.0, -1.0
    %v221 = vand.u32 2147483647, %v209
    %v222 = vand.u32 2147483647, %v210
    %v223 = vand.u32 2147483647, %v211
    %v224 = vand.u32 2147483647, %v212
    %v225 = vmul.f32 %v221, 0.3275911
    %v226 = vmul.f32 %v222, 0.3275911
    %v227 = vmul.f32 %v223, 0.3275911
    %v228 = vmul.f32 %v224, 0.3275911
    %v229 = vadd.f32 %v225, 1.0
    %v230 = vadd.f32 %v226, 1.0
    %v231 = vadd.f32 %v227, 1.0
    %v232 = vadd.f32 %v228, 1.0
    %v233 = vrcp.pop %v229
    %v234 = vrcp.pop %v230
    %v235 = vrcp.pop %v231
    %v236 = vrcp.pop %v232
    %v237 = vmul.f32 %v233, 1.0614054
    %v238 = vmul.f32 %v234, 1.0614054
    %v239 = vmul.f32 %v235, 1.0614054
    %v240 = vmul.f32 %v236, 1.0614054
    %v241 = vadd.f32 %v237, -1.4531521
    %v242 = vadd.f32 %v238, -1.4531521
    %v243 = vadd.f32 %v239, -1.4531521
    %v244 = vadd.f32 %v240, -1.4531521
    %v245 = vmul.f32 %v241, %v233
    %v246 = vmul.f32 %v242, %v234
    %v247 = vmul.f32 %v243, %v235
    %v248 = vmul.f32 %v244, %v236
    %v249 = vadd.f32 %v245, 1.4214138
    %v250 = vadd.f32 %v246, 1.4214138
    %v251 = vadd.f32 %v247, 1.4214138
    %v252 = vadd.f32 %v248, 1.4214138
    %v253 = vmul.f32 %v249, %v233
    %v254 = vmul.f32 %v250, %v234
    %v255 = vmul.f32 %v251, %v235
    %v256 = vmul.f32 %v252, %v236
    %v257 = vadd.f32 %v253, -0.28449672
    %v258 = vadd.f32 %v254, -0.28449672
    %v259 = vadd.f32 %v255, -0.28449672
    %v260 = vadd.f32 %v256, -0.28449672
    %v261 = vmul.f32 %v257, %v233
    %v262 = vmul.f32 %v258, %v234
    %v263 = vmul.f32 %v259, %v235
    %v264 = vmul.f32 %v260, %v236
    %v265 = vadd.f32 %v261, 0.2548296
    %v266 = vadd.f32 %v262, 0.2548296
    %v267 = vadd.f32 %v263, 0.2548296
    %v268 = vadd.f32 %v264, 0.2548296
    %v269 = vmul.f32 %v265, %v233
    %v270 = vmul.f32 %v266, %v234
    %v271 = vmul.f32 %v267, %v235
    %v272 = vmul.f32 %v268, %v236
    %v273 = vsub.f32 0.0, %v221
    %v274 = vsub.f32 0.0, %v222
    %v275 = vsub.f32 0.0, %v223
    %v276 = vsub.f32 0.0, %v224
    %v277 = vmul.f32 %v273, %v221
    %v278 = vmul.f32 %v274, %v222
    %v279 = vmul.f32 %v275, %v223
    %v280 = vmul.f32 %v276, %v224
    %v281 = vmul.f32 %v277, 1.442695
    %v282 = vpow.pop %v281
    %v283 = vmul.f32 %v278, 1.442695
    %v284 = vpow.pop %v283
    %v285 = vmul.f32 %v279, 1.442695
    %v286 = vpow.pop %v285
    %v287 = vmul.f32 %v280, 1.442695
    %v288 = vpow.pop %v287
    %v289 = vmul.f32 %v269, %v282
    %v290 = vmul.f32 %v270, %v284
    %v291 = vmul.f32 %v271, %v286
    %v292 = vmul.f32 %v272, %v288
    %v293 = vsub.f32 1.0, %v289
    %v294 = vsub.f32 1.0, %v290
    %v295 = vsub.f32 1.0, %v291
    %v296 = vsub.f32 1.0, %v292
    %v297 = vmul.f32 %v217, %v293
    %v298 = vmul.f32 %v218, %v294
    %v299 = vmul.f32 %v219, %v295
    %v300 = vmul.f32 %v220, %v296
    %v301 = vadd.f32 %v297, 1.0
    %v302 = vadd.f32 %v298, 1.0
    %v303 = vadd.f32 %v299, 1.0
    %v304 = vadd.f32 %v300, 1.0
    %v305 = vmul.f32 %v205, %v301
    %v306 = vmul.f32 %v206, %v302
    %v307 = vmul.f32 %v207, %v303
    %v308 = vmul.f32 %v208, %v304
    %309 = vst.msk [vmem:[%s3] sm:$0xff] %vm182, %v305
    %310 = vst.msk [vmem:[%s3 + $0x8] sm:$0xff] %vm182, %v306
    %311 = vst.msk [vmem:[%s3 + $0x10] sm:$0xff] %vm182, %v307
    %312 = vst.msk [vmem:[%s3 + $0x18] sm:$0xff] %vm182, %v308
  $region21: #{encoder_forward.15} parent=0 // pred_fallthru
    _
  // Predicated region
  $region22: #{encoder_forward.15} parent=0 // pred_check
    _
  $region23: #{encoder_forward.15} parent=0 // pred_check_branch
    %314 = sbr.rel (0) target = $region25
  $region24: #{encoder_forward.15} parent=0 // pred_region
    _
  $region25: #{encoder_forward.15} parent=0 // pred_fallthru
    _
  // Predicated region
  $region26: #{encoder_forward.15} parent=0 // pred_check
    _
  $region27: #{encoder_forward.15} parent=0 // pred_check_branch
    %316 = sbr.rel (0) target = $region29
  $region28: #{encoder_forward.15} parent=0 // pred_region
    _
  $region29: #{encoder_forward.15} parent=0 // pred_fallthru
    _

// kernel: encoder_forward.17
$region0: #{encoder_forward.17}
  #allocation0 [shape = 'u32[]', space=smem, size = 0x4, offset = 0x4, fixed_abs, tag = 'smem constant byte address 0x4 - core index']
  #allocation1 [shape = 'u32[144,128]{1,0:T(1,128)}', space=vmem, size = 0x12000, scoped, tag = 'internal scratch']
  %s0 = inlined_call_operand.vmem [shape: f32[32,32], index: 0, kind: input, shape index: {}]
  %s1 = inlined_call_operand.vmem [shape: f32[1,32], index: 1, kind: input, shape index: {}]
  %s2 = inlined_call_operand.vmem [shape: f32[1,32], index: 2, kind: input, shape index: {}]
  %s3 = inlined_call_operand.vmem [shape: f32[32,32], index: 3, kind: output, shape index: {}]
  %s4 = sld [smem:[#allocation0]]
  $region22: #{encoder_forward.17} parent=0
    _
  %s6 = ssub.s32 1, %s4
  %s7 = scalar_select 0, %s6, %s4
  // Predicated region
  $region2: #{encoder_forward.17} parent=0 // pred_check
    _
  $region3: #{encoder_forward.17} parent=0 // pred_check_branch
    %9 = sbr.rel (0) target = $region5
  $region4: #{encoder_forward.17} parent=0 // pred_region
    _
  $region5: #{encoder_forward.17} parent=0 // pred_fallthru
    _
  // Predicated region
  $region6: #{encoder_forward.17} parent=0 // pred_check
    _
  $region7: #{encoder_forward.17} parent=0 // pred_check_branch
    %11 = sbr.rel (0) target = $region9
  $region8: #{encoder_forward.17} parent=0 // pred_region
    _
  $region9: #{encoder_forward.17} parent=0 // pred_fallthru
    _
  // Predicated region
  $region10: #{encoder_forward.17} parent=0 // pred_check
    _
  $region11: #{encoder_forward.17} parent=0 // pred_check_branch
    %13 = sbr.rel (0) target = $region13
  $region12: #{encoder_forward.17} parent=0 // pred_region
    _
  $region13: #{encoder_forward.17} parent=0 // pred_fallthru
    _
  %v14 = vld [vmem:[%s0] sm:$0xff]
  %v15 = vld [vmem:[%s0 + $0x8] sm:$0xff]
  %v16 = vld [vmem:[%s0 + $0x10] sm:$0xff]
  %v17 = vld [vmem:[%s0 + $0x18] sm:$0xff]
  %v18 = vld [vmem:[%s1] sm:$0x1]
  %v20 = vlaneseq
  %v21 = vshrl.u32 %v20, 7
  %v22 = vsub.s32 0, %v21
  %v23 = vrot.slane %v18, %v22
  %v25 = vmul.f32 %v14, %v23
  %v26 = vmul.f32 %v15, %v23
  %v27 = vmul.f32 %v16, %v23
  %v28 = vmul.f32 %v17, %v23
  %v29 = vld [vmem:[%s2] sm:$0x1]
  %v31 = vlaneseq
  %v32 = vshrl.u32 %v31, 7
  %v33 = vsub.s32 0, %v32
  %v34 = vrot.slane %v29, %v33
  %v36 = vadd.f32 %v25, %v34
  %v37 = vadd.f32 %v26, %v34
  %v38 = vadd.f32 %v27, %v34
  %v39 = vadd.f32 %v28, %v34
  %vm40 = vcmask 261120
  %41 = vst.msk [vmem:[%s3] sm:$0xff] %vm40, %v36
  %42 = vst.msk [vmem:[%s3 + $0x8] sm:$0xff] %vm40, %v37
  %43 = vst.msk [vmem:[%s3 + $0x10] sm:$0xff] %vm40, %v38
  %44 = vst.msk [vmem:[%s3 + $0x18] sm:$0xff] %vm40, %v39
  // Predicated region
  $region14: #{encoder_forward.17} parent=0 // pred_check
    _
  $region15: #{encoder_forward.17} parent=0 // pred_check_branch
    %46 = sbr.rel (0) target = $region17
  $region16: #{encoder_forward.17} parent=0 // pred_region
    _
  $region17: #{encoder_forward.17} parent=0 // pred_fallthru
    _
  // Predicated region
  $region18: #{encoder_forward.17} parent=0 // pred_check
    _
  $region19: #{encoder_forward.17} parent=0 // pred_check_branch
    %48 = sbr.rel (0) target = $region21
  $region20: #{encoder_forward.17} parent=0 // pred_region
    _
  $region21: #{encoder_forward.17} parent=0 // pred_fallthru
    _

// kernel: encoder_forward.18
$region0: #{encoder_forward.18}
  #allocation0 [shape = 'u32[]', space=smem, size = 0x4, offset = 0x4, fixed_abs, tag = 'smem constant byte address 0x4 - core index']
  #allocation1 [shape = 'u32[144,128]{1,0:T(1,128)}', space=vmem, size = 0x12000, scoped, tag = 'internal scratch']
  #allocation2 [shape = 'f32[8,48]{1,0:T(8,128)}', space=vmem, size = 0x1000, scoped, tag = 'scratch operand']
  %s0 = inlined_call_operand.vmem [shape: bf16[8,288], index: 0, kind: input, shape index: {}]
  %s1 = inlined_call_operand.vmem [shape: bf16[288,48], index: 1, kind: input, shape index: {}]
  %s2 = inlined_call_operand.vmem [shape: f32[1,48], index: 2, kind: input, shape index: {}]
  %s3 = inlined_call_operand.vmem [shape: f32[8,48], index: 3, kind: output, shape index: {}]
  %s4 = sld [smem:[#allocation0]]
  $region30: #{encoder_forward.18} parent=0
    _
  %s6 = ssub.s32 1, %s4
  %s7 = scalar_select 0, %s6, %s4
  // Predicated region
  $region2: #{encoder_forward.18} parent=0 // pred_check
    _
  $region3: #{encoder_forward.18} parent=0 // pred_check_branch
    %9 = sbr.rel (0) target = $region5
  $region4: #{encoder_forward.18} parent=0 // pred_region
    _
  $region5: #{encoder_forward.18} parent=0 // pred_fallthru
    _
  // Predicated region
  $region6: #{encoder_forward.18} parent=0 // pred_check
    _
  $region7: #{encoder_forward.18} parent=0 // pred_check_branch
    %11 = sbr.rel (0) target = $region9
  $region8: #{encoder_forward.18} parent=0 // pred_region
    _
  $region9: #{encoder_forward.18} parent=0 // pred_fallthru
    _
  // Predicated region
  $region10: #{encoder_forward.18} parent=0 // pred_check
    _
  $region11: #{encoder_forward.18} parent=0 // pred_check_branch
    %13 = sbr.rel (0) target = $region13
  $region12: #{encoder_forward.18} parent=0 // pred_region
    _
  $region13: #{encoder_forward.18} parent=0 // pred_fallthru
    _
  %p15 = scmp.eq.s32.totalorder 0, 0
  // Predicated region
  $region14: #{encoder_forward.18} parent=0 // pred_check
    %p16 = pneg %p15
  $region15: #{encoder_forward.18} parent=0 // pred_check_branch
    %18 = sbr.rel (%p16) target = $region17
  $region16: #{encoder_forward.18} parent=0 // pred_region
    %vm19 = vcmask 392192
    %20 = vst.msk [vmem:[#allocation2] sm:$0xff] %vm19, 0.0
  $region17: #{encoder_forward.18} parent=0 // pred_fallthru
    _
  %v21 = vld [vmem:[#allocation2] sm:$0xff]
  %v22 = vld [vmem:[%s0] sm:$0xff]
  %v23 = vld [vmem:[%s0 + $0x8] sm:$0xf]
  %v24 = vld [vmem:[%s1] sm:$0xf]
  %v25 = vld [vmem:[%s1 + $0x4] sm:$0xf]
  %v26 = vld [vmem:[%s1 + $0x8] sm:$0xf]
  %v27 = vld [vmem:[%s1 + $0xc] sm:$0xf]
  %v28 = vld [vmem:[%s1 + $0x10] sm:$0xf]
  %v29 = vld [vmem:[%s1 + $0x14] sm:$0xf]
  %v30 = vld [vmem:[%s1 + $0x18] sm:$0xf]
  %v31 = vld [vmem:[%s1 + $0x1c] sm:$0xf]
  %v32 = vld [vmem:[%s1 + $0x20] sm:$0xf]
  %v33 = vld [vmem:[%s1 + $0x24] sm:$0xf]
  %v34 = vld [vmem:[%s1 + $0x28] sm:$0xf]
  %v35 = vld [vmem:[%s1 + $0x2c] sm:$0xf]
  %v36 = vld [vmem:[%s1 + $0x30] sm:$0xf]
  %v37 = vld [vmem:[%s1 + $0x34] sm:$0xf]
  %v38 = vld [vmem:[%s1 + $0x38] sm:$0xf]
  %v39 = vld [vmem:[%s1 + $0x3c] sm:$0xf]
  %v40 = vld [vmem:[%s1 + $0x40] sm:$0xf]
  %v41 = vld [vmem:[%s1 + $0x44] sm:$0xf]
  %v42 = vld [vmem:[%s1 + $0x48] sm:$0xf]
  %v43 = vld [vmem:[%s1 + $0x4c] sm:$0xf]
  %v44 = vld [vmem:[%s1 + $0x50] sm:$0xf]
  %v45 = vld [vmem:[%s1 + $0x54] sm:$0xf]
  %v46 = vld [vmem:[%s1 + $0x58] sm:$0xf]
  %v47 = vld [vmem:[%s1 + $0x5c] sm:$0xf]
  %v48 = vld [vmem:[%s1 + $0x60] sm:$0xf]
  %v49 = vld [vmem:[%s1 + $0x64] sm:$0xf]
  %v50 = vld [vmem:[%s1 + $0x68] sm:$0xf]
  %v51 = vld [vmem:[%s1 + $0x6c] sm:$0xf]
  %v52 = vld [vmem:[%s1 + $0x70] sm:$0xf]
  %v53 = vld [vmem:[%s1 + $0x74] sm:$0xf]
  %v54 = vld [vmem:[%s1 + $0x78] sm:$0xf]
  %v55 = vld [vmem:[%s1 + $0x7c] sm:$0xf]
  %v56 = vld [vmem:[%s1 + $0x80] sm:$0xf]
  %v57 = vld [vmem:[%s1 + $0x84] sm:$0xf]
  %v58 = vld [vmem:[%s1 + $0x88] sm:$0xf]
  %v59 = vld [vmem:[%s1 + $0x8c] sm:$0xf]
  %v62 = vunpack.c.l.b16 %v22
  %v63 = vunpack.c.h.b16 %v22
  %v64 = vunpack.c.l.b16 %v23
  %v65 = vpack.c.b16 %v62, %v62
  %v66 = vpack.c.b16 %v63, %v63
  %v67 = vpack.c.b16 %v64, %v64
  %v106 = vunpack.c.l.b16 %v24
  %v107 = vunpack.c.l.b16 %v25
  %v108 = vunpack.c.l.b16 %v26
  %v109 = vunpack.c.l.b16 %v27
  %v110 = vunpack.c.l.b16 %v28
  %v111 = vunpack.c.l.b16 %v29
  %v112 = vunpack.c.l.b16 %v30
  %v113 = vunpack.c.l.b16 %v31
  %v114 = vunpack.c.l.b16 %v32
  %v115 = vunpack.c.l.b16 %v33
  %v116 = vunpack.c.l.b16 %v34
  %v117 = vunpack.c.l.b16 %v35
  %v118 = vunpack.c.l.b16 %v36
  %v119 = vunpack.c.l.b16 %v37
  %v120 = vunpack.c.l.b16 %v38
  %v121 = vunpack.c.l.b16 %v39
  %v122 = vunpack.c.l.b16 %v40
  %v123 = vunpack.c.l.b16 %v41
  %v124 = vunpack.c.l.b16 %v42
  %v125 = vunpack.c.l.b16 %v43
  %v126 = vunpack.c.l.b16 %v44
  %v127 = vunpack.c.l.b16 %v45
  %v128 = vunpack.c.l.b16 %v46
  %v129 = vunpack.c.l.b16 %v47
  %v130 = vunpack.c.l.b16 %v48
  %v131 = vunpack.c.l.b16 %v49
  %v132 = vunpack.c.l.b16 %v50
  %v133 = vunpack.c.l.b16 %v51
  %v134 = vunpack.c.l.b16 %v52
  %v135 = vunpack.c.l.b16 %v53
  %v136 = vunpack.c.l.b16 %v54
  %v137 = vunpack.c.l.b16 %v55
  %v138 = vunpack.c.l.b16 %v56
  %v139 = vunpack.c.l.b16 %v57
  %v140 = vunpack.c.l.b16 %v58
  %v141 = vunpack.c.l.b16 %v59
  %v142 = vpack.c.b16 %v107, %v106
  %v143 = vpack.c.b16 %v109, %v108
  %v144 = vpack.c.b16 %v111, %v110
  %v145 = vpack.c.b16 %v113, %v112
  %v146 = vpack.c.b16 %v115, %v114
  %v147 = vpack.c.b16 %v117, %v116
  %v148 = vpack.c.b16 %v119, %v118
  %v149 = vpack.c.b16 %v121, %v120
  %v150 = vpack.c.b16 %v123, %v122
  %v151 = vpack.c.b16 %v125, %v124
  %v152 = vpack.c.b16 %v127, %v126
  %v153 = vpack.c.b16 %v129, %v128
  %v154 = vpack.c.b16 %v131, %v130
  %v155 = vpack.c.b16 %v133, %v132
  %v156 = vpack.c.b16 %v135, %v134
  %v157 = vpack.c.b16 %v137, %v136
  %v158 = vpack.c.b16 %v139, %v138
  %v159 = vpack.c.b16 %v141, %v140
  %vm178 = vcmask 261120
  %v180 = vsel %vm178, %v67, 0
  %182 = vmatprep.subr.bf16.mxu0 0
  %183 = vmatpush1.bf16.msra.mxu0 %v142
  %184 = vmatprep.subr.bf16.mxu0 0
  %185 = vmatpush1.bf16.msra.mxu0 %v143
  %186 = vmatprep.subr.bf16.mxu0 0
  %187 = vmatpush1.bf16.msra.mxu0 %v144
  %188 = vmatprep.subr.bf16.mxu0 0
  %189 = vmatpush1.bf16.msra.mxu0 %v145
  %190 = vmatprep.subr.bf16.mxu0 0
  %191 = vmatpush1.bf16.msra.mxu0 %v146
  %192 = vmatprep.subr.bf16.mxu0 0
  %193 = vmatpush1.bf16.msra.mxu0 %v147
  %194 = vmatprep.subr.bf16.mxu0 0
  %195 = vmatpush1.bf16.msra.mxu0 %v148
  %196 = vmatprep.subr.bf16.mxu0 0
  %197 = vmatpush1.bf16.msra.mxu0 %v149
  %198 = vmatprep.subr.bf16.mxu0 0
  %199 = vmatpush1.bf16.msra.mxu0 %v150
  %200 = vmatprep.subr.bf16.mxu0 0
  %201 = vmatpush1.bf16.msra.mxu0 %v151
  %202 = vmatprep.subr.bf16.mxu0 0
  %203 = vmatpush1.bf16.msra.mxu0 %v152
  %204 = vmatprep.subr.bf16.mxu0 0
  %205 = vmatpush1.bf16.msra.mxu0 %v153
  %206 = vmatprep.subr.bf16.mxu0 0
  %207 = vmatpush1.bf16.msra.mxu0 %v154
  %208 = vmatprep.subr.bf16.mxu0 0
  %209 = vmatpush1.bf16.msra.mxu0 %v155
  %210 = vmatprep.subr.bf16.mxu0 0
  %211 = vmatpush1.bf16.msra.mxu0 %v156
  %212 = vmatprep.subr.bf16.mxu0 0
  %213 = vmatpush1.bf16.msra.mxu0 %v157
  %214 = vmatprep.mubr.bf16.mxu0 %v66
  %215 = vmatmul.mubr.bf16.gmra.mrb[0].mxu0 %v65
  %v216 = vpop.f32.mrb[0].mxu0
  %v217 = vadd.f32 0.0, %v216
  %v218 = vpop.f32.mrb[0].mxu0
  %v219 = vpop.f32.mrb[0].mxu0
  %v220 = vpop.f32.mrb[0].mxu0
  %221 = vdwg.mxu0
  %222 = vmatprep.subr.bf16.mxu0 0
  %223 = vmatpush1.bf16.msra.mxu0 %v158
  %224 = vmatprep.subr.bf16.mxu0 0
  %225 = vmatpush1.bf16.msra.mxu0 %v159
  %226 = vmatprep.subr.bf16.mxu0 0
  %227 = vmatpush1.bf16.msra.mxu0 0
  %228 = vmatprep.subr.bf16.mxu0 0
  %229 = vmatpush1.bf16.msra.mxu0 0
  %230 = vmatprep.subr.bf16.mxu0 0
  %231 = vmatpush1.bf16.msra.mxu0 0
  %232 = vmatprep.subr.bf16.mxu0 0
  %233 = vmatpush1.bf16.msra.mxu0 0
  %234 = vmatprep.subr.bf16.mxu0 0
  %235 = vmatpush1.bf16.msra.mxu0 0
  %236 = vmatprep.subr.bf16.mxu0 0
  %237 = vmatpush1.bf16.msra.mxu0 0
  %238 = vmatprep.subr.bf16.mxu0 0
  %239 = vmatpush1.bf16.msra.mxu0 0
  %240 = vmatprep.subr.bf16.mxu0 0
  %241 = vmatpush1.bf16.msra.mxu0 0
  %242 = vmatprep.subr.bf16.mxu0 0
  %243 = vmatpush1.bf16.msra.mxu0 0
  %244 = vmatprep.subr.bf16.mxu0 0
  %245 = vmatpush1.bf16.msra.mxu0 0
  %246 = vmatprep.subr.bf16.mxu0 0
  %247 = vmatpush1.bf16.msra.mxu0 0
  %248 = vmatprep.subr.bf16.mxu0 0
  %249 = vmatpush1.bf16.msra.mxu0 0
  %250 = vmatprep.subr.bf16.mxu0 0
  %251 = vmatpush1.bf16.msra.mxu0 0
  %252 = vmatprep.subr.bf16.mxu0 0
  %253 = vmatpush1.bf16.msra.mxu0 0
  %254 = vmatprep.mubr.bf16.mxu0 0
  %255 = vmatmul.mubr.bf16.gmra.mrb[0].mxu0 %v180
  %v256 = vpop.f32.mrb[0].mxu0
  %v257 = vadd.f32 %v217, %v256
  %v258 = vpop.f32.mrb[0].mxu0
  %v259 = vpop.f32.mrb[0].mxu0
  %v260 = vpop.f32.mrb[0].mxu0
  %261 = vdwg.mxu0
  %v262 = vadd.f32 %v21, %v257
  %vm263 = vcmask 392192
  %264 = vst.msk [vmem:[#allocation2] sm:$0xff] %vm263, %v262
  // Predicated region
  $region18: #{encoder_forward.18} parent=0 // pred_check
    %p265 = pneg %p15
  $region19: #{encoder_forward.18} parent=0 // pred_check_branch
    %267 = sbr.rel (%p265) target = $region21
  $region20: #{encoder_forward.18} parent=0 // pred_region
    %v268 = vld [vmem:[#allocation2] sm:$0xff]
    %v269 = vld [vmem:[%s2] sm:$0x1]
    %v271 = vlaneseq
    %v272 = vshrl.u32 %v271, 7
    %v273 = vsub.s32 0, %v272
    %v274 = vrot.slane %v269, %v273
    %v276 = vadd.f32 %v268, %v274
    %v277 = vmul.f32 %v276, 0.5
    %v278 = vmul.f32 %v276, 0.70710677
    %vm279 = vcmp.ge.f32.partialorder %v278, 0.0
    %v280 = vsel %vm279, 1.0, -1.0
    %v281 = vand.u32 2147483647, %v278
    %v282 = vmul.f32 %v281, 0.3275911
    %v283 = vadd.f32 %v282, 1.0
    %v284 = vrcp.pop %v283
    %v285 = vmul.f32 %v284, 1.0614054
    %v286 = vadd.f32 %v285, -1.4531521
    %v287 = vmul.f32 %v286, %v284
    %v288 = vadd.f32 %v287, 1.4214138
    %v289 = vmul.f32 %v288, %v284
    %v290 = vadd.f32 %v289, -0.28449672
    %v291 = vmul.f32 %v290, %v284
    %v292 = vadd.f32 %v291, 0.2548296
    %v293 = vmul.f32 %v292, %v284
    %v294 = vsub.f32 0.0, %v281
    %v295 = vmul.f32 %v294, %v281
    %v296 = vmul.f32 %v295, 1.442695
    %v297 = vpow.pop %v296
    %v298 = vmul.f32 %v293, %v297
    %v299 = vsub.f32 1.0, %v298
    %v300 = vmul.f32 %v280, %v299
    %v301 = vadd.f32 %v300, 1.0
    %v302 = vmul.f32 %v277, %v301
    %303 = vst.msk [vmem:[%s3] sm:$0xff] %vm263, %v302
  $region21: #{encoder_forward.18} parent=0 // pred_fallthru
    _
  // Predicated region
  $region22: #{encoder_forward.18} parent=0 // pred_check
    _
  $region23: #{encoder_forward.18} parent=0 // pred_check_branch
    %305 = sbr.rel (0) target = $region25
  $region24: #{encoder_forward.18} parent=0 // pred_region
    _
  $region25: #{encoder_forward.18} parent=0 // pred_fallthru
    _
  // Predicated region
  $region26: #{encoder_forward.18} parent=0 // pred_check
    _
  $region27: #{encoder_forward.18} parent=0 // pred_check_branch
    %307 = sbr.rel (0) target = $region29
  $region28: #{encoder_forward.18} parent=0 // pred_region
    _
  $region29: #{encoder_forward.18} parent=0 // pred_fallthru
    _

// kernel: encoder_forward.19
$region0: #{encoder_forward.19}
  #allocation0 [shape = 'u32[]', space=smem, size = 0x4, offset = 0x4, fixed_abs, tag = 'smem constant byte address 0x4 - core index']
  #allocation1 [shape = 'u32[144,128]{1,0:T(1,128)}', space=vmem, size = 0x12000, scoped, tag = 'internal scratch']
  #allocation2 [shape = 'f32[2,32]{1,0:T(2,128)}', space=vmem, size = 0x400, scoped, tag = 'scratch operand']
  %s0 = inlined_call_operand.vmem [shape: bf16[2,192], index: 0, kind: input, shape index: {}]
  %s1 = inlined_call_operand.vmem [shape: bf16[192,32], index: 1, kind: input, shape index: {}]
  %s2 = inlined_call_operand.vmem [shape: f32[1,32], index: 2, kind: input, shape index: {}]
  %s3 = inlined_call_operand.hbm [shape: f32[2,32], index: 3, kind: output, shape index: {}]
  %s4 = sld [smem:[#allocation0]]
  $region30: #{encoder_forward.19} parent=0
    _
  %s6 = ssub.s32 1, %s4
  %s7 = scalar_select 0, %s6, %s4
  $region1: #{encoder_forward.19} parent=0
    #allocation3 [shape = 'u8[1024]{0}', space=vmem, size = 0x400, scoped, tag = 'output window, operand 0, single buffered']
    #allocation4 [shape = 's32[1]{0}', space=sflag, size = 0x4, scoped, tag = 'scoped memory for encoder_forward.19']
    %8 = vsyncpa [#allocation4], 0
    // Predicated region
    $region2: #{encoder_forward.19} parent=1 // pred_check
      _
    $region3: #{encoder_forward.19} parent=1 // pred_check_branch
      %10 = sbr.rel (0) target = $region5
    $region4: #{encoder_forward.19} parent=1 // pred_region
      _
    $region5: #{encoder_forward.19} parent=1 // pred_fallthru
      _
    // Predicated region
    $region6: #{encoder_forward.19} parent=1 // pred_check
      _
    $region7: #{encoder_forward.19} parent=1 // pred_check_branch
      %12 = sbr.rel (0) target = $region9
    $region8: #{encoder_forward.19} parent=1 // pred_region
      _
    $region9: #{encoder_forward.19} parent=1 // pred_fallthru
      _
    // Predicated region
    $region10: #{encoder_forward.19} parent=1 // pred_check
      _
    $region11: #{encoder_forward.19} parent=1 // pred_check_branch
      %14 = sbr.rel (0) target = $region13
    $region12: #{encoder_forward.19} parent=1 // pred_region
      _
    $region13: #{encoder_forward.19} parent=1 // pred_fallthru
      _
    %p16 = scmp.eq.s32.totalorder 0, 0
    // Predicated region
    $region14: #{encoder_forward.19} parent=1 // pred_check
      %p17 = pneg %p16
    $region15: #{encoder_forward.19} parent=1 // pred_check_branch
      %19 = sbr.rel (%p17) target = $region17
    $region16: #{encoder_forward.19} parent=1 // pred_region
      %vm20 = vcmask 254976
      %21 = vst.msk [vmem:[#allocation2] sm:$0x3] %vm20, 0.0
    $region17: #{encoder_forward.19} parent=1 // pred_fallthru
      _
    %v22 = vld [vmem:[#allocation2] sm:$0x3]
    %v23 = vld [vmem:[%s0] sm:$0x3]
    %v24 = vld [vmem:[%s1] sm:$0xf]
    %v25 = vld [vmem:[%s1 + $0x4] sm:$0xf]
    %v26 = vld [vmem:[%s1 + $0x8] sm:$0xf]
    %v27 = vld [vmem:[%s1 + $0xc] sm:$0xf]
    %v28 = vld [vmem:[%s1 + $0x10] sm:$0xf]
    %v29 = vld [vmem:[%s1 + $0x14] sm:$0xf]
    %v30 = vld [vmem:[%s1 + $0x18] sm:$0xf]
    %v31 = vld [vmem:[%s1 + $0x1c] sm:$0xf]
    %v32 = vld [vmem:[%s1 + $0x20] sm:$0xf]
    %v33 = vld [vmem:[%s1 + $0x24] sm:$0xf]
    %v34 = vld [vmem:[%s1 + $0x28] sm:$0xf]
    %v35 = vld [vmem:[%s1 + $0x2c] sm:$0xf]
    %v36 = vld [vmem:[%s1 + $0x30] sm:$0xf]
    %v37 = vld [vmem:[%s1 + $0x34] sm:$0xf]
    %v38 = vld [vmem:[%s1 + $0x38] sm:$0xf]
    %v39 = vld [vmem:[%s1 + $0x3c] sm:$0xf]
    %v40 = vld [vmem:[%s1 + $0x40] sm:$0xf]
    %v41 = vld [vmem:[%s1 + $0x44] sm:$0xf]
    %v42 = vld [vmem:[%s1 + $0x48] sm:$0xf]
    %v43 = vld [vmem:[%s1 + $0x4c] sm:$0xf]
    %v44 = vld [vmem:[%s1 + $0x50] sm:$0xf]
    %v45 = vld [vmem:[%s1 + $0x54] sm:$0xf]
    %v46 = vld [vmem:[%s1 + $0x58] sm:$0xf]
    %v47 = vld [vmem:[%s1 + $0x5c] sm:$0xf]
    %v50 = vunpack.c.l.s4 1966171168
    %v51 = vunpack.c.0.s8 %v50
    %v52 = vlaneseq
    %v53 = vshrl.u32 %v52, 7
    %v54 = vsub.s32 %v51, %v53
    %v55 = vrot.slane %v23, %v54
    %v56 = vcombine.high %v55, %v55
    %v58 = vunpack.c.l.s4 1966171168
    %v59 = vunpack.c.0.s8 %v58
    %v60 = vlaneseq
    %v61 = vshrl.u32 %v60, 7
    %v62 = vsub.s32 %v59, %v61
    %v63 = vrot.slane %v55, %v62
    %v65 = vunpack.c.l.s4 1966171168
    %v66 = vunpack.c.0.s8 %v65
    %v67 = vlaneseq
    %v68 = vshrl.u32 %v67, 7
    %v69 = vsub.s32 %v66, %v68
    %v70 = vrot.slane %v56, %v69
    %v96 = vunpack.c.l.b16 %v24
    %v97 = vunpack.c.l.b16 %v25
    %v98 = vunpack.c.l.b16 %v26
    %v99 = vunpack.c.l.b16 %v27
    %v100 = vunpack.c.l.b16 %v28
    %v101 = vunpack.c.l.b16 %v29
    %v102 = vunpack.c.l.b16 %v30
    %v103 = vunpack.c.l.b16 %v31
    %v104 = vunpack.c.l.b16 %v32
    %v105 = vunpack.c.l.b16 %v33
    %v106 = vunpack.c.l.b16 %v34
    %v107 = vunpack.c.l.b16 %v35
    %v108 = vunpack.c.l.b16 %v36
    %v109 = vunpack.c.l.b16 %v37
    %v110 = vunpack.c.l.b16 %v38
    %v111 = vunpack.c.l.b16 %v39
    %v112 = vunpack.c.l.b16 %v40
    %v113 = vunpack.c.l.b16 %v41
    %v114 = vunpack.c.l.b16 %v42
    %v115 = vunpack.c.l.b16 %v43
    %v116 = vunpack.c.l.b16 %v44
    %v117 = vunpack.c.l.b16 %v45
    %v118 = vunpack.c.l.b16 %v46
    %v119 = vunpack.c.l.b16 %v47
    %v120 = vpack.c.b16 %v97, %v96
    %v121 = vpack.c.b16 %v99, %v98
    %v122 = vpack.c.b16 %v101, %v100
    %v123 = vpack.c.b16 %v103, %v102
    %v124 = vpack.c.b16 %v105, %v104
    %v125 = vpack.c.b16 %v107, %v106
    %v126 = vpack.c.b16 %v109, %v108
    %v127 = vpack.c.b16 %v111, %v110
    %v128 = vpack.c.b16 %v113, %v112
    %v129 = vpack.c.b16 %v115, %v114
    %v130 = vpack.c.b16 %v117, %v116
    %v131 = vpack.c.b16 %v119, %v118
    %vm144 = vcmask 523264
    %v146 = vsel %vm144, %v70, 0
    %148 = vmatprep.subr.bf16.mxu0 0
    %149 = vmatpush1.bf16.msra.mxu0 %v120
    %150 = vmatprep.subr.bf16.mxu0 0
    %151 = vmatpush1.bf16.msra.mxu0 %v121
    %152 = vmatprep.subr.bf16.mxu0 0
    %153 = vmatpush1.bf16.msra.mxu0 %v122
    %154 = vmatprep.subr.bf16.mxu0 0
    %155 = vmatpush1.bf16.msra.mxu0 %v123
    %156 = vmatprep.subr.bf16.mxu0 0
    %157 = vmatpush1.bf16.msra.mxu0 %v124
    %158 = vmatprep.subr.bf16.mxu0 0
    %159 = vmatpush1.bf16.msra.mxu0 %v125
    %160 = vmatprep.subr.bf16.mxu0 0
    %161 = vmatpush1.bf16.msra.mxu0 %v126
    %162 = vmatprep.subr.bf16.mxu0 0
    %163 = vmatpush1.bf16.msra.mxu0 %v127
    %164 = vmatprep.subr.bf16.mxu0 0
    %165 = vmatpush1.bf16.msra.mxu0 %v128
    %166 = vmatprep.subr.bf16.mxu0 0
    %167 = vmatpush1.bf16.msra.mxu0 %v129
    %168 = vmatprep.subr.bf16.mxu0 0
    %169 = vmatpush1.bf16.msra.mxu0 %v130
    %170 = vmatprep.subr.bf16.mxu0 0
    %171 = vmatpush1.bf16.msra.mxu0 %v131
    %172 = vmatprep.subr.bf16.mxu0 0
    %173 = vmatpush1.bf16.msra.mxu0 0
    %174 = vmatprep.subr.bf16.mxu0 0
    %175 = vmatpush1.bf16.msra.mxu0 0
    %176 = vmatprep.subr.bf16.mxu0 0
    %177 = vmatpush1.bf16.msra.mxu0 0
    %178 = vmatprep.subr.bf16.mxu0 0
    %179 = vmatpush1.bf16.msra.mxu0 0
    %180 = vmatprep.mubr.bf16.mxu0 %v146
    %181 = vmatmul.mubr.bf16.gmra.mrb[0].mxu0 %v63
    %v182 = vpop.f32.mrb[0].mxu0
    %v183 = vadd.f32 0.0, %v182
    %v184 = vpop.f32.mrb[0].mxu0
    %v185 = vpop.f32.mrb[0].mxu0
    %v186 = vpop.f32.mrb[0].mxu0
    %187 = vdwg.mxu0
    %v188 = vadd.f32 %v22, %v183
    %vm189 = vcmask 254976
    %190 = vst.msk [vmem:[#allocation2] sm:$0x3] %vm189, %v188
    // Predicated region
    $region18: #{encoder_forward.19} parent=1 // pred_check
      %p191 = pneg %p16
    $region19: #{encoder_forward.19} parent=1 // pred_check_branch
      %193 = sbr.rel (%p191) target = $region21
    $region20: #{encoder_forward.19} parent=1 // pred_region
      %v194 = vld [vmem:[#allocation2] sm:$0x3]
      %v195 = vld [vmem:[%s2] sm:$0x1]
      %v197 = vlaneseq
      %v198 = vshrl.u32 %v197, 7
      %v199 = vsub.s32 0, %v198
      %v200 = vrot.slane %v195, %v199
      %v202 = vadd.f32 %v194, %v200
      %203 = vst.msk [vmem:[#allocation3] sm:$0x3] %vm189, %v202
    $region21: #{encoder_forward.19} parent=1 // pred_fallthru
      _
    // Predicated region
    $region22: #{encoder_forward.19} parent=1 // pred_check
      _
    $region23: #{encoder_forward.19} parent=1 // pred_check_branch
      %205 = sbr.rel (0) target = $region25
    $region24: #{encoder_forward.19} parent=1 // pred_region
      %s207 = ssub.s32 32, 32
      %208 = vsyncadd [#allocation4], %s207
      %s210 = sshll.u32 [#allocation3], 4
      %s211 = int_to_ptr.vmem [resolvable:$true] %s210
      %213 = dma.vmem_to_hbm [thread:$0]  %s211, 32, %s3, [#allocation4]
    $region25: #{encoder_forward.19} parent=1 // pred_fallthru
      _
    // Predicated region
    $region26: #{encoder_forward.19} parent=1 // pred_check
      _
    $region27: #{encoder_forward.19} parent=1 // pred_check_branch
      %215 = sbr.rel (0) target = $region29
    $region28: #{encoder_forward.19} parent=1 // pred_region
      %216 = dma.done [#allocation4], 32
    $region29: #{encoder_forward.19} parent=1 // pred_fallthru
      _
    %217 = vsyncpa [#allocation4], 1

</llo_original>
